<compile_context>
chip_gen: v5e
topology: v5e:2x2
jax: 0.10.0
libtpu: 0.0.40
codegen_flags: <defaults>
</compile_context>

<pallas_src>
import functools
import numpy as np
import jax
import jax.numpy as jnp
from jax.experimental import pallas as pl
from jax.experimental.pallas import tpu as pltpu

_LN_EPS = 1e-5  # PyTorch nn.LayerNorm default


# --------------------------- in-kernel helpers -------------------------------

def _layer_norm(x, gamma, beta):
    # x: (M, E) f32; gamma/beta: (1, E) f32
    mu = jnp.mean(x, axis=-1, keepdims=True)
    xc = x - mu
    var = jnp.mean(xc * xc, axis=-1, keepdims=True)
    return xc * jax.lax.rsqrt(var + _LN_EPS) * gamma + beta


def _attention(q, k, v, mask, n_head, mxu_dtype):
    # q, k, v: (Bt, S, E) f32 (q already scaled by 1/sqrt(hd) via the folded
    # projection weights); mask: (S, S) additive f32.
    Bt, S, E = q.shape
    hd = E // n_head

    def split_heads(x):
        # (Bt, S, E) -> (n_head*Bt, S, hd), head-major over the batch axis.
        return jnp.concatenate(
            [x[:, :, h * hd:(h + 1) * hd] for h in range(n_head)], axis=0)

    qh = split_heads(q).astype(mxu_dtype)
    kh = split_heads(k).astype(mxu_dtype)
    vh = split_heads(v).astype(mxu_dtype)

    # One batched q.k^T over all heads * batch rows (no per-head Python loop).
    s = jnp.einsum('bqd,bkd->bqk', qh, kh, preferred_element_type=jnp.float32)
    s = s + mask[None, :, :]
    mx = jnp.max(s, axis=-1, keepdims=True)
    p = jnp.exp(s - mx)
    p = p / jnp.sum(p, axis=-1, keepdims=True)   # exact softmax, f32
    o = jnp.einsum('bqk,bkd->bqd', p.astype(mxu_dtype), vh,
                   preferred_element_type=jnp.float32)
    # Merge heads back to (Bt, S, E): head h -> columns [h*hd, (h+1)*hd).
    return jnp.concatenate(
        [o[h * Bt:(h + 1) * Bt] for h in range(n_head)], axis=-1)


# --------------------------- fused layer kernel -------------------------------

def _make_layer_kernel(*, is_initial, has_kv, fuse_final, n_head, mxu_dtype):
    """Fused encoder layer: [tanh kv-ffwd on src] -> Q/K/V proj -> MHA ->
    out_proj -> LN1 -> FFN -> LN2 [-> final LN]."""

    def kernel(*refs):
        i = 0
        enc_ref = refs[i]; i += 1
        src_ref = None
        if not is_initial:
            src_ref = refs[i]; i += 1
        mask_ref = refs[i]; i += 1
        if has_kv:
            kvw_ref, kvb_ref = refs[i:i + 2]; i += 2
        (wq_ref, bq_ref, wk_ref, bk_ref, wv_ref, bv_ref,
         wout_ref, bout_ref, n1w_ref, n1b_ref,
         w1_ref, b1_ref, w2_ref, b2_ref, n2w_ref, n2b_ref) = refs[i:i + 16]
        i += 16
        if fuse_final:
            fw_ref, fb_ref = refs[i:i + 2]; i += 2
        o_ref = refs[i]; i += 1
        src_out_ref = refs[i] if has_kv else None

        Bt, S, E = enc_ref.shape

        def mm(x, w_ref, b_ref):
            # MXU matmul (bf16 or f32 inputs) with f32 accumulation; bias in f32.
            return jnp.dot(x.astype(w_ref.dtype), w_ref[...],
                           preferred_element_type=jnp.float32) + b_ref[...]

        # Fold batch into the matmul M dimension (leading-dim collapse is free).
        enc = enc_ref[...].reshape(Bt * S, E)
        if is_initial:
            kv_src = enc                                     # self-attention on src
        else:
            kv_src = src_ref[...].reshape(Bt * S, E)
            if has_kv:
                kv_src = jnp.tanh(mm(kv_src, kvw_ref, kvb_ref))
                src_out_ref[...] = kv_src.reshape(Bt, S, E).astype(src_out_ref.dtype)

        q = mm(enc, wq_ref, bq_ref)        # 1/sqrt(hd) pre-folded into wq/bq
        k = mm(kv_src, wk_ref, bk_ref)
        v = mm(kv_src, wv_ref, bv_ref)

        a = _attention(q.reshape(Bt, S, E), k.reshape(Bt, S, E),
                       v.reshape(Bt, S, E), mask_ref[...], n_head, mxu_dtype)
        a = mm(a.reshape(Bt * S, E), wout_ref, bout_ref)     # out_proj

        # InitialSpanEncoder: norm1(attn) (no residual); Subsequent: norm1(enc+attn)
        y = _layer_norm(a if is_initial else enc + a, n1w_ref[...], n1b_ref[...])
        h = jnp.maximum(mm(y, w1_ref, b1_ref), 0.0)          # ReLU (torch default)
        f = mm(h, w2_ref, b2_ref)
        out = _layer_norm(y + f, n2w_ref[...], n2b_ref[...])
        if fuse_final:
            out = _layer_norm(out, fw_ref[...], fb_ref[...])
        o_ref[...] = out.reshape(Bt, S, E).astype(o_ref.dtype)

    return kernel


# --------------------------- pallas_call wrapper -------------------------------

def _const_spec(shape):
    zeros = (0,) * len(shape)
    return pl.BlockSpec(shape, lambda b, z=zeros: z)


def _pick_batch_block(batch, seq):
    """Batch items per grid step.  Target ~256 MXU rows per step, but keep
    >= 2 parallel grid steps (v7x megacore) when each step still has >= 128
    rows."""
    bt = max(1, min(batch, max(1, 256 // max(seq, 1))))
    while batch % bt:
        bt -= 1
    if batch // bt < 2 and batch > 1:
        half = batch // 2
        while half > 1 and batch % half:
            half -= 1
        if half >= 1 and batch % half == 0 and half * seq >= 128:
            bt = half
    return bt


def _encoder_layer(enc, src, mask, lp, kvp, final_ln, *, n_head, is_initial,
                   batch_block=None):
    B, S, E = enc.shape
    has_kv = kvp is not None
    fuse_final = final_ln is not None
    assert not (is_initial and has_kv)

    bt = batch_block or _pick_batch_block(B, S)
    assert B % bt == 0
    grid = (B // bt,)
    io_spec = pl.BlockSpec((bt, S, E), lambda b: (b, 0, 0))
    mxu_dtype = lp["wq_t"].dtype

    weights = []
    if has_kv:
        weights += [kvp["w_t"], kvp["b"]]
    weights += [lp["wq_t"], lp["bq"], lp["wk_t"], lp["bk"], lp["wv_t"], lp["bv"],
                lp["wout_t"], lp["bout"], lp["n1w"], lp["n1b"],
                lp["w1_t"], lp["b1"], lp["w2_t"], lp["b2"], lp["n2w"], lp["n2b"]]
    if fuse_final:
        weights += [final_ln[0], final_ln[1]]

    inputs = [enc] + ([] if is_initial else [src]) + [mask] + weights
    in_specs = ([io_spec] + ([] if is_initial else [io_spec])
                + [_const_spec(mask.shape)]
                + [_const_spec(w.shape) for w in weights])

    act_shape = jax.ShapeDtypeStruct((B, S, E), jnp.float32)
    if has_kv:
        out_shape = (act_shape, act_shape)
        out_specs = (io_spec, io_spec)
    else:
        out_shape = act_shape
        out_specs = io_spec

    kernel = _make_layer_kernel(is_initial=is_initial, has_kv=has_kv,
                                fuse_final=fuse_final, n_head=n_head,
                                mxu_dtype=mxu_dtype)
    res = pl.pallas_call(
        kernel, out_shape=out_shape, grid=grid,
        in_specs=in_specs, out_specs=out_specs,
        compiler_params=pltpu.CompilerParams(
            dimension_semantics=("parallel",)),
    )(*inputs)

    if has_kv:
        return res[0], res[1]
    return res, src


# --------------------------- model glue ---------------------------------------

def segmental_transformer_encoder(src, params, attn_mask=None, *, n_head,
                                  batch_block=None):
    """src: (S, B, E) sequence-first, matching the PyTorch module."""
    S, B, E = src.shape
    if attn_mask is None:
        attn_mask = jnp.zeros((S, S), jnp.float32)
    attn_mask = attn_mask.astype(jnp.float32)

    # (B, S, E): contiguous (Bt, S, E) blocks per grid step for batch-folded M.
    x = jnp.transpose(src, (1, 0, 2)).astype(jnp.float32)

    n_sub = len(params["subsequent"])
    final_ln = (params["norm_w"], params["norm_b"])

    out, _ = _encoder_layer(x, None, attn_mask, params["primary"], None,
                            final_ln if n_sub == 0 else None,
                            n_head=n_head, is_initial=True,
                            batch_block=batch_block)
    src_b = x
    for i, lp in enumerate(params["subsequent"]):
        kvp = params["kv_ffwds"][i] if params["kv_ffwds"] is not None else None
        is_last = i == n_sub - 1
        out, src_b = _encoder_layer(out, src_b, attn_mask, lp, kvp,
                                    final_ln if is_last else None,
                                    n_head=n_head, is_initial=False,
                                    batch_block=batch_block)
    return jnp.transpose(out, (1, 0, 2))              # back to (S, B, E)


# --------------------------- parameter init / prep ----------------------------

def init_params(key, d_model, n_head, n_layers, ffwd_dim, kv_feedforward=True,
                mxu_dtype=jnp.bfloat16):
    """Parameters in the fused-kernel layout:
       * dense weights pre-transposed to (din, dout), stored in `mxu_dtype`
         (bf16 by default; pass jnp.float32 for exact f32 parity),
       * 1/sqrt(head_dim) attention scale folded into the q projection,
       * biases / LayerNorm params kept f32 with shape (1, d)."""
    keys = iter(jax.random.split(key, 1024))
    scale = 1.0 / float(np.sqrt(d_model // n_head))

    def nrm(shape, s=0.05):
        return s * jax.random.normal(next(keys), shape, jnp.float32)

    def encoder_layer_params():
        # PyTorch conventions: in_proj_weight (3E, E); nn.Linear weight (dout, din).
        in_w, in_b = nrm((3 * d_model, d_model)), nrm((3 * d_model,))
        out_w, out_b = nrm((d_model, d_model)), nrm((d_model,))
        l1_w, l1_b = nrm((ffwd_dim, d_model)), nrm((ffwd_dim,))
        l2_w, l2_b = nrm((d_model, ffwd_dim)), nrm((d_model,))
        wq, wk, wv = in_w[:d_model], in_w[d_model:2 * d_model], in_w[2 * d_model:]
        bq, bk, bv = in_b[:d_model], in_b[d_model:2 * d_model], in_b[2 * d_model:]
        ones = jnp.ones((1, d_model), jnp.float32)
        zeros = jnp.zeros((1, d_model), jnp.float32)
        return {
            "wq_t": (wq.T * scale).astype(mxu_dtype), "bq": (bq * scale).reshape(1, -1),
            "wk_t": wk.T.astype(mxu_dtype), "bk": bk.reshape(1, -1),
            "wv_t": wv.T.astype(mxu_dtype), "bv": bv.reshape(1, -1),
            "wout_t": out_w.T.astype(mxu_dtype), "bout": out_b.reshape(1, -1),
            "n1w": ones, "n1b": zeros,
            "w1_t": l1_w.T.astype(mxu_dtype), "b1": l1_b.reshape(1, -1),
            "w2_t": l2_w.T.astype(mxu_dtype), "b2": l2_b.reshape(1, -1),
            "n2w": ones, "n2b": zeros,
        }

    n_sub = max(n_layers - 1, 0)
    kv_ffwds = None
    if kv_feedforward and n_sub > 0:
        kv_ffwds = [{"w_t": nrm((d_model, d_model)).T.astype(mxu_dtype),
                     "b": nrm((d_model,)).reshape(1, -1)} for _ in range(n_sub)]
    return {
        "primary": encoder_layer_params(),
        "subsequent": [encoder_layer_params() for _ in range(n_sub)],
        "kv_ffwds": kv_ffwds,
        "norm_w": jnp.ones((1, d_model), jnp.float32),
        "norm_b": jnp.zeros((1, d_model), jnp.float32),
    }


def get_mask(seq_len, shape="cloze", seg_len=None, window=None):
    # Replicates SegmentalTransformerEncoder.get_mask (additive 0 / -inf mask)
    if shape == "cloze":
        if window:
            window = window // 2
        mask = np.ones((seq_len, seq_len)) == 1
        for i in range(seq_len):
            for j in range(1, min(seg_len + 1, seq_len - i)):
                mask[i, i + j] = False
            if window:
                for k in range(window, i + 1):
                    mask[i, i - k] = False
                for k in range(seg_len + window + 1, seq_len - i):
                    mask[i, i + k] = False
    elif shape == "subsequent":
        mask = (np.triu(np.ones((seq_len, seq_len))) == 1).transpose()
        if window:
            for i in range(seq_len):
                for k in range(window, i + 1):
                    mask[i, i - k] = False
    else:
        raise TypeError(f"Transformer mask shape {shape} is not recognized")
    return jnp.asarray(np.where(mask, 0.0, -np.inf).astype(np.float32))


# --------------------------------- main ---------------------------------------

if __name__ == "__main__":
    S, B, E, H, L, F = 8, 2, 32, 4, 2, 64  # seq, batch, d_model, heads, layers, ffwd_dim
    key = jax.random.PRNGKey(0)
    k_src, k_par = jax.random.split(key)
    src = jax.random.normal(k_src, (S, B, E), jnp.float32)
    params = init_params(k_par, E, H, L, F, kv_feedforward=True)
    attn_mask = get_mask(S, shape="cloze", seg_len=2)

    fwd = jax.jit(functools.partial(segmental_transformer_encoder, n_head=H))
    out = fwd(src, params, attn_mask)
    jax.block_until_ready(out)
    assert out.shape == (S, B, E) and out.dtype == jnp.float32
    assert bool(jnp.all(jnp.isfinite(out)))
    print("KERNEL_OK")
</pallas_src>

<mosaic_0001>
module attributes {stable_mosaic.version = 11 : i64} {
  func.func @kernel(%arg0: i32, %arg1: memref<2x8x32xf32, #tpu.memory_space<vmem>>, %arg2: memref<8x8xf32, #tpu.memory_space<vmem>>, %arg3: memref<32x32xbf16, #tpu.memory_space<vmem>>, %arg4: memref<1x32xf32, #tpu.memory_space<vmem>>, %arg5: memref<32x32xbf16, #tpu.memory_space<vmem>>, %arg6: memref<1x32xf32, #tpu.memory_space<vmem>>, %arg7: memref<32x32xbf16, #tpu.memory_space<vmem>>, %arg8: memref<1x32xf32, #tpu.memory_space<vmem>>, %arg9: memref<32x32xbf16, #tpu.memory_space<vmem>>, %arg10: memref<1x32xf32, #tpu.memory_space<vmem>>, %arg11: memref<1x32xf32, #tpu.memory_space<vmem>>, %arg12: memref<1x32xf32, #tpu.memory_space<vmem>>, %arg13: memref<32x64xbf16, #tpu.memory_space<vmem>>, %arg14: memref<1x64xf32, #tpu.memory_space<vmem>>, %arg15: memref<64x32xbf16, #tpu.memory_space<vmem>>, %arg16: memref<1x32xf32, #tpu.memory_space<vmem>>, %arg17: memref<1x32xf32, #tpu.memory_space<vmem>>, %arg18: memref<1x32xf32, #tpu.memory_space<vmem>>, %arg19: memref<2x8x32xf32, #tpu.memory_space<vmem>>) attributes {dimension_semantics = [#tpu.dimension_semantics<parallel>], iteration_bounds = array<i64: 1>, scalar_prefetch = 0 : i64, scratch_operands = 0 : i64, tpu.core_type = #tpu.core_type<tc>, window_params = [{transform_indices = @transform_0, window_bounds = array<i64: 2, 8, 32>}, {pipeline_mode = #tpu.pipeline_mode<synchronous>, transform_indices = @transform_1, window_bounds = array<i64: 8, 8>}, {pipeline_mode = #tpu.pipeline_mode<synchronous>, transform_indices = @transform_2, window_bounds = array<i64: 32, 32>}, {pipeline_mode = #tpu.pipeline_mode<synchronous>, transform_indices = @transform_3, window_bounds = array<i64: 1, 32>}, {pipeline_mode = #tpu.pipeline_mode<synchronous>, transform_indices = @transform_4, window_bounds = array<i64: 32, 32>}, {pipeline_mode = #tpu.pipeline_mode<synchronous>, transform_indices = @transform_5, window_bounds = array<i64: 1, 32>}, {pipeline_mode = #tpu.pipeline_mode<synchronous>, transform_indices = @transform_6, window_bounds = array<i64: 32, 32>}, {pipeline_mode = #tpu.pipeline_mode<synchronous>, transform_indices = @transform_7, window_bounds = array<i64: 1, 32>}, {pipeline_mode = #tpu.pipeline_mode<synchronous>, transform_indices = @transform_8, window_bounds = array<i64: 32, 32>}, {pipeline_mode = #tpu.pipeline_mode<synchronous>, transform_indices = @transform_9, window_bounds = array<i64: 1, 32>}, {pipeline_mode = #tpu.pipeline_mode<synchronous>, transform_indices = @transform_10, window_bounds = array<i64: 1, 32>}, {pipeline_mode = #tpu.pipeline_mode<synchronous>, transform_indices = @transform_11, window_bounds = array<i64: 1, 32>}, {pipeline_mode = #tpu.pipeline_mode<synchronous>, transform_indices = @transform_12, window_bounds = array<i64: 32, 64>}, {pipeline_mode = #tpu.pipeline_mode<synchronous>, transform_indices = @transform_13, window_bounds = array<i64: 1, 64>}, {pipeline_mode = #tpu.pipeline_mode<synchronous>, transform_indices = @transform_14, window_bounds = array<i64: 64, 32>}, {pipeline_mode = #tpu.pipeline_mode<synchronous>, transform_indices = @transform_15, window_bounds = array<i64: 1, 32>}, {pipeline_mode = #tpu.pipeline_mode<synchronous>, transform_indices = @transform_16, window_bounds = array<i64: 1, 32>}, {pipeline_mode = #tpu.pipeline_mode<synchronous>, transform_indices = @transform_17, window_bounds = array<i64: 1, 32>}, {transform_indices = @transform_18, window_bounds = array<i64: 2, 8, 32>}]} {
    %c0 = arith.constant 0 : index
    %c0_0 = arith.constant 0 : index
    %c0_1 = arith.constant 0 : index
    %0 = vector.load %arg1[%c0, %c0_0, %c0_1] : memref<2x8x32xf32, #tpu.memory_space<vmem>>, vector<2x8x32xf32>
    %1 = vector.shape_cast %0 : vector<2x8x32xf32> to vector<16x32xf32>
    %2 = arith.truncf %1 : vector<16x32xf32> to vector<16x32xbf16>
    %c0_2 = arith.constant 0 : index
    %c0_3 = arith.constant 0 : index
    %3 = vector.load %arg3[%c0_2, %c0_3] : memref<32x32xbf16, #tpu.memory_space<vmem>>, vector<32x32xbf16>
    %cst = arith.constant dense<0.000000e+00> : vector<16x32xf32>
    %4 = tpu.matmul %2, %3, %cst {dimension_numbers = #tpu.dot_dimension_numbers<[1], [0], [0], [1], [0, 0, 1, 1], [], []>} : vector<16x32xbf16>, vector<32x32xbf16>, vector<16x32xf32> -> vector<16x32xf32>
    %c0_4 = arith.constant 0 : index
    %c0_5 = arith.constant 0 : index
    %5 = vector.load %arg4[%c0_4, %c0_5] : memref<1x32xf32, #tpu.memory_space<vmem>>, vector<1x32xf32>
    %6 = vector.broadcast %5 : vector<1x32xf32> to vector<16x32xf32>
    %7 = arith.addf %4, %6 : vector<16x32xf32>
    %8 = arith.truncf %1 : vector<16x32xf32> to vector<16x32xbf16>
    %c0_6 = arith.constant 0 : index
    %c0_7 = arith.constant 0 : index
    %9 = vector.load %arg5[%c0_6, %c0_7] : memref<32x32xbf16, #tpu.memory_space<vmem>>, vector<32x32xbf16>
    %cst_8 = arith.constant dense<0.000000e+00> : vector<16x32xf32>
    %10 = tpu.matmul %8, %9, %cst_8 {dimension_numbers = #tpu.dot_dimension_numbers<[1], [0], [0], [1], [0, 0, 1, 1], [], []>} : vector<16x32xbf16>, vector<32x32xbf16>, vector<16x32xf32> -> vector<16x32xf32>
    %c0_9 = arith.constant 0 : index
    %c0_10 = arith.constant 0 : index
    %11 = vector.load %arg6[%c0_9, %c0_10] : memref<1x32xf32, #tpu.memory_space<vmem>>, vector<1x32xf32>
    %12 = vector.broadcast %11 : vector<1x32xf32> to vector<16x32xf32>
    %13 = arith.addf %10, %12 : vector<16x32xf32>
    %14 = arith.truncf %1 : vector<16x32xf32> to vector<16x32xbf16>
    %c0_11 = arith.constant 0 : index
    %c0_12 = arith.constant 0 : index
    %15 = vector.load %arg7[%c0_11, %c0_12] : memref<32x32xbf16, #tpu.memory_space<vmem>>, vector<32x32xbf16>
    %cst_13 = arith.constant dense<0.000000e+00> : vector<16x32xf32>
    %16 = tpu.matmul %14, %15, %cst_13 {dimension_numbers = #tpu.dot_dimension_numbers<[1], [0], [0], [1], [0, 0, 1, 1], [], []>} : vector<16x32xbf16>, vector<32x32xbf16>, vector<16x32xf32> -> vector<16x32xf32>
    %c0_14 = arith.constant 0 : index
    %c0_15 = arith.constant 0 : index
    %17 = vector.load %arg8[%c0_14, %c0_15] : memref<1x32xf32, #tpu.memory_space<vmem>>, vector<1x32xf32>
    %18 = vector.broadcast %17 : vector<1x32xf32> to vector<16x32xf32>
    %19 = arith.addf %16, %18 : vector<16x32xf32>
    %20 = vector.shape_cast %7 : vector<16x32xf32> to vector<2x8x32xf32>
    %21 = vector.shape_cast %13 : vector<16x32xf32> to vector<2x8x32xf32>
    %22 = vector.shape_cast %19 : vector<16x32xf32> to vector<2x8x32xf32>
    %c0_16 = arith.constant 0 : index
    %c0_17 = arith.constant 0 : index
    %23 = vector.load %arg2[%c0_16, %c0_17] : memref<8x8xf32, #tpu.memory_space<vmem>>, vector<8x8xf32>
    %24 = vector.extract_strided_slice %20 {offsets = [0, 0, 0], sizes = [2, 8, 8], strides = [1, 1, 1]} : vector<2x8x32xf32> to vector<2x8x8xf32>
    %25 = vector.extract_strided_slice %20 {offsets = [0, 0, 8], sizes = [2, 8, 8], strides = [1, 1, 1]} : vector<2x8x32xf32> to vector<2x8x8xf32>
    %26 = vector.extract_strided_slice %20 {offsets = [0, 0, 16], sizes = [2, 8, 8], strides = [1, 1, 1]} : vector<2x8x32xf32> to vector<2x8x8xf32>
    %27 = vector.extract_strided_slice %20 {offsets = [0, 0, 24], sizes = [2, 8, 8], strides = [1, 1, 1]} : vector<2x8x32xf32> to vector<2x8x8xf32>
    %28 = tpu.concatenate %24, %25, %26, %27 in 0 : vector<2x8x8xf32>, vector<2x8x8xf32>, vector<2x8x8xf32>, vector<2x8x8xf32> -> vector<8x8x8xf32>
    %29 = arith.truncf %28 : vector<8x8x8xf32> to vector<8x8x8xbf16>
    %30 = vector.extract_strided_slice %21 {offsets = [0, 0, 0], sizes = [2, 8, 8], strides = [1, 1, 1]} : vector<2x8x32xf32> to vector<2x8x8xf32>
    %31 = vector.extract_strided_slice %21 {offsets = [0, 0, 8], sizes = [2, 8, 8], strides = [1, 1, 1]} : vector<2x8x32xf32> to vector<2x8x8xf32>
    %32 = vector.extract_strided_slice %21 {offsets = [0, 0, 16], sizes = [2, 8, 8], strides = [1, 1, 1]} : vector<2x8x32xf32> to vector<2x8x8xf32>
    %33 = vector.extract_strided_slice %21 {offsets = [0, 0, 24], sizes = [2, 8, 8], strides = [1, 1, 1]} : vector<2x8x32xf32> to vector<2x8x8xf32>
    %34 = tpu.concatenate %30, %31, %32, %33 in 0 : vector<2x8x8xf32>, vector<2x8x8xf32>, vector<2x8x8xf32>, vector<2x8x8xf32> -> vector<8x8x8xf32>
    %35 = arith.truncf %34 : vector<8x8x8xf32> to vector<8x8x8xbf16>
    %36 = vector.extract_strided_slice %22 {offsets = [0, 0, 0], sizes = [2, 8, 8], strides = [1, 1, 1]} : vector<2x8x32xf32> to vector<2x8x8xf32>
    %37 = vector.extract_strided_slice %22 {offsets = [0, 0, 8], sizes = [2, 8, 8], strides = [1, 1, 1]} : vector<2x8x32xf32> to vector<2x8x8xf32>
    %38 = vector.extract_strided_slice %22 {offsets = [0, 0, 16], sizes = [2, 8, 8], strides = [1, 1, 1]} : vector<2x8x32xf32> to vector<2x8x8xf32>
    %39 = vector.extract_strided_slice %22 {offsets = [0, 0, 24], sizes = [2, 8, 8], strides = [1, 1, 1]} : vector<2x8x32xf32> to vector<2x8x8xf32>
    %40 = tpu.concatenate %36, %37, %38, %39 in 0 : vector<2x8x8xf32>, vector<2x8x8xf32>, vector<2x8x8xf32>, vector<2x8x8xf32> -> vector<8x8x8xf32>
    %41 = arith.truncf %40 : vector<8x8x8xf32> to vector<8x8x8xbf16>
    "tpu.trace_start"() <{level = 10 : i32, message = "bqd,bkd->bqk"}> : () -> ()
    %cst_18 = arith.constant dense<0.000000e+00> : vector<8x8x8xf32>
    %42 = tpu.matmul %29, %35, %cst_18 {dimension_numbers = #tpu.dot_dimension_numbers<[2], [2], [1], [1], [0, 0, 0, 1, 1, 1], [0], [0]>} : vector<8x8x8xbf16>, vector<8x8x8xbf16>, vector<8x8x8xf32> -> vector<8x8x8xf32>
    "tpu.trace_stop"() : () -> ()
    %43 = vector.shape_cast %23 : vector<8x8xf32> to vector<1x8x8xf32>
    %44 = vector.broadcast %43 : vector<1x8x8xf32> to vector<8x8x8xf32>
    %45 = arith.addf %42, %44 : vector<8x8x8xf32>
    %cst_19 = arith.constant dense<0xFF800000> : vector<8x8xf32>
    %46 = vector.multi_reduction <maximumf>, %45, %cst_19 [2] : vector<8x8x8xf32> to vector<8x8xf32>
    %47 = vector.shape_cast %46 : vector<8x8xf32> to vector<8x8x1xf32>
    %48 = vector.broadcast %47 : vector<8x8x1xf32> to vector<8x8x8xf32>
    %49 = arith.subf %45, %48 : vector<8x8x8xf32>
    %50 = math.exp %49 : vector<8x8x8xf32>
    %cst_20 = arith.constant dense<0.000000e+00> : vector<8x8xf32>
    %51 = vector.multi_reduction <add>, %50, %cst_20 [2] : vector<8x8x8xf32> to vector<8x8xf32>
    %52 = vector.shape_cast %51 : vector<8x8xf32> to vector<8x8x1xf32>
    %53 = vector.broadcast %52 : vector<8x8x1xf32> to vector<8x8x8xf32>
    %54 = arith.divf %50, %53 : vector<8x8x8xf32>
    %55 = arith.truncf %54 : vector<8x8x8xf32> to vector<8x8x8xbf16>
    "tpu.trace_start"() <{level = 10 : i32, message = "bqk,bkd->bqd"}> : () -> ()
    %cst_21 = arith.constant dense<0.000000e+00> : vector<8x8x8xf32>
    %56 = tpu.matmul %55, %41, %cst_21 {dimension_numbers = #tpu.dot_dimension_numbers<[2], [1], [1], [2], [0, 0, 0, 1, 1, 2], [0], [0]>} : vector<8x8x8xbf16>, vector<8x8x8xbf16>, vector<8x8x8xf32> -> vector<8x8x8xf32>
    "tpu.trace_stop"() : () -> ()
    %57 = vector.extract_strided_slice %56 {offsets = [0, 0, 0], sizes = [2, 8, 8], strides = [1, 1, 1]} : vector<8x8x8xf32> to vector<2x8x8xf32>
    %58 = vector.extract_strided_slice %56 {offsets = [2, 0, 0], sizes = [2, 8, 8], strides = [1, 1, 1]} : vector<8x8x8xf32> to vector<2x8x8xf32>
    %59 = vector.extract_strided_slice %56 {offsets = [4, 0, 0], sizes = [2, 8, 8], strides = [1, 1, 1]} : vector<8x8x8xf32> to vector<2x8x8xf32>
    %60 = vector.extract_strided_slice %56 {offsets = [6, 0, 0], sizes = [2, 8, 8], strides = [1, 1, 1]} : vector<8x8x8xf32> to vector<2x8x8xf32>
    %61 = tpu.concatenate %57, %58, %59, %60 in 2 : vector<2x8x8xf32>, vector<2x8x8xf32>, vector<2x8x8xf32>, vector<2x8x8xf32> -> vector<2x8x32xf32>
    %62 = vector.shape_cast %61 : vector<2x8x32xf32> to vector<16x32xf32>
    %63 = arith.truncf %62 : vector<16x32xf32> to vector<16x32xbf16>
    %c0_22 = arith.constant 0 : index
    %c0_23 = arith.constant 0 : index
    %64 = vector.load %arg9[%c0_22, %c0_23] : memref<32x32xbf16, #tpu.memory_space<vmem>>, vector<32x32xbf16>
    %cst_24 = arith.constant dense<0.000000e+00> : vector<16x32xf32>
    %65 = tpu.matmul %63, %64, %cst_24 {dimension_numbers = #tpu.dot_dimension_numbers<[1], [0], [0], [1], [0, 0, 1, 1], [], []>} : vector<16x32xbf16>, vector<32x32xbf16>, vector<16x32xf32> -> vector<16x32xf32>
    %c0_25 = arith.constant 0 : index
    %c0_26 = arith.constant 0 : index
    %66 = vector.load %arg10[%c0_25, %c0_26] : memref<1x32xf32, #tpu.memory_space<vmem>>, vector<1x32xf32>
    %67 = vector.broadcast %66 : vector<1x32xf32> to vector<16x32xf32>
    %68 = arith.addf %65, %67 : vector<16x32xf32>
    %c0_27 = arith.constant 0 : index
    %c0_28 = arith.constant 0 : index
    %69 = vector.load %arg11[%c0_27, %c0_28] : memref<1x32xf32, #tpu.memory_space<vmem>>, vector<1x32xf32>
    %c0_29 = arith.constant 0 : index
    %c0_30 = arith.constant 0 : index
    %70 = vector.load %arg12[%c0_29, %c0_30] : memref<1x32xf32, #tpu.memory_space<vmem>>, vector<1x32xf32>
    %cst_31 = arith.constant dense<0.000000e+00> : vector<16xf32>
    %71 = vector.multi_reduction <add>, %68, %cst_31 [1] : vector<16x32xf32> to vector<16xf32>
    %72 = vector.shape_cast %71 : vector<16xf32> to vector<16x1xf32>
    %cst_32 = arith.constant 3.200000e+01 : f32
    %73 = vector.broadcast %cst_32 : f32 to vector<16x1xf32>
    %74 = arith.divf %72, %73 : vector<16x1xf32>
    %75 = vector.broadcast %74 : vector<16x1xf32> to vector<16x32xf32>
    %76 = arith.subf %68, %75 : vector<16x32xf32>
    %77 = arith.mulf %76, %76 : vector<16x32xf32>
    %cst_33 = arith.constant dense<0.000000e+00> : vector<16xf32>
    %78 = vector.multi_reduction <add>, %77, %cst_33 [1] : vector<16x32xf32> to vector<16xf32>
    %79 = vector.shape_cast %78 : vector<16xf32> to vector<16x1xf32>
    %cst_34 = arith.constant 3.200000e+01 : f32
    %80 = vector.broadcast %cst_34 : f32 to vector<16x1xf32>
    %81 = arith.divf %79, %80 : vector<16x1xf32>
    %cst_35 = arith.constant 9.99999974E-6 : f32
    %82 = vector.broadcast %cst_35 : f32 to vector<16x1xf32>
    %83 = arith.addf %81, %82 : vector<16x1xf32>
    %84 = math.rsqrt %83 : vector<16x1xf32>
    %85 = vector.broadcast %84 : vector<16x1xf32> to vector<16x32xf32>
    %86 = arith.mulf %76, %85 : vector<16x32xf32>
    %87 = vector.broadcast %69 : vector<1x32xf32> to vector<16x32xf32>
    %88 = arith.mulf %86, %87 : vector<16x32xf32>
    %89 = vector.broadcast %70 : vector<1x32xf32> to vector<16x32xf32>
    %90 = arith.addf %88, %89 : vector<16x32xf32>
    %91 = arith.truncf %90 : vector<16x32xf32> to vector<16x32xbf16>
    %c0_36 = arith.constant 0 : index
    %c0_37 = arith.constant 0 : index
    %92 = vector.load %arg13[%c0_36, %c0_37] : memref<32x64xbf16, #tpu.memory_space<vmem>>, vector<32x64xbf16>
    %cst_38 = arith.constant dense<0.000000e+00> : vector<16x64xf32>
    %93 = tpu.matmul %91, %92, %cst_38 {dimension_numbers = #tpu.dot_dimension_numbers<[1], [0], [0], [1], [0, 0, 1, 1], [], []>} : vector<16x32xbf16>, vector<32x64xbf16>, vector<16x64xf32> -> vector<16x64xf32>
    %c0_39 = arith.constant 0 : index
    %c0_40 = arith.constant 0 : index
    %94 = vector.load %arg14[%c0_39, %c0_40] : memref<1x64xf32, #tpu.memory_space<vmem>>, vector<1x64xf32>
    %95 = vector.broadcast %94 : vector<1x64xf32> to vector<16x64xf32>
    %96 = arith.addf %93, %95 : vector<16x64xf32>
    %cst_41 = arith.constant 0.000000e+00 : f32
    %97 = vector.broadcast %cst_41 : f32 to vector<16x64xf32>
    %98 = arith.maximumf %96, %97 : vector<16x64xf32>
    %99 = arith.truncf %98 : vector<16x64xf32> to vector<16x64xbf16>
    %c0_42 = arith.constant 0 : index
    %c0_43 = arith.constant 0 : index
    %100 = vector.load %arg15[%c0_42, %c0_43] : memref<64x32xbf16, #tpu.memory_space<vmem>>, vector<64x32xbf16>
    %cst_44 = arith.constant dense<0.000000e+00> : vector<16x32xf32>
    %101 = tpu.matmul %99, %100, %cst_44 {dimension_numbers = #tpu.dot_dimension_numbers<[1], [0], [0], [1], [0, 0, 1, 1], [], []>} : vector<16x64xbf16>, vector<64x32xbf16>, vector<16x32xf32> -> vector<16x32xf32>
    %c0_45 = arith.constant 0 : index
    %c0_46 = arith.constant 0 : index
    %102 = vector.load %arg16[%c0_45, %c0_46] : memref<1x32xf32, #tpu.memory_space<vmem>>, vector<1x32xf32>
    %103 = vector.broadcast %102 : vector<1x32xf32> to vector<16x32xf32>
    %104 = arith.addf %101, %103 : vector<16x32xf32>
    %105 = arith.addf %90, %104 : vector<16x32xf32>
    %c0_47 = arith.constant 0 : index
    %c0_48 = arith.constant 0 : index
    %106 = vector.load %arg17[%c0_47, %c0_48] : memref<1x32xf32, #tpu.memory_space<vmem>>, vector<1x32xf32>
    %c0_49 = arith.constant 0 : index
    %c0_50 = arith.constant 0 : index
    %107 = vector.load %arg18[%c0_49, %c0_50] : memref<1x32xf32, #tpu.memory_space<vmem>>, vector<1x32xf32>
    %cst_51 = arith.constant dense<0.000000e+00> : vector<16xf32>
    %108 = vector.multi_reduction <add>, %105, %cst_51 [1] : vector<16x32xf32> to vector<16xf32>
    %109 = vector.shape_cast %108 : vector<16xf32> to vector<16x1xf32>
    %cst_52 = arith.constant 3.200000e+01 : f32
    %110 = vector.broadcast %cst_52 : f32 to vector<16x1xf32>
    %111 = arith.divf %109, %110 : vector<16x1xf32>
    %112 = vector.broadcast %111 : vector<16x1xf32> to vector<16x32xf32>
    %113 = arith.subf %105, %112 : vector<16x32xf32>
    %114 = arith.mulf %113, %113 : vector<16x32xf32>
    %cst_53 = arith.constant dense<0.000000e+00> : vector<16xf32>
    %115 = vector.multi_reduction <add>, %114, %cst_53 [1] : vector<16x32xf32> to vector<16xf32>
    %116 = vector.shape_cast %115 : vector<16xf32> to vector<16x1xf32>
    %cst_54 = arith.constant 3.200000e+01 : f32
    %117 = vector.broadcast %cst_54 : f32 to vector<16x1xf32>
    %118 = arith.divf %116, %117 : vector<16x1xf32>
    %cst_55 = arith.constant 9.99999974E-6 : f32
    %119 = vector.broadcast %cst_55 : f32 to vector<16x1xf32>
    %120 = arith.addf %118, %119 : vector<16x1xf32>
    %121 = math.rsqrt %120 : vector<16x1xf32>
    %122 = vector.broadcast %121 : vector<16x1xf32> to vector<16x32xf32>
    %123 = arith.mulf %113, %122 : vector<16x32xf32>
    %124 = vector.broadcast %106 : vector<1x32xf32> to vector<16x32xf32>
    %125 = arith.mulf %123, %124 : vector<16x32xf32>
    %126 = vector.broadcast %107 : vector<1x32xf32> to vector<16x32xf32>
    %127 = arith.addf %125, %126 : vector<16x32xf32>
    %128 = vector.shape_cast %127 : vector<16x32xf32> to vector<2x8x32xf32>
    %c0_56 = arith.constant 0 : index
    %c0_57 = arith.constant 0 : index
    %c0_58 = arith.constant 0 : index
    %129 = vector.load %arg19[%c0_56, %c0_57, %c0_58] : memref<2x8x32xf32, #tpu.memory_space<vmem>>, vector<2x8x32xf32>
    tpu.vector_store %arg19[%c0_56, %c0_57, %c0_58], %128 {strides = array<i32>} : memref<2x8x32xf32, #tpu.memory_space<vmem>>, vector<2x8x32xf32>,
    return
  }
  func.func @transform_0(%arg0: i32) -> (i32, i32, i32) {
    %c0_i32 = arith.constant 0 : i32
    %c0_i32_0 = arith.constant 0 : i32
    %c0_i32_1 = arith.constant 0 : i32
    return %arg0, %c0_i32, %c0_i32_0 : i32, i32, i32
  }
  func.func @transform_1(%arg0: i32) -> (i32, i32) {
    %c0_i32 = arith.constant 0 : i32
    %c0_i32_0 = arith.constant 0 : i32
    %c0_i32_1 = arith.constant 0 : i32
    return %c0_i32, %c0_i32_0 : i32, i32
  }
  func.func @transform_2(%arg0: i32) -> (i32, i32) {
    %c0_i32 = arith.constant 0 : i32
    %c0_i32_0 = arith.constant 0 : i32
    %c0_i32_1 = arith.constant 0 : i32
    return %c0_i32, %c0_i32_0 : i32, i32
  }
  func.func @transform_3(%arg0: i32) -> (i32, i32) {
    %c0_i32 = arith.constant 0 : i32
    %c0_i32_0 = arith.constant 0 : i32
    %c0_i32_1 = arith.constant 0 : i32
    return %c0_i32, %c0_i32_0 : i32, i32
  }
  func.func @transform_4(%arg0: i32) -> (i32, i32) {
    %c0_i32 = arith.constant 0 : i32
    %c0_i32_0 = arith.constant 0 : i32
    %c0_i32_1 = arith.constant 0 : i32
    return %c0_i32, %c0_i32_0 : i32, i32
  }
  func.func @transform_5(%arg0: i32) -> (i32, i32) {
    %c0_i32 = arith.constant 0 : i32
    %c0_i32_0 = arith.constant 0 : i32
    %c0_i32_1 = arith.constant 0 : i32
    return %c0_i32, %c0_i32_0 : i32, i32
  }
  func.func @transform_6(%arg0: i32) -> (i32, i32) {
    %c0_i32 = arith.constant 0 : i32
    %c0_i32_0 = arith.constant 0 : i32
    %c0_i32_1 = arith.constant 0 : i32
    return %c0_i32, %c0_i32_0 : i32, i32
  }
  func.func @transform_7(%arg0: i32) -> (i32, i32) {
    %c0_i32 = arith.constant 0 : i32
    %c0_i32_0 = arith.constant 0 : i32
    %c0_i32_1 = arith.constant 0 : i32
    return %c0_i32, %c0_i32_0 : i32, i32
  }
  func.func @transform_8(%arg0: i32) -> (i32, i32) {
    %c0_i32 = arith.constant 0 : i32
    %c0_i32_0 = arith.constant 0 : i32
    %c0_i32_1 = arith.constant 0 : i32
    return %c0_i32, %c0_i32_0 : i32, i32
  }
  func.func @transform_9(%arg0: i32) -> (i32, i32) {
    %c0_i32 = arith.constant 0 : i32
    %c0_i32_0 = arith.constant 0 : i32
    %c0_i32_1 = arith.constant 0 : i32
    return %c0_i32, %c0_i32_0 : i32, i32
  }
  func.func @transform_10(%arg0: i32) -> (i32, i32) {
    %c0_i32 = arith.constant 0 : i32
    %c0_i32_0 = arith.constant 0 : i32
    %c0_i32_1 = arith.constant 0 : i32
    return %c0_i32, %c0_i32_0 : i32, i32
  }
  func.func @transform_11(%arg0: i32) -> (i32, i32) {
    %c0_i32 = arith.constant 0 : i32
    %c0_i32_0 = arith.constant 0 : i32
    %c0_i32_1 = arith.constant 0 : i32
    return %c0_i32, %c0_i32_0 : i32, i32
  }
  func.func @transform_12(%arg0: i32) -> (i32, i32) {
    %c0_i32 = arith.constant 0 : i32
    %c0_i32_0 = arith.constant 0 : i32
    %c0_i32_1 = arith.constant 0 : i32
    return %c0_i32, %c0_i32_0 : i32, i32
  }
  func.func @transform_13(%arg0: i32) -> (i32, i32) {
    %c0_i32 = arith.constant 0 : i32
    %c0_i32_0 = arith.constant 0 : i32
    %c0_i32_1 = arith.constant 0 : i32
    return %c0_i32, %c0_i32_0 : i32, i32
  }
  func.func @transform_14(%arg0: i32) -> (i32, i32) {
    %c0_i32 = arith.constant 0 : i32
    %c0_i32_0 = arith.constant 0 : i32
    %c0_i32_1 = arith.constant 0 : i32
    return %c0_i32, %c0_i32_0 : i32, i32
  }
  func.func @transform_15(%arg0: i32) -> (i32, i32) {
    %c0_i32 = arith.constant 0 : i32
    %c0_i32_0 = arith.constant 0 : i32
    %c0_i32_1 = arith.constant 0 : i32
    return %c0_i32, %c0_i32_0 : i32, i32
  }
  func.func @transform_16(%arg0: i32) -> (i32, i32) {
    %c0_i32 = arith.constant 0 : i32
    %c0_i32_0 = arith.constant 0 : i32
    %c0_i32_1 = arith.constant 0 : i32
    return %c0_i32, %c0_i32_0 : i32, i32
  }
  func.func @transform_17(%arg0: i32) -> (i32, i32) {
    %c0_i32 = arith.constant 0 : i32
    %c0_i32_0 = arith.constant 0 : i32
    %c0_i32_1 = arith.constant 0 : i32
    return %c0_i32, %c0_i32_0 : i32, i32
  }
  func.func @transform_18(%arg0: i32) -> (i32, i32, i32) {
    %c0_i32 = arith.constant 0 : i32
    %c0_i32_0 = arith.constant 0 : i32
    %c0_i32_1 = arith.constant 0 : i32
    return %arg0, %c0_i32, %c0_i32_0 : i32, i32, i32
  }
}

module attributes {stable_mosaic.version = 11 : i64} {
  func.func @kernel(%arg0: i32, %arg1: memref<2x8x32xf32, #tpu.memory_space<vmem>>, %arg2: memref<2x8x32xf32, #tpu.memory_space<vmem>>, %arg3: memref<8x8xf32, #tpu.memory_space<vmem>>, %arg4: memref<32x32xbf16, #tpu.memory_space<vmem>>, %arg5: memref<1x32xf32, #tpu.memory_space<vmem>>, %arg6: memref<32x32xbf16, #tpu.memory_space<vmem>>, %arg7: memref<1x32xf32, #tpu.memory_space<vmem>>, %arg8: memref<32x32xbf16, #tpu.memory_space<vmem>>, %arg9: memref<1x32xf32, #tpu.memory_space<vmem>>, %arg10: memref<32x32xbf16, #tpu.memory_space<vmem>>, %arg11: memref<1x32xf32, #tpu.memory_space<vmem>>, %arg12: memref<32x32xbf16, #tpu.memory_space<vmem>>, %arg13: memref<1x32xf32, #tpu.memory_space<vmem>>, %arg14: memref<1x32xf32, #tpu.memory_space<vmem>>, %arg15: memref<1x32xf32, #tpu.memory_space<vmem>>, %arg16: memref<32x64xbf16, #tpu.memory_space<vmem>>, %arg17: memref<1x64xf32, #tpu.memory_space<vmem>>, %arg18: memref<64x32xbf16, #tpu.memory_space<vmem>>, %arg19: memref<1x32xf32, #tpu.memory_space<vmem>>, %arg20: memref<1x32xf32, #tpu.memory_space<vmem>>, %arg21: memref<1x32xf32, #tpu.memory_space<vmem>>, %arg22: memref<1x32xf32, #tpu.memory_space<vmem>>, %arg23: memref<1x32xf32, #tpu.memory_space<vmem>>, %arg24: memref<2x8x32xf32, #tpu.memory_space<vmem>>, %arg25: memref<2x8x32xf32, #tpu.memory_space<vmem>>) attributes {dimension_semantics = [#tpu.dimension_semantics<parallel>], iteration_bounds = array<i64: 1>, scalar_prefetch = 0 : i64, scratch_operands = 0 : i64, tpu.core_type = #tpu.core_type<tc>, window_params = [{transform_indices = @transform_0, window_bounds = array<i64: 2, 8, 32>}, {transform_indices = @transform_1, window_bounds = array<i64: 2, 8, 32>}, {pipeline_mode = #tpu.pipeline_mode<synchronous>, transform_indices = @transform_2, window_bounds = array<i64: 8, 8>}, {pipeline_mode = #tpu.pipeline_mode<synchronous>, transform_indices = @transform_3, window_bounds = array<i64: 32, 32>}, {pipeline_mode = #tpu.pipeline_mode<synchronous>, transform_indices = @transform_4, window_bounds = array<i64: 1, 32>}, {pipeline_mode = #tpu.pipeline_mode<synchronous>, transform_indices = @transform_5, window_bounds = array<i64: 32, 32>}, {pipeline_mode = #tpu.pipeline_mode<synchronous>, transform_indices = @transform_6, window_bounds = array<i64: 1, 32>}, {pipeline_mode = #tpu.pipeline_mode<synchronous>, transform_indices = @transform_7, window_bounds = array<i64: 32, 32>}, {pipeline_mode = #tpu.pipeline_mode<synchronous>, transform_indices = @transform_8, window_bounds = array<i64: 1, 32>}, {pipeline_mode = #tpu.pipeline_mode<synchronous>, transform_indices = @transform_9, window_bounds = array<i64: 32, 32>}, {pipeline_mode = #tpu.pipeline_mode<synchronous>, transform_indices = @transform_10, window_bounds = array<i64: 1, 32>}, {pipeline_mode = #tpu.pipeline_mode<synchronous>, transform_indices = @transform_11, window_bounds = array<i64: 32, 32>}, {pipeline_mode = #tpu.pipeline_mode<synchronous>, transform_indices = @transform_12, window_bounds = array<i64: 1, 32>}, {pipeline_mode = #tpu.pipeline_mode<synchronous>, transform_indices = @transform_13, window_bounds = array<i64: 1, 32>}, {pipeline_mode = #tpu.pipeline_mode<synchronous>, transform_indices = @transform_14, window_bounds = array<i64: 1, 32>}, {pipeline_mode = #tpu.pipeline_mode<synchronous>, transform_indices = @transform_15, window_bounds = array<i64: 32, 64>}, {pipeline_mode = #tpu.pipeline_mode<synchronous>, transform_indices = @transform_16, window_bounds = array<i64: 1, 64>}, {pipeline_mode = #tpu.pipeline_mode<synchronous>, transform_indices = @transform_17, window_bounds = array<i64: 64, 32>}, {pipeline_mode = #tpu.pipeline_mode<synchronous>, transform_indices = @transform_18, window_bounds = array<i64: 1, 32>}, {pipeline_mode = #tpu.pipeline_mode<synchronous>, transform_indices = @transform_19, window_bounds = array<i64: 1, 32>}, {pipeline_mode = #tpu.pipeline_mode<synchronous>, transform_indices = @transform_20, window_bounds = array<i64: 1, 32>}, {pipeline_mode = #tpu.pipeline_mode<synchronous>, transform_indices = @transform_21, window_bounds = array<i64: 1, 32>}, {pipeline_mode = #tpu.pipeline_mode<synchronous>, transform_indices = @transform_22, window_bounds = array<i64: 1, 32>}, {transform_indices = @transform_23, window_bounds = array<i64: 2, 8, 32>}, {transform_indices = @transform_24, window_bounds = array<i64: 2, 8, 32>}]} {
    %c0 = arith.constant 0 : index
    %c0_0 = arith.constant 0 : index
    %c0_1 = arith.constant 0 : index
    %0 = vector.load %arg1[%c0, %c0_0, %c0_1] : memref<2x8x32xf32, #tpu.memory_space<vmem>>, vector<2x8x32xf32>
    %1 = vector.shape_cast %0 : vector<2x8x32xf32> to vector<16x32xf32>
    %c0_2 = arith.constant 0 : index
    %c0_3 = arith.constant 0 : index
    %c0_4 = arith.constant 0 : index
    %2 = vector.load %arg2[%c0_2, %c0_3, %c0_4] : memref<2x8x32xf32, #tpu.memory_space<vmem>>, vector<2x8x32xf32>
    %3 = vector.shape_cast %2 : vector<2x8x32xf32> to vector<16x32xf32>
    %4 = arith.truncf %3 : vector<16x32xf32> to vector<16x32xbf16>
    %c0_5 = arith.constant 0 : index
    %c0_6 = arith.constant 0 : index
    %5 = vector.load %arg4[%c0_5, %c0_6] : memref<32x32xbf16, #tpu.memory_space<vmem>>, vector<32x32xbf16>
    %cst = arith.constant dense<0.000000e+00> : vector<16x32xf32>
    %6 = tpu.matmul %4, %5, %cst {dimension_numbers = #tpu.dot_dimension_numbers<[1], [0], [0], [1], [0, 0, 1, 1], [], []>} : vector<16x32xbf16>, vector<32x32xbf16>, vector<16x32xf32> -> vector<16x32xf32>
    %c0_7 = arith.constant 0 : index
    %c0_8 = arith.constant 0 : index
    %7 = vector.load %arg5[%c0_7, %c0_8] : memref<1x32xf32, #tpu.memory_space<vmem>>, vector<1x32xf32>
    %8 = vector.broadcast %7 : vector<1x32xf32> to vector<16x32xf32>
    %9 = arith.addf %6, %8 : vector<16x32xf32>
    %10 = math.tanh %9 : vector<16x32xf32>
    %11 = vector.shape_cast %10 : vector<16x32xf32> to vector<2x8x32xf32>
    %c0_9 = arith.constant 0 : index
    %c0_10 = arith.constant 0 : index
    %c0_11 = arith.constant 0 : index
    %12 = vector.load %arg25[%c0_9, %c0_10, %c0_11] : memref<2x8x32xf32, #tpu.memory_space<vmem>>, vector<2x8x32xf32>
    tpu.vector_store %arg25[%c0_9, %c0_10, %c0_11], %11 {strides = array<i32>} : memref<2x8x32xf32, #tpu.memory_space<vmem>>, vector<2x8x32xf32>,
    %13 = arith.truncf %1 : vector<16x32xf32> to vector<16x32xbf16>
    %c0_12 = arith.constant 0 : index
    %c0_13 = arith.constant 0 : index
    %14 = vector.load %arg6[%c0_12, %c0_13] : memref<32x32xbf16, #tpu.memory_space<vmem>>, vector<32x32xbf16>
    %cst_14 = arith.constant dense<0.000000e+00> : vector<16x32xf32>
    %15 = tpu.matmul %13, %14, %cst_14 {dimension_numbers = #tpu.dot_dimension_numbers<[1], [0], [0], [1], [0, 0, 1, 1], [], []>} : vector<16x32xbf16>, vector<32x32xbf16>, vector<16x32xf32> -> vector<16x32xf32>
    %c0_15 = arith.constant 0 : index
    %c0_16 = arith.constant 0 : index
    %16 = vector.load %arg7[%c0_15, %c0_16] : memref<1x32xf32, #tpu.memory_space<vmem>>, vector<1x32xf32>
    %17 = vector.broadcast %16 : vector<1x32xf32> to vector<16x32xf32>
    %18 = arith.addf %15, %17 : vector<16x32xf32>
    %19 = arith.truncf %10 : vector<16x32xf32> to vector<16x32xbf16>
    %c0_17 = arith.constant 0 : index
    %c0_18 = arith.constant 0 : index
    %20 = vector.load %arg8[%c0_17, %c0_18] : memref<32x32xbf16, #tpu.memory_space<vmem>>, vector<32x32xbf16>
    %cst_19 = arith.constant dense<0.000000e+00> : vector<16x32xf32>
    %21 = tpu.matmul %19, %20, %cst_19 {dimension_numbers = #tpu.dot_dimension_numbers<[1], [0], [0], [1], [0, 0, 1, 1], [], []>} : vector<16x32xbf16>, vector<32x32xbf16>, vector<16x32xf32> -> vector<16x32xf32>
    %c0_20 = arith.constant 0 : index
    %c0_21 = arith.constant 0 : index
    %22 = vector.load %arg9[%c0_20, %c0_21] : memref<1x32xf32, #tpu.memory_space<vmem>>, vector<1x32xf32>
    %23 = vector.broadcast %22 : vector<1x32xf32> to vector<16x32xf32>
    %24 = arith.addf %21, %23 : vector<16x32xf32>
    %25 = arith.truncf %10 : vector<16x32xf32> to vector<16x32xbf16>
    %c0_22 = arith.constant 0 : index
    %c0_23 = arith.constant 0 : index
    %26 = vector.load %arg10[%c0_22, %c0_23] : memref<32x32xbf16, #tpu.memory_space<vmem>>, vector<32x32xbf16>
    %cst_24 = arith.constant dense<0.000000e+00> : vector<16x32xf32>
    %27 = tpu.matmul %25, %26, %cst_24 {dimension_numbers = #tpu.dot_dimension_numbers<[1], [0], [0], [1], [0, 0, 1, 1], [], []>} : vector<16x32xbf16>, vector<32x32xbf16>, vector<16x32xf32> -> vector<16x32xf32>
    %c0_25 = arith.constant 0 : index
    %c0_26 = arith.constant 0 : index
    %28 = vector.load %arg11[%c0_25, %c0_26] : memref<1x32xf32, #tpu.memory_space<vmem>>, vector<1x32xf32>
    %29 = vector.broadcast %28 : vector<1x32xf32> to vector<16x32xf32>
    %30 = arith.addf %27, %29 : vector<16x32xf32>
    %31 = vector.shape_cast %18 : vector<16x32xf32> to vector<2x8x32xf32>
    %32 = vector.shape_cast %24 : vector<16x32xf32> to vector<2x8x32xf32>
    %33 = vector.shape_cast %30 : vector<16x32xf32> to vector<2x8x32xf32>
    %c0_27 = arith.constant 0 : index
    %c0_28 = arith.constant 0 : index
    %34 = vector.load %arg3[%c0_27, %c0_28] : memref<8x8xf32, #tpu.memory_space<vmem>>, vector<8x8xf32>
    %35 = vector.extract_strided_slice %31 {offsets = [0, 0, 0], sizes = [2, 8, 8], strides = [1, 1, 1]} : vector<2x8x32xf32> to vector<2x8x8xf32>
    %36 = vector.extract_strided_slice %31 {offsets = [0, 0, 8], sizes = [2, 8, 8], strides = [1, 1, 1]} : vector<2x8x32xf32> to vector<2x8x8xf32>
    %37 = vector.extract_strided_slice %31 {offsets = [0, 0, 16], sizes = [2, 8, 8], strides = [1, 1, 1]} : vector<2x8x32xf32> to vector<2x8x8xf32>
    %38 = vector.extract_strided_slice %31 {offsets = [0, 0, 24], sizes = [2, 8, 8], strides = [1, 1, 1]} : vector<2x8x32xf32> to vector<2x8x8xf32>
    %39 = tpu.concatenate %35, %36, %37, %38 in 0 : vector<2x8x8xf32>, vector<2x8x8xf32>, vector<2x8x8xf32>, vector<2x8x8xf32> -> vector<8x8x8xf32>
    %40 = arith.truncf %39 : vector<8x8x8xf32> to vector<8x8x8xbf16>
    %41 = vector.extract_strided_slice %32 {offsets = [0, 0, 0], sizes = [2, 8, 8], strides = [1, 1, 1]} : vector<2x8x32xf32> to vector<2x8x8xf32>
    %42 = vector.extract_strided_slice %32 {offsets = [0, 0, 8], sizes = [2, 8, 8], strides = [1, 1, 1]} : vector<2x8x32xf32> to vector<2x8x8xf32>
    %43 = vector.extract_strided_slice %32 {offsets = [0, 0, 16], sizes = [2, 8, 8], strides = [1, 1, 1]} : vector<2x8x32xf32> to vector<2x8x8xf32>
    %44 = vector.extract_strided_slice %32 {offsets = [0, 0, 24], sizes = [2, 8, 8], strides = [1, 1, 1]} : vector<2x8x32xf32> to vector<2x8x8xf32>
    %45 = tpu.concatenate %41, %42, %43, %44 in 0 : vector<2x8x8xf32>, vector<2x8x8xf32>, vector<2x8x8xf32>, vector<2x8x8xf32> -> vector<8x8x8xf32>
    %46 = arith.truncf %45 : vector<8x8x8xf32> to vector<8x8x8xbf16>
    %47 = vector.extract_strided_slice %33 {offsets = [0, 0, 0], sizes = [2, 8, 8], strides = [1, 1, 1]} : vector<2x8x32xf32> to vector<2x8x8xf32>
    %48 = vector.extract_strided_slice %33 {offsets = [0, 0, 8], sizes = [2, 8, 8], strides = [1, 1, 1]} : vector<2x8x32xf32> to vector<2x8x8xf32>
    %49 = vector.extract_strided_slice %33 {offsets = [0, 0, 16], sizes = [2, 8, 8], strides = [1, 1, 1]} : vector<2x8x32xf32> to vector<2x8x8xf32>
    %50 = vector.extract_strided_slice %33 {offsets = [0, 0, 24], sizes = [2, 8, 8], strides = [1, 1, 1]} : vector<2x8x32xf32> to vector<2x8x8xf32>
    %51 = tpu.concatenate %47, %48, %49, %50 in 0 : vector<2x8x8xf32>, vector<2x8x8xf32>, vector<2x8x8xf32>, vector<2x8x8xf32> -> vector<8x8x8xf32>
    %52 = arith.truncf %51 : vector<8x8x8xf32> to vector<8x8x8xbf16>
    "tpu.trace_start"() <{level = 10 : i32, message = "bqd,bkd->bqk"}> : () -> ()
    %cst_29 = arith.constant dense<0.000000e+00> : vector<8x8x8xf32>
    %53 = tpu.matmul %40, %46, %cst_29 {dimension_numbers = #tpu.dot_dimension_numbers<[2], [2], [1], [1], [0, 0, 0, 1, 1, 1], [0], [0]>} : vector<8x8x8xbf16>, vector<8x8x8xbf16>, vector<8x8x8xf32> -> vector<8x8x8xf32>
    "tpu.trace_stop"() : () -> ()
    %54 = vector.shape_cast %34 : vector<8x8xf32> to vector<1x8x8xf32>
    %55 = vector.broadcast %54 : vector<1x8x8xf32> to vector<8x8x8xf32>
    %56 = arith.addf %53, %55 : vector<8x8x8xf32>
    %cst_30 = arith.constant dense<0xFF800000> : vector<8x8xf32>
    %57 = vector.multi_reduction <maximumf>, %56, %cst_30 [2] : vector<8x8x8xf32> to vector<8x8xf32>
    %58 = vector.shape_cast %57 : vector<8x8xf32> to vector<8x8x1xf32>
    %59 = vector.broadcast %58 : vector<8x8x1xf32> to vector<8x8x8xf32>
    %60 = arith.subf %56, %59 : vector<8x8x8xf32>
    %61 = math.exp %60 : vector<8x8x8xf32>
    %cst_31 = arith.constant dense<0.000000e+00> : vector<8x8xf32>
    %62 = vector.multi_reduction <add>, %61, %cst_31 [2] : vector<8x8x8xf32> to vector<8x8xf32>
    %63 = vector.shape_cast %62 : vector<8x8xf32> to vector<8x8x1xf32>
    %64 = vector.broadcast %63 : vector<8x8x1xf32> to vector<8x8x8xf32>
    %65 = arith.divf %61, %64 : vector<8x8x8xf32>
    %66 = arith.truncf %65 : vector<8x8x8xf32> to vector<8x8x8xbf16>
    "tpu.trace_start"() <{level = 10 : i32, message = "bqk,bkd->bqd"}> : () -> ()
    %cst_32 = arith.constant dense<0.000000e+00> : vector<8x8x8xf32>
    %67 = tpu.matmul %66, %52, %cst_32 {dimension_numbers = #tpu.dot_dimension_numbers<[2], [1], [1], [2], [0, 0, 0, 1, 1, 2], [0], [0]>} : vector<8x8x8xbf16>, vector<8x8x8xbf16>, vector<8x8x8xf32> -> vector<8x8x8xf32>
    "tpu.trace_stop"() : () -> ()
    %68 = vector.extract_strided_slice %67 {offsets = [0, 0, 0], sizes = [2, 8, 8], strides = [1, 1, 1]} : vector<8x8x8xf32> to vector<2x8x8xf32>
    %69 = vector.extract_strided_slice %67 {offsets = [2, 0, 0], sizes = [2, 8, 8], strides = [1, 1, 1]} : vector<8x8x8xf32> to vector<2x8x8xf32>
    %70 = vector.extract_strided_slice %67 {offsets = [4, 0, 0], sizes = [2, 8, 8], strides = [1, 1, 1]} : vector<8x8x8xf32> to vector<2x8x8xf32>
    %71 = vector.extract_strided_slice %67 {offsets = [6, 0, 0], sizes = [2, 8, 8], strides = [1, 1, 1]} : vector<8x8x8xf32> to vector<2x8x8xf32>
    %72 = tpu.concatenate %68, %69, %70, %71 in 2 : vector<2x8x8xf32>, vector<2x8x8xf32>, vector<2x8x8xf32>, vector<2x8x8xf32> -> vector<2x8x32xf32>
    %73 = vector.shape_cast %72 : vector<2x8x32xf32> to vector<16x32xf32>
    %74 = arith.truncf %73 : vector<16x32xf32> to vector<16x32xbf16>
    %c0_33 = arith.constant 0 : index
    %c0_34 = arith.constant 0 : index
    %75 = vector.load %arg12[%c0_33, %c0_34] : memref<32x32xbf16, #tpu.memory_space<vmem>>, vector<32x32xbf16>
    %cst_35 = arith.constant dense<0.000000e+00> : vector<16x32xf32>
    %76 = tpu.matmul %74, %75, %cst_35 {dimension_numbers = #tpu.dot_dimension_numbers<[1], [0], [0], [1], [0, 0, 1, 1], [], []>} : vector<16x32xbf16>, vector<32x32xbf16>, vector<16x32xf32> -> vector<16x32xf32>
    %c0_36 = arith.constant 0 : index
    %c0_37 = arith.constant 0 : index
    %77 = vector.load %arg13[%c0_36, %c0_37] : memref<1x32xf32, #tpu.memory_space<vmem>>, vector<1x32xf32>
    %78 = vector.broadcast %77 : vector<1x32xf32> to vector<16x32xf32>
    %79 = arith.addf %76, %78 : vector<16x32xf32>
    %80 = arith.addf %1, %79 : vector<16x32xf32>
    %c0_38 = arith.constant 0 : index
    %c0_39 = arith.constant 0 : index
    %81 = vector.load %arg14[%c0_38, %c0_39] : memref<1x32xf32, #tpu.memory_space<vmem>>, vector<1x32xf32>
    %c0_40 = arith.constant 0 : index
    %c0_41 = arith.constant 0 : index
    %82 = vector.load %arg15[%c0_40, %c0_41] : memref<1x32xf32, #tpu.memory_space<vmem>>, vector<1x32xf32>
    %cst_42 = arith.constant dense<0.000000e+00> : vector<16xf32>
    %83 = vector.multi_reduction <add>, %80, %cst_42 [1] : vector<16x32xf32> to vector<16xf32>
    %84 = vector.shape_cast %83 : vector<16xf32> to vector<16x1xf32>
    %cst_43 = arith.constant 3.200000e+01 : f32
    %85 = vector.broadcast %cst_43 : f32 to vector<16x1xf32>
    %86 = arith.divf %84, %85 : vector<16x1xf32>
    %87 = vector.broadcast %86 : vector<16x1xf32> to vector<16x32xf32>
    %88 = arith.subf %80, %87 : vector<16x32xf32>
    %89 = arith.mulf %88, %88 : vector<16x32xf32>
    %cst_44 = arith.constant dense<0.000000e+00> : vector<16xf32>
    %90 = vector.multi_reduction <add>, %89, %cst_44 [1] : vector<16x32xf32> to vector<16xf32>
    %91 = vector.shape_cast %90 : vector<16xf32> to vector<16x1xf32>
    %cst_45 = arith.constant 3.200000e+01 : f32
    %92 = vector.broadcast %cst_45 : f32 to vector<16x1xf32>
    %93 = arith.divf %91, %92 : vector<16x1xf32>
    %cst_46 = arith.constant 9.99999974E-6 : f32
    %94 = vector.broadcast %cst_46 : f32 to vector<16x1xf32>
    %95 = arith.addf %93, %94 : vector<16x1xf32>
    %96 = math.rsqrt %95 : vector<16x1xf32>
    %97 = vector.broadcast %96 : vector<16x1xf32> to vector<16x32xf32>
    %98 = arith.mulf %88, %97 : vector<16x32xf32>
    %99 = vector.broadcast %81 : vector<1x32xf32> to vector<16x32xf32>
    %100 = arith.mulf %98, %99 : vector<16x32xf32>
    %101 = vector.broadcast %82 : vector<1x32xf32> to vector<16x32xf32>
    %102 = arith.addf %100, %101 : vector<16x32xf32>
    %103 = arith.truncf %102 : vector<16x32xf32> to vector<16x32xbf16>
    %c0_47 = arith.constant 0 : index
    %c0_48 = arith.constant 0 : index
    %104 = vector.load %arg16[%c0_47, %c0_48] : memref<32x64xbf16, #tpu.memory_space<vmem>>, vector<32x64xbf16>
    %cst_49 = arith.constant dense<0.000000e+00> : vector<16x64xf32>
    %105 = tpu.matmul %103, %104, %cst_49 {dimension_numbers = #tpu.dot_dimension_numbers<[1], [0], [0], [1], [0, 0, 1, 1], [], []>} : vector<16x32xbf16>, vector<32x64xbf16>, vector<16x64xf32> -> vector<16x64xf32>
    %c0_50 = arith.constant 0 : index
    %c0_51 = arith.constant 0 : index
    %106 = vector.load %arg17[%c0_50, %c0_51] : memref<1x64xf32, #tpu.memory_space<vmem>>, vector<1x64xf32>
    %107 = vector.broadcast %106 : vector<1x64xf32> to vector<16x64xf32>
    %108 = arith.addf %105, %107 : vector<16x64xf32>
    %cst_52 = arith.constant 0.000000e+00 : f32
    %109 = vector.broadcast %cst_52 : f32 to vector<16x64xf32>
    %110 = arith.maximumf %108, %109 : vector<16x64xf32>
    %111 = arith.truncf %110 : vector<16x64xf32> to vector<16x64xbf16>
    %c0_53 = arith.constant 0 : index
    %c0_54 = arith.constant 0 : index
    %112 = vector.load %arg18[%c0_53, %c0_54] : memref<64x32xbf16, #tpu.memory_space<vmem>>, vector<64x32xbf16>
    %cst_55 = arith.constant dense<0.000000e+00> : vector<16x32xf32>
    %113 = tpu.matmul %111, %112, %cst_55 {dimension_numbers = #tpu.dot_dimension_numbers<[1], [0], [0], [1], [0, 0, 1, 1], [], []>} : vector<16x64xbf16>, vector<64x32xbf16>, vector<16x32xf32> -> vector<16x32xf32>
    %c0_56 = arith.constant 0 : index
    %c0_57 = arith.constant 0 : index
    %114 = vector.load %arg19[%c0_56, %c0_57] : memref<1x32xf32, #tpu.memory_space<vmem>>, vector<1x32xf32>
    %115 = vector.broadcast %114 : vector<1x32xf32> to vector<16x32xf32>
    %116 = arith.addf %113, %115 : vector<16x32xf32>
    %117 = arith.addf %102, %116 : vector<16x32xf32>
    %c0_58 = arith.constant 0 : index
    %c0_59 = arith.constant 0 : index
    %118 = vector.load %arg20[%c0_58, %c0_59] : memref<1x32xf32, #tpu.memory_space<vmem>>, vector<1x32xf32>
    %c0_60 = arith.constant 0 : index
    %c0_61 = arith.constant 0 : index
    %119 = vector.load %arg21[%c0_60, %c0_61] : memref<1x32xf32, #tpu.memory_space<vmem>>, vector<1x32xf32>
    %cst_62 = arith.constant dense<0.000000e+00> : vector<16xf32>
    %120 = vector.multi_reduction <add>, %117, %cst_62 [1] : vector<16x32xf32> to vector<16xf32>
    %121 = vector.shape_cast %120 : vector<16xf32> to vector<16x1xf32>
    %cst_63 = arith.constant 3.200000e+01 : f32
    %122 = vector.broadcast %cst_63 : f32 to vector<16x1xf32>
    %123 = arith.divf %121, %122 : vector<16x1xf32>
    %124 = vector.broadcast %123 : vector<16x1xf32> to vector<16x32xf32>
    %125 = arith.subf %117, %124 : vector<16x32xf32>
    %126 = arith.mulf %125, %125 : vector<16x32xf32>
    %cst_64 = arith.constant dense<0.000000e+00> : vector<16xf32>
    %127 = vector.multi_reduction <add>, %126, %cst_64 [1] : vector<16x32xf32> to vector<16xf32>
    %128 = vector.shape_cast %127 : vector<16xf32> to vector<16x1xf32>
    %cst_65 = arith.constant 3.200000e+01 : f32
    %129 = vector.broadcast %cst_65 : f32 to vector<16x1xf32>
    %130 = arith.divf %128, %129 : vector<16x1xf32>
    %cst_66 = arith.constant 9.99999974E-6 : f32
    %131 = vector.broadcast %cst_66 : f32 to vector<16x1xf32>
    %132 = arith.addf %130, %131 : vector<16x1xf32>
    %133 = math.rsqrt %132 : vector<16x1xf32>
    %134 = vector.broadcast %133 : vector<16x1xf32> to vector<16x32xf32>
    %135 = arith.mulf %125, %134 : vector<16x32xf32>
    %136 = vector.broadcast %118 : vector<1x32xf32> to vector<16x32xf32>
    %137 = arith.mulf %135, %136 : vector<16x32xf32>
    %138 = vector.broadcast %119 : vector<1x32xf32> to vector<16x32xf32>
    %139 = arith.addf %137, %138 : vector<16x32xf32>
    %c0_67 = arith.constant 0 : index
    %c0_68 = arith.constant 0 : index
    %140 = vector.load %arg22[%c0_67, %c0_68] : memref<1x32xf32, #tpu.memory_space<vmem>>, vector<1x32xf32>
    %c0_69 = arith.constant 0 : index
    %c0_70 = arith.constant 0 : index
    %141 = vector.load %arg23[%c0_69, %c0_70] : memref<1x32xf32, #tpu.memory_space<vmem>>, vector<1x32xf32>
    %cst_71 = arith.constant dense<0.000000e+00> : vector<16xf32>
    %142 = vector.multi_reduction <add>, %139, %cst_71 [1] : vector<16x32xf32> to vector<16xf32>
    %143 = vector.shape_cast %142 : vector<16xf32> to vector<16x1xf32>
    %cst_72 = arith.constant 3.200000e+01 : f32
    %144 = vector.broadcast %cst_72 : f32 to vector<16x1xf32>
    %145 = arith.divf %143, %144 : vector<16x1xf32>
    %146 = vector.broadcast %145 : vector<16x1xf32> to vector<16x32xf32>
    %147 = arith.subf %139, %146 : vector<16x32xf32>
    %148 = arith.mulf %147, %147 : vector<16x32xf32>
    %cst_73 = arith.constant dense<0.000000e+00> : vector<16xf32>
    %149 = vector.multi_reduction <add>, %148, %cst_73 [1] : vector<16x32xf32> to vector<16xf32>
    %150 = vector.shape_cast %149 : vector<16xf32> to vector<16x1xf32>
    %cst_74 = arith.constant 3.200000e+01 : f32
    %151 = vector.broadcast %cst_74 : f32 to vector<16x1xf32>
    %152 = arith.divf %150, %151 : vector<16x1xf32>
    %cst_75 = arith.constant 9.99999974E-6 : f32
    %153 = vector.broadcast %cst_75 : f32 to vector<16x1xf32>
    %154 = arith.addf %152, %153 : vector<16x1xf32>
    %155 = math.rsqrt %154 : vector<16x1xf32>
    %156 = vector.broadcast %155 : vector<16x1xf32> to vector<16x32xf32>
    %157 = arith.mulf %147, %156 : vector<16x32xf32>
    %158 = vector.broadcast %140 : vector<1x32xf32> to vector<16x32xf32>
    %159 = arith.mulf %157, %158 : vector<16x32xf32>
    %160 = vector.broadcast %141 : vector<1x32xf32> to vector<16x32xf32>
    %161 = arith.addf %159, %160 : vector<16x32xf32>
    %162 = vector.shape_cast %161 : vector<16x32xf32> to vector<2x8x32xf32>
    %c0_76 = arith.constant 0 : index
    %c0_77 = arith.constant 0 : index
    %c0_78 = arith.constant 0 : index
    %163 = vector.load %arg24[%c0_76, %c0_77, %c0_78] : memref<2x8x32xf32, #tpu.memory_space<vmem>>, vector<2x8x32xf32>
    tpu.vector_store %arg24[%c0_76, %c0_77, %c0_78], %162 {strides = array<i32>} : memref<2x8x32xf32, #tpu.memory_space<vmem>>, vector<2x8x32xf32>,
    return
  }
  func.func @transform_0(%arg0: i32) -> (i32, i32, i32) {
    %c0_i32 = arith.constant 0 : i32
    %c0_i32_0 = arith.constant 0 : i32
    %c0_i32_1 = arith.constant 0 : i32
    return %arg0, %c0_i32, %c0_i32_0 : i32, i32, i32
  }
  func.func @transform_1(%arg0: i32) -> (i32, i32, i32) {
    %c0_i32 = arith.constant 0 : i32
    %c0_i32_0 = arith.constant 0 : i32
    %c0_i32_1 = arith.constant 0 : i32
    return %arg0, %c0_i32, %c0_i32_0 : i32, i32, i32
  }
  func.func @transform_2(%arg0: i32) -> (i32, i32) {
    %c0_i32 = arith.constant 0 : i32
    %c0_i32_0 = arith.constant 0 : i32
    %c0_i32_1 = arith.constant 0 : i32
    return %c0_i32, %c0_i32_0 : i32, i32
  }
  func.func @transform_3(%arg0: i32) -> (i32, i32) {
    %c0_i32 = arith.constant 0 : i32
    %c0_i32_0 = arith.constant 0 : i32
    %c0_i32_1 = arith.constant 0 : i32
    return %c0_i32, %c0_i32_0 : i32, i32
  }
  func.func @transform_4(%arg0: i32) -> (i32, i32) {
    %c0_i32 = arith.constant 0 : i32
    %c0_i32_0 = arith.constant 0 : i32
    %c0_i32_1 = arith.constant 0 : i32
    return %c0_i32, %c0_i32_0 : i32, i32
  }
  func.func @transform_5(%arg0: i32) -> (i32, i32) {
    %c0_i32 = arith.constant 0 : i32
    %c0_i32_0 = arith.constant 0 : i32
    %c0_i32_1 = arith.constant 0 : i32
    return %c0_i32, %c0_i32_0 : i32, i32
  }
  func.func @transform_6(%arg0: i32) -> (i32, i32) {
    %c0_i32 = arith.constant 0 : i32
    %c0_i32_0 = arith.constant 0 : i32
    %c0_i32_1 = arith.constant 0 : i32
    return %c0_i32, %c0_i32_0 : i32, i32
  }
  func.func @transform_7(%arg0: i32) -> (i32, i32) {
    %c0_i32 = arith.constant 0 : i32
    %c0_i32_0 = arith.constant 0 : i32
    %c0_i32_1 = arith.constant 0 : i32
    return %c0_i32, %c0_i32_0 : i32, i32
  }
  func.func @transform_8(%arg0: i32) -> (i32, i32) {
    %c0_i32 = arith.constant 0 : i32
    %c0_i32_0 = arith.constant 0 : i32
    %c0_i32_1 = arith.constant 0 : i32
    return %c0_i32, %c0_i32_0 : i32, i32
  }
  func.func @transform_9(%arg0: i32) -> (i32, i32) {
    %c0_i32 = arith.constant 0 : i32
    %c0_i32_0 = arith.constant 0 : i32
    %c0_i32_1 = arith.constant 0 : i32
    return %c0_i32, %c0_i32_0 : i32, i32
  }
  func.func @transform_10(%arg0: i32) -> (i32, i32) {
    %c0_i32 = arith.constant 0 : i32
    %c0_i32_0 = arith.constant 0 : i32
    %c0_i32_1 = arith.constant 0 : i32
    return %c0_i32, %c0_i32_0 : i32, i32
  }
  func.func @transform_11(%arg0: i32) -> (i32, i32) {
    %c0_i32 = arith.constant 0 : i32
    %c0_i32_0 = arith.constant 0 : i32
    %c0_i32_1 = arith.constant 0 : i32
    return %c0_i32, %c0_i32_0 : i32, i32
  }
  func.func @transform_12(%arg0: i32) -> (i32, i32) {
    %c0_i32 = arith.constant 0 : i32
    %c0_i32_0 = arith.constant 0 : i32
    %c0_i32_1 = arith.constant 0 : i32
    return %c0_i32, %c0_i32_0 : i32, i32
  }
  func.func @transform_13(%arg0: i32) -> (i32, i32) {
    %c0_i32 = arith.constant 0 : i32
    %c0_i32_0 = arith.constant 0 : i32
    %c0_i32_1 = arith.constant 0 : i32
    return %c0_i32, %c0_i32_0 : i32, i32
  }
  func.func @transform_14(%arg0: i32) -> (i32, i32) {
    %c0_i32 = arith.constant 0 : i32
    %c0_i32_0 = arith.constant 0 : i32
    %c0_i32_1 = arith.constant 0 : i32
    return %c0_i32, %c0_i32_0 : i32, i32
  }
  func.func @transform_15(%arg0: i32) -> (i32, i32) {
    %c0_i32 = arith.constant 0 : i32
    %c0_i32_0 = arith.constant 0 : i32
    %c0_i32_1 = arith.constant 0 : i32
    return %c0_i32, %c0_i32_0 : i32, i32
  }
  func.func @transform_16(%arg0: i32) -> (i32, i32) {
    %c0_i32 = arith.constant 0 : i32
    %c0_i32_0 = arith.constant 0 : i32
    %c0_i32_1 = arith.constant 0 : i32
    return %c0_i32, %c0_i32_0 : i32, i32
  }
  func.func @transform_17(%arg0: i32) -> (i32, i32) {
    %c0_i32 = arith.constant 0 : i32
    %c0_i32_0 = arith.constant 0 : i32
    %c0_i32_1 = arith.constant 0 : i32
    return %c0_i32, %c0_i32_0 : i32, i32
  }
  func.func @transform_18(%arg0: i32) -> (i32, i32) {
    %c0_i32 = arith.constant 0 : i32
    %c0_i32_0 = arith.constant 0 : i32
    %c0_i32_1 = arith.constant 0 : i32
    return %c0_i32, %c0_i32_0 : i32, i32
  }
  func.func @transform_19(%arg0: i32) -> (i32, i32) {
    %c0_i32 = arith.constant 0 : i32
    %c0_i32_0 = arith.constant 0 : i32
    %c0_i32_1 = arith.constant 0 : i32
    return %c0_i32, %c0_i32_0 : i32, i32
  }
  func.func @transform_20(%arg0: i32) -> (i32, i32) {
    %c0_i32 = arith.constant 0 : i32
    %c0_i32_0 = arith.constant 0 : i32
    %c0_i32_1 = arith.constant 0 : i32
    return %c0_i32, %c0_i32_0 : i32, i32
  }
  func.func @transform_21(%arg0: i32) -> (i32, i32) {
    %c0_i32 = arith.constant 0 : i32
    %c0_i32_0 = arith.constant 0 : i32
    %c0_i32_1 = arith.constant 0 : i32
    return %c0_i32, %c0_i32_0 : i32, i32
  }
  func.func @transform_22(%arg0: i32) -> (i32, i32) {
    %c0_i32 = arith.constant 0 : i32
    %c0_i32_0 = arith.constant 0 : i32
    %c0_i32_1 = arith.constant 0 : i32
    return %c0_i32, %c0_i32_0 : i32, i32
  }
  func.func @transform_23(%arg0: i32) -> (i32, i32, i32) {
    %c0_i32 = arith.constant 0 : i32
    %c0_i32_0 = arith.constant 0 : i32
    %c0_i32_1 = arith.constant 0 : i32
    return %arg0, %c0_i32, %c0_i32_0 : i32, i32, i32
  }
  func.func @transform_24(%arg0: i32) -> (i32, i32, i32) {
    %c0_i32 = arith.constant 0 : i32
    %c0_i32_0 = arith.constant 0 : i32
    %c0_i32_1 = arith.constant 0 : i32
    return %arg0, %c0_i32, %c0_i32_0 : i32, i32, i32
  }
}

</mosaic_0001>

<llo_original>
// kernel: segmental_transformer_encoder.3
$region0: #{segmental_transformer_encoder.3}
  #allocation0 [shape = 'u32[]', space=smem, size = 0x4, offset = 0x4, fixed_abs, tag = 'smem constant byte address 0x4 - core index']
  #allocation1 [shape = 'u32[72,128]{1,0:T(1,128)}', space=vmem, size = 0x9000, scoped, tag = 'internal scratch']
  %s0 = inlined_call_operand.vmem [shape: f32[2,8,32], index: 0, kind: input, shape index: {}]
  %s1 = inlined_call_operand.vmem [shape: f32[2,8,32], index: 1, kind: input, shape index: {}]
  %s2 = inlined_call_operand.hbm [shape: f32[8,8], index: 2, kind: input, shape index: {}]
  %s3 = inlined_call_operand.vmem [shape: bf16[32,32], index: 3, kind: input, shape index: {}]
  %s4 = inlined_call_operand.hbm [shape: f32[1,32], index: 4, kind: input, shape index: {}]
  %s5 = inlined_call_operand.vmem [shape: bf16[32,32], index: 5, kind: input, shape index: {}]
  %s6 = inlined_call_operand.hbm [shape: f32[1,32], index: 6, kind: input, shape index: {}]
  %s7 = inlined_call_operand.vmem [shape: bf16[32,32], index: 7, kind: input, shape index: {}]
  %s8 = inlined_call_operand.hbm [shape: f32[1,32], index: 8, kind: input, shape index: {}]
  %s9 = inlined_call_operand.vmem [shape: bf16[32,32], index: 9, kind: input, shape index: {}]
  %s10 = inlined_call_operand.hbm [shape: f32[1,32], index: 10, kind: input, shape index: {}]
  %s11 = inlined_call_operand.hbm [shape: bf16[32,32], index: 11, kind: input, shape index: {}]
  %s12 = inlined_call_operand.hbm [shape: f32[1,32], index: 12, kind: input, shape index: {}]
  %s13 = inlined_call_operand.hbm [shape: f32[1,32], index: 13, kind: input, shape index: {}]
  %s14 = inlined_call_operand.hbm [shape: f32[1,32], index: 14, kind: input, shape index: {}]
  %s15 = inlined_call_operand.hbm [shape: bf16[32,64], index: 15, kind: input, shape index: {}]
  %s16 = inlined_call_operand.hbm [shape: f32[1,64], index: 16, kind: input, shape index: {}]
  %s17 = inlined_call_operand.vmem [shape: bf16[64,32], index: 17, kind: input, shape index: {}]
  %s18 = inlined_call_operand.hbm [shape: f32[1,32], index: 18, kind: input, shape index: {}]
  %s19 = inlined_call_operand.hbm [shape: f32[1,32], index: 19, kind: input, shape index: {}]
  %s20 = inlined_call_operand.hbm [shape: f32[1,32], index: 20, kind: input, shape index: {}]
  %s21 = inlined_call_operand.hbm [shape: f32[1,32], index: 21, kind: input, shape index: {}]
  %s22 = inlined_call_operand.hbm [shape: f32[1,32], index: 22, kind: input, shape index: {}]
  %s23 = inlined_call_operand.vmem [shape: f32[2,8,32], index: 23, kind: output, shape index: {0}]
  %s24 = inlined_call_operand.hbm [shape: f32[2,8,32], index: 24, kind: output, shape index: {1}]
  %25 = xla_tuple %s23, %s24
  %s26 = sld [smem:[#allocation0]]
  $region174: #{segmental_transformer_encoder.3} parent=0
    _
  %s28 = ssub.s32 1, %s26
  %s29 = scalar_select 0, %s28, %s26
  $region1: #{segmental_transformer_encoder.3} parent=0
    #allocation2 [shape = 'u8[4096]{0}', space=vmem, size = 0x1000, scoped, tag = 'input window, operand 2, single buffered']
    #allocation3 [shape = 's32[1]{0}', space=sflag, size = 0x4, scoped, tag = 'scoped memory for segmental_transformer_encoder.3']
    #allocation4 [shape = 's32[1]{0}', space=sflag, size = 0x4, scoped, tag = 'scoped memory for segmental_transformer_encoder.3']
    #allocation5 [shape = 'u8[512]{0}', space=vmem, size = 0x400, scoped, tag = 'input window, operand 4, single buffered']
    #allocation6 [shape = 's32[1]{0}', space=sflag, size = 0x4, scoped, tag = 'scoped memory for segmental_transformer_encoder.3']
    #allocation7 [shape = 'u8[512]{0}', space=vmem, size = 0x400, scoped, tag = 'input window, operand 6, single buffered']
    #allocation8 [shape = 'u8[512]{0}', space=vmem, size = 0x400, scoped, tag = 'input window, operand 8, single buffered']
    #allocation9 [shape = 's32[1]{0}', space=sflag, size = 0x4, scoped, tag = 'scoped memory for segmental_transformer_encoder.3']
    #allocation10 [shape = 'u8[512]{0}', space=vmem, size = 0x400, scoped, tag = 'input window, operand 10, single buffered']
    #allocation11 [shape = 'u8[8192]{0}', space=vmem, size = 0x2000, scoped, tag = 'input window, operand 11, single buffered']
    #allocation12 [shape = 's32[1]{0}', space=sflag, size = 0x4, scoped, tag = 'scoped memory for segmental_transformer_encoder.3']
    #allocation13 [shape = 'u8[512]{0}', space=vmem, size = 0x400, scoped, tag = 'input window, operand 12, single buffered']
    #allocation14 [shape = 'u8[512]{0}', space=vmem, size = 0x400, scoped, tag = 'input window, operand 13, single buffered']
    #allocation15 [shape = 's32[1]{0}', space=sflag, size = 0x4, scoped, tag = 'scoped memory for segmental_transformer_encoder.3']
    #allocation16 [shape = 'u8[512]{0}', space=vmem, size = 0x400, scoped, tag = 'input window, operand 14, single buffered']
    #allocation17 [shape = 'u8[8192]{0}', space=vmem, size = 0x2000, scoped, tag = 'input window, operand 15, single buffered']
    #allocation18 [shape = 's32[1]{0}', space=sflag, size = 0x4, scoped, tag = 'scoped memory for segmental_transformer_encoder.3']
    #allocation19 [shape = 'u8[512]{0}', space=vmem, size = 0x400, scoped, tag = 'input window, operand 16, single buffered']
    #allocation20 [shape = 'u8[512]{0}', space=vmem, size = 0x400, scoped, tag = 'input window, operand 18, single buffered']
    #allocation21 [shape = 's32[1]{0}', space=sflag, size = 0x4, scoped, tag = 'scoped memory for segmental_transformer_encoder.3']
    #allocation22 [shape = 'u8[512]{0}', space=vmem, size = 0x400, scoped, tag = 'input window, operand 19, single buffered']
    #allocation23 [shape = 'u8[512]{0}', space=vmem, size = 0x400, scoped, tag = 'input window, operand 20, single buffered']
    #allocation24 [shape = 's32[1]{0}', space=sflag, size = 0x4, scoped, tag = 'scoped memory for segmental_transformer_encoder.3']
    #allocation25 [shape = 'u8[512]{0}', space=vmem, size = 0x400, scoped, tag = 'input window, operand 21, single buffered']
    #allocation26 [shape = 'u8[512]{0}', space=vmem, size = 0x400, scoped, tag = 'input window, operand 22, single buffered']
    #allocation27 [shape = 's32[1]{0}', space=sflag, size = 0x4, scoped, tag = 'scoped memory for segmental_transformer_encoder.3']
    #allocation28 [shape = 'u8[8192]{0}', space=vmem, size = 0x2000, scoped, tag = 'output window, operand 1, single buffered']
    %30 = vsyncpa [#allocation3], 0
    %31 = vsyncpa [#allocation6], 0
    %32 = vsyncpa [#allocation9], 0
    %33 = vsyncpa [#allocation12], 0
    %34 = vsyncpa [#allocation15], 0
    %35 = vsyncpa [#allocation18], 0
    %36 = vsyncpa [#allocation21], 0
    %37 = vsyncpa [#allocation24], 0
    %38 = vsyncpa [#allocation27], 0
    %39 = vsyncpa [#allocation4], 0
    // Predicated region
    $region2: #{segmental_transformer_encoder.3} parent=1 // pred_check
      _
    $region3: #{segmental_transformer_encoder.3} parent=1 // pred_check_branch
      %41 = sbr.rel (0) target = $region5
    $region4: #{segmental_transformer_encoder.3} parent=1 // pred_region
      _
    $region5: #{segmental_transformer_encoder.3} parent=1 // pred_fallthru
      _
    // Predicated region
    $region6: #{segmental_transformer_encoder.3} parent=1 // pred_check
      _
    $region7: #{segmental_transformer_encoder.3} parent=1 // pred_check_branch
      %43 = sbr.rel (0) target = $region9
    $region8: #{segmental_transformer_encoder.3} parent=1 // pred_region
      _
    $region9: #{segmental_transformer_encoder.3} parent=1 // pred_fallthru
      _
    // Predicated region
    $region10: #{segmental_transformer_encoder.3} parent=1 // pred_check
      _
    $region11: #{segmental_transformer_encoder.3} parent=1 // pred_check_branch
      %45 = sbr.rel (0) target = $region13
    $region12: #{segmental_transformer_encoder.3} parent=1 // pred_region
      %47 = vsyncadd [#allocation3], 0
      %s49 = sshll.u32 %s2, 4
      %s50 = int_to_ptr.hbm [resolvable:$true] %s49
      %s51 = sshll.u32 [#allocation2], 4
      %s52 = int_to_ptr.vmem [resolvable:$true] %s51
      %54 = dma.hbm_to_vmem [thread:$0]  %s50, 128, %s52, [#allocation3]
    $region13: #{segmental_transformer_encoder.3} parent=1 // pred_fallthru
      _
    // Predicated region
    $region14: #{segmental_transformer_encoder.3} parent=1 // pred_check
      _
    $region15: #{segmental_transformer_encoder.3} parent=1 // pred_check_branch
      %56 = sbr.rel (0) target = $region17
    $region16: #{segmental_transformer_encoder.3} parent=1 // pred_region
      _
    $region17: #{segmental_transformer_encoder.3} parent=1 // pred_fallthru
      _
    // Predicated region
    $region18: #{segmental_transformer_encoder.3} parent=1 // pred_check
      _
    $region19: #{segmental_transformer_encoder.3} parent=1 // pred_check_branch
      %58 = sbr.rel (0) target = $region21
    $region20: #{segmental_transformer_encoder.3} parent=1 // pred_region
      %60 = vsyncadd [#allocation6], 0
      %s62 = sshll.u32 %s4, 4
      %s63 = int_to_ptr.hbm [resolvable:$true] %s62
      %s64 = sshll.u32 [#allocation5], 4
      %s65 = int_to_ptr.vmem [resolvable:$true] %s64
      %67 = dma.hbm_to_vmem [thread:$0]  %s63, 16, %s65, [#allocation6]
    $region21: #{segmental_transformer_encoder.3} parent=1 // pred_fallthru
      _
    // Predicated region
    $region22: #{segmental_transformer_encoder.3} parent=1 // pred_check
      _
    $region23: #{segmental_transformer_encoder.3} parent=1 // pred_check_branch
      %69 = sbr.rel (0) target = $region25
    $region24: #{segmental_transformer_encoder.3} parent=1 // pred_region
      _
    $region25: #{segmental_transformer_encoder.3} parent=1 // pred_fallthru
      _
    // Predicated region
    $region26: #{segmental_transformer_encoder.3} parent=1 // pred_check
      _
    $region27: #{segmental_transformer_encoder.3} parent=1 // pred_check_branch
      %71 = sbr.rel (0) target = $region29
    $region28: #{segmental_transformer_encoder.3} parent=1 // pred_region
      %73 = vsyncadd [#allocation6], 0
      %s75 = sshll.u32 %s6, 4
      %s76 = int_to_ptr.hbm [resolvable:$true] %s75
      %s77 = sshll.u32 [#allocation7], 4
      %s78 = int_to_ptr.vmem [resolvable:$true] %s77
      %80 = dma.hbm_to_vmem [thread:$0]  %s76, 16, %s78, [#allocation6]
    $region29: #{segmental_transformer_encoder.3} parent=1 // pred_fallthru
      _
    // Predicated region
    $region30: #{segmental_transformer_encoder.3} parent=1 // pred_check
      _
    $region31: #{segmental_transformer_encoder.3} parent=1 // pred_check_branch
      %82 = sbr.rel (0) target = $region33
    $region32: #{segmental_transformer_encoder.3} parent=1 // pred_region
      _
    $region33: #{segmental_transformer_encoder.3} parent=1 // pred_fallthru
      _
    // Predicated region
    $region34: #{segmental_transformer_encoder.3} parent=1 // pred_check
      _
    $region35: #{segmental_transformer_encoder.3} parent=1 // pred_check_branch
      %84 = sbr.rel (0) target = $region37
    $region36: #{segmental_transformer_encoder.3} parent=1 // pred_region
      %86 = vsyncadd [#allocation9], 0
      %s88 = sshll.u32 %s8, 4
      %s89 = int_to_ptr.hbm [resolvable:$true] %s88
      %s90 = sshll.u32 [#allocation8], 4
      %s91 = int_to_ptr.vmem [resolvable:$true] %s90
      %93 = dma.hbm_to_vmem [thread:$0]  %s89, 16, %s91, [#allocation9]
    $region37: #{segmental_transformer_encoder.3} parent=1 // pred_fallthru
      _
    // Predicated region
    $region38: #{segmental_transformer_encoder.3} parent=1 // pred_check
      _
    $region39: #{segmental_transformer_encoder.3} parent=1 // pred_check_branch
      %95 = sbr.rel (0) target = $region41
    $region40: #{segmental_transformer_encoder.3} parent=1 // pred_region
      _
    $region41: #{segmental_transformer_encoder.3} parent=1 // pred_fallthru
      _
    // Predicated region
    $region42: #{segmental_transformer_encoder.3} parent=1 // pred_check
      _
    $region43: #{segmental_transformer_encoder.3} parent=1 // pred_check_branch
      %97 = sbr.rel (0) target = $region45
    $region44: #{segmental_transformer_encoder.3} parent=1 // pred_region
      %99 = vsyncadd [#allocation9], 0
      %s101 = sshll.u32 %s10, 4
      %s102 = int_to_ptr.hbm [resolvable:$true] %s101
      %s103 = sshll.u32 [#allocation10], 4
      %s104 = int_to_ptr.vmem [resolvable:$true] %s103
      %106 = dma.hbm_to_vmem [thread:$0]  %s102, 16, %s104, [#allocation9]
    $region45: #{segmental_transformer_encoder.3} parent=1 // pred_fallthru
      _
    // Predicated region
    $region46: #{segmental_transformer_encoder.3} parent=1 // pred_check
      _
    $region47: #{segmental_transformer_encoder.3} parent=1 // pred_check_branch
      %108 = sbr.rel (0) target = $region49
    $region48: #{segmental_transformer_encoder.3} parent=1 // pred_region
      %110 = vsyncadd [#allocation12], 0
      %s111 = sshll.u32 %s11, 4
      %s112 = int_to_ptr.hbm [resolvable:$true] %s111
      %s113 = sshll.u32 [#allocation11], 4
      %s114 = int_to_ptr.vmem [resolvable:$true] %s113
      %119 = dma.hbm_to_vmem [thread:$0]  %s112, 256, %s114, [#allocation12], 64, 64, 4
    $region49: #{segmental_transformer_encoder.3} parent=1 // pred_fallthru
      _
    // Predicated region
    $region50: #{segmental_transformer_encoder.3} parent=1 // pred_check
      _
    $region51: #{segmental_transformer_encoder.3} parent=1 // pred_check_branch
      %121 = sbr.rel (0) target = $region53
    $region52: #{segmental_transformer_encoder.3} parent=1 // pred_region
      %123 = vsyncadd [#allocation12], 0
      %s125 = sshll.u32 %s12, 4
      %s126 = int_to_ptr.hbm [resolvable:$true] %s125
      %s127 = sshll.u32 [#allocation13], 4
      %s128 = int_to_ptr.vmem [resolvable:$true] %s127
      %130 = dma.hbm_to_vmem [thread:$0]  %s126, 16, %s128, [#allocation12]
    $region53: #{segmental_transformer_encoder.3} parent=1 // pred_fallthru
      _
    // Predicated region
    $region54: #{segmental_transformer_encoder.3} parent=1 // pred_check
      _
    $region55: #{segmental_transformer_encoder.3} parent=1 // pred_check_branch
      %132 = sbr.rel (0) target = $region57
    $region56: #{segmental_transformer_encoder.3} parent=1 // pred_region
      %134 = vsyncadd [#allocation15], 0
      %s136 = sshll.u32 %s13, 4
      %s137 = int_to_ptr.hbm [resolvable:$true] %s136
      %s138 = sshll.u32 [#allocation14], 4
      %s139 = int_to_ptr.vmem [resolvable:$true] %s138
      %141 = dma.hbm_to_vmem [thread:$0]  %s137, 16, %s139, [#allocation15]
    $region57: #{segmental_transformer_encoder.3} parent=1 // pred_fallthru
      _
    // Predicated region
    $region58: #{segmental_transformer_encoder.3} parent=1 // pred_check
      _
    $region59: #{segmental_transformer_encoder.3} parent=1 // pred_check_branch
      %143 = sbr.rel (0) target = $region61
    $region60: #{segmental_transformer_encoder.3} parent=1 // pred_region
      %145 = vsyncadd [#allocation15], 0
      %s147 = sshll.u32 %s14, 4
      %s148 = int_to_ptr.hbm [resolvable:$true] %s147
      %s149 = sshll.u32 [#allocation16], 4
      %s150 = int_to_ptr.vmem [resolvable:$true] %s149
      %152 = dma.hbm_to_vmem [thread:$0]  %s148, 16, %s150, [#allocation15]
    $region61: #{segmental_transformer_encoder.3} parent=1 // pred_fallthru
      _
    // Predicated region
    $region62: #{segmental_transformer_encoder.3} parent=1 // pred_check
      _
    $region63: #{segmental_transformer_encoder.3} parent=1 // pred_check_branch
      %154 = sbr.rel (0) target = $region65
    $region64: #{segmental_transformer_encoder.3} parent=1 // pred_region
      %156 = vsyncadd [#allocation18], 0
      %s157 = sshll.u32 %s15, 4
      %s158 = int_to_ptr.hbm [resolvable:$true] %s157
      %s159 = sshll.u32 [#allocation17], 4
      %s160 = int_to_ptr.vmem [resolvable:$true] %s159
      %165 = dma.hbm_to_vmem [thread:$0]  %s158, 256, %s160, [#allocation18], 64, 64, 4
    $region65: #{segmental_transformer_encoder.3} parent=1 // pred_fallthru
      _
    // Predicated region
    $region66: #{segmental_transformer_encoder.3} parent=1 // pred_check
      _
    $region67: #{segmental_transformer_encoder.3} parent=1 // pred_check_branch
      %167 = sbr.rel (0) target = $region69
    $region68: #{segmental_transformer_encoder.3} parent=1 // pred_region
      %169 = vsyncadd [#allocation18], 0
      %s171 = sshll.u32 %s16, 4
      %s172 = int_to_ptr.hbm [resolvable:$true] %s171
      %s173 = sshll.u32 [#allocation19], 4
      %s174 = int_to_ptr.vmem [resolvable:$true] %s173
      %176 = dma.hbm_to_vmem [thread:$0]  %s172, 16, %s174, [#allocation18]
    $region69: #{segmental_transformer_encoder.3} parent=1 // pred_fallthru
      _
    // Predicated region
    $region70: #{segmental_transformer_encoder.3} parent=1 // pred_check
      _
    $region71: #{segmental_transformer_encoder.3} parent=1 // pred_check_branch
      %178 = sbr.rel (0) target = $region73
    $region72: #{segmental_transformer_encoder.3} parent=1 // pred_region
      _
    $region73: #{segmental_transformer_encoder.3} parent=1 // pred_fallthru
      _
    // Predicated region
    $region74: #{segmental_transformer_encoder.3} parent=1 // pred_check
      _
    $region75: #{segmental_transformer_encoder.3} parent=1 // pred_check_branch
      %180 = sbr.rel (0) target = $region77
    $region76: #{segmental_transformer_encoder.3} parent=1 // pred_region
      %182 = vsyncadd [#allocation21], 0
      %s184 = sshll.u32 %s18, 4
      %s185 = int_to_ptr.hbm [resolvable:$true] %s184
      %s186 = sshll.u32 [#allocation20], 4
      %s187 = int_to_ptr.vmem [resolvable:$true] %s186
      %189 = dma.hbm_to_vmem [thread:$0]  %s185, 16, %s187, [#allocation21]
    $region77: #{segmental_transformer_encoder.3} parent=1 // pred_fallthru
      _
    // Predicated region
    $region78: #{segmental_transformer_encoder.3} parent=1 // pred_check
      _
    $region79: #{segmental_transformer_encoder.3} parent=1 // pred_check_branch
      %191 = sbr.rel (0) target = $region81
    $region80: #{segmental_transformer_encoder.3} parent=1 // pred_region
      %193 = vsyncadd [#allocation21], 0
      %s195 = sshll.u32 %s19, 4
      %s196 = int_to_ptr.hbm [resolvable:$true] %s195
      %s197 = sshll.u32 [#allocation22], 4
      %s198 = int_to_ptr.vmem [resolvable:$true] %s197
      %200 = dma.hbm_to_vmem [thread:$0]  %s196, 16, %s198, [#allocation21]
    $region81: #{segmental_transformer_encoder.3} parent=1 // pred_fallthru
      _
    // Predicated region
    $region82: #{segmental_transformer_encoder.3} parent=1 // pred_check
      _
    $region83: #{segmental_transformer_encoder.3} parent=1 // pred_check_branch
      %202 = sbr.rel (0) target = $region85
    $region84: #{segmental_transformer_encoder.3} parent=1 // pred_region
      %204 = vsyncadd [#allocation24], 0
      %s206 = sshll.u32 %s20, 4
      %s207 = int_to_ptr.hbm [resolvable:$true] %s206
      %s208 = sshll.u32 [#allocation23], 4
      %s209 = int_to_ptr.vmem [resolvable:$true] %s208
      %211 = dma.hbm_to_vmem [thread:$0]  %s207, 16, %s209, [#allocation24]
    $region85: #{segmental_transformer_encoder.3} parent=1 // pred_fallthru
      _
    // Predicated region
    $region86: #{segmental_transformer_encoder.3} parent=1 // pred_check
      _
    $region87: #{segmental_transformer_encoder.3} parent=1 // pred_check_branch
      %213 = sbr.rel (0) target = $region89
    $region88: #{segmental_transformer_encoder.3} parent=1 // pred_region
      %215 = vsyncadd [#allocation24], 0
      %s217 = sshll.u32 %s21, 4
      %s218 = int_to_ptr.hbm [resolvable:$true] %s217
      %s219 = sshll.u32 [#allocation25], 4
      %s220 = int_to_ptr.vmem [resolvable:$true] %s219
      %222 = dma.hbm_to_vmem [thread:$0]  %s218, 16, %s220, [#allocation24]
    $region89: #{segmental_transformer_encoder.3} parent=1 // pred_fallthru
      _
    // Predicated region
    $region90: #{segmental_transformer_encoder.3} parent=1 // pred_check
      _
    $region91: #{segmental_transformer_encoder.3} parent=1 // pred_check_branch
      %224 = sbr.rel (0) target = $region93
    $region92: #{segmental_transformer_encoder.3} parent=1 // pred_region
      %226 = vsyncadd [#allocation27], 0
      %s228 = sshll.u32 %s22, 4
      %s229 = int_to_ptr.hbm [resolvable:$true] %s228
      %s230 = sshll.u32 [#allocation26], 4
      %s231 = int_to_ptr.vmem [resolvable:$true] %s230
      %233 = dma.hbm_to_vmem [thread:$0]  %s229, 16, %s231, [#allocation27]
    $region93: #{segmental_transformer_encoder.3} parent=1 // pred_fallthru
      _
    // Predicated region
    $region94: #{segmental_transformer_encoder.3} parent=1 // pred_check
      _
    $region95: #{segmental_transformer_encoder.3} parent=1 // pred_check_branch
      %235 = sbr.rel (0) target = $region97
    $region96: #{segmental_transformer_encoder.3} parent=1 // pred_region
      %237 = dma.done [#allocation3], 128
    $region97: #{segmental_transformer_encoder.3} parent=1 // pred_fallthru
      _
    // Predicated region
    $region98: #{segmental_transformer_encoder.3} parent=1 // pred_check
      _
    $region99: #{segmental_transformer_encoder.3} parent=1 // pred_check_branch
      %239 = sbr.rel (0) target = $region101
    $region100: #{segmental_transformer_encoder.3} parent=1 // pred_region
      %241 = dma.done [#allocation6], 16
    $region101: #{segmental_transformer_encoder.3} parent=1 // pred_fallthru
      _
    // Predicated region
    $region102: #{segmental_transformer_encoder.3} parent=1 // pred_check
      _
    $region103: #{segmental_transformer_encoder.3} parent=1 // pred_check_branch
      %243 = sbr.rel (0) target = $region105
    $region104: #{segmental_transformer_encoder.3} parent=1 // pred_region
      %245 = dma.done [#allocation6], 16
    $region105: #{segmental_transformer_encoder.3} parent=1 // pred_fallthru
      _
    // Predicated region
    $region106: #{segmental_transformer_encoder.3} parent=1 // pred_check
      _
    $region107: #{segmental_transformer_encoder.3} parent=1 // pred_check_branch
      %247 = sbr.rel (0) target = $region109
    $region108: #{segmental_transformer_encoder.3} parent=1 // pred_region
      %249 = dma.done [#allocation9], 16
    $region109: #{segmental_transformer_encoder.3} parent=1 // pred_fallthru
      _
    // Predicated region
    $region110: #{segmental_transformer_encoder.3} parent=1 // pred_check
      _
    $region111: #{segmental_transformer_encoder.3} parent=1 // pred_check_branch
      %251 = sbr.rel (0) target = $region113
    $region112: #{segmental_transformer_encoder.3} parent=1 // pred_region
      %253 = dma.done [#allocation9], 16
    $region113: #{segmental_transformer_encoder.3} parent=1 // pred_fallthru
      _
    // Predicated region
    $region114: #{segmental_transformer_encoder.3} parent=1 // pred_check
      _
    $region115: #{segmental_transformer_encoder.3} parent=1 // pred_check_branch
      %255 = sbr.rel (0) target = $region117
    $region116: #{segmental_transformer_encoder.3} parent=1 // pred_region
      %257 = dma.done [#allocation12], 256
    $region117: #{segmental_transformer_encoder.3} parent=1 // pred_fallthru
      _
    // Predicated region
    $region118: #{segmental_transformer_encoder.3} parent=1 // pred_check
      _
    $region119: #{segmental_transformer_encoder.3} parent=1 // pred_check_branch
      %259 = sbr.rel (0) target = $region121
    $region120: #{segmental_transformer_encoder.3} parent=1 // pred_region
      %261 = dma.done [#allocation12], 16
    $region121: #{segmental_transformer_encoder.3} parent=1 // pred_fallthru
      _
    // Predicated region
    $region122: #{segmental_transformer_encoder.3} parent=1 // pred_check
      _
    $region123: #{segmental_transformer_encoder.3} parent=1 // pred_check_branch
      %263 = sbr.rel (0) target = $region125
    $region124: #{segmental_transformer_encoder.3} parent=1 // pred_region
      %265 = dma.done [#allocation15], 16
    $region125: #{segmental_transformer_encoder.3} parent=1 // pred_fallthru
      _
    // Predicated region
    $region126: #{segmental_transformer_encoder.3} parent=1 // pred_check
      _
    $region127: #{segmental_transformer_encoder.3} parent=1 // pred_check_branch
      %267 = sbr.rel (0) target = $region129
    $region128: #{segmental_transformer_encoder.3} parent=1 // pred_region
      %269 = dma.done [#allocation15], 16
    $region129: #{segmental_transformer_encoder.3} parent=1 // pred_fallthru
      _
    // Predicated region
    $region130: #{segmental_transformer_encoder.3} parent=1 // pred_check
      _
    $region131: #{segmental_transformer_encoder.3} parent=1 // pred_check_branch
      %271 = sbr.rel (0) target = $region133
    $region132: #{segmental_transformer_encoder.3} parent=1 // pred_region
      %273 = dma.done [#allocation18], 256
    $region133: #{segmental_transformer_encoder.3} parent=1 // pred_fallthru
      _
    // Predicated region
    $region134: #{segmental_transformer_encoder.3} parent=1 // pred_check
      _
    $region135: #{segmental_transformer_encoder.3} parent=1 // pred_check_branch
      %275 = sbr.rel (0) target = $region137
    $region136: #{segmental_transformer_encoder.3} parent=1 // pred_region
      %277 = dma.done [#allocation18], 16
    $region137: #{segmental_transformer_encoder.3} parent=1 // pred_fallthru
      _
    // Predicated region
    $region138: #{segmental_transformer_encoder.3} parent=1 // pred_check
      _
    $region139: #{segmental_transformer_encoder.3} parent=1 // pred_check_branch
      %279 = sbr.rel (0) target = $region141
    $region140: #{segmental_transformer_encoder.3} parent=1 // pred_region
      %281 = dma.done [#allocation21], 16
    $region141: #{segmental_transformer_encoder.3} parent=1 // pred_fallthru
      _
    // Predicated region
    $region142: #{segmental_transformer_encoder.3} parent=1 // pred_check
      _
    $region143: #{segmental_transformer_encoder.3} parent=1 // pred_check_branch
      %283 = sbr.rel (0) target = $region145
    $region144: #{segmental_transformer_encoder.3} parent=1 // pred_region
      %285 = dma.done [#allocation21], 16
    $region145: #{segmental_transformer_encoder.3} parent=1 // pred_fallthru
      _
    // Predicated region
    $region146: #{segmental_transformer_encoder.3} parent=1 // pred_check
      _
    $region147: #{segmental_transformer_encoder.3} parent=1 // pred_check_branch
      %287 = sbr.rel (0) target = $region149
    $region148: #{segmental_transformer_encoder.3} parent=1 // pred_region
      %289 = dma.done [#allocation24], 16
    $region149: #{segmental_transformer_encoder.3} parent=1 // pred_fallthru
      _
    // Predicated region
    $region150: #{segmental_transformer_encoder.3} parent=1 // pred_check
      _
    $region151: #{segmental_transformer_encoder.3} parent=1 // pred_check_branch
      %291 = sbr.rel (0) target = $region153
    $region152: #{segmental_transformer_encoder.3} parent=1 // pred_region
      %293 = dma.done [#allocation24], 16
    $region153: #{segmental_transformer_encoder.3} parent=1 // pred_fallthru
      _
    // Predicated region
    $region154: #{segmental_transformer_encoder.3} parent=1 // pred_check
      _
    $region155: #{segmental_transformer_encoder.3} parent=1 // pred_check_branch
      %295 = sbr.rel (0) target = $region157
    $region156: #{segmental_transformer_encoder.3} parent=1 // pred_region
      %297 = dma.done [#allocation27], 16
    $region157: #{segmental_transformer_encoder.3} parent=1 // pred_fallthru
      _
    %v299 = vld [vmem:[%s0] sm:$0xff]
    %v300 = vld [vmem:[%s0 + $0x8] sm:$0xff]
    %v301 = vld [vmem:[%s1] sm:$0xff]
    %v302 = vld [vmem:[%s1 + $0x8] sm:$0xff]
    %v303 = vpack.c.bf16 %v302, %v301
    %v304 = vld [vmem:[%s3] sm:$0xf]
    %v305 = vld [vmem:[%s3 + $0x4] sm:$0xf]
    %v306 = vld [vmem:[%s3 + $0x8] sm:$0xf]
    %v307 = vld [vmem:[%s3 + $0xc] sm:$0xf]
    %v308 = vld [vmem:[#allocation5] sm:$0x1]
    %v310 = vperm.slane %v308, 0
    %v316 = vunpack.c.l.b16 %v304
    %v317 = vunpack.c.l.b16 %v305
    %v318 = vunpack.c.l.b16 %v306
    %v319 = vunpack.c.l.b16 %v307
    %v320 = vpack.c.b16 %v317, %v316
    %v321 = vpack.c.b16 %v319, %v318
    %vm324 = vcmask 261120
    %v326 = vsel %vm324, %v303, 0
    %328 = vmatpush.bf16.msra.mxu0 0
    %329 = vmatpush.bf16.msra.mxu0 0
    %330 = vmatpush.bf16.msra.mxu0 0
    %331 = vmatpush.bf16.msra.mxu0 0
    %332 = vmatpush.bf16.msra.mxu0 0
    %333 = vmatpush.bf16.msra.mxu0 0
    %334 = vmatpush.bf16.msra.mxu0 %v321
    %335 = vmatpush.bf16.msra.mxu0 %v320
    %336 = vmatmul.bf16.gmra.mxu0 %v326
    %v337 = vpop.f32.mrf.mxu0
    %v338 = vadd.f32 %v310, %v337
    %v339 = vpop.f32.mrf.mxu0
    %v340 = vadd.f32 %v310, %v339
    %341 = vdwg.mxu0
    %v342 = vtanh.pop %v338
    %v343 = vtanh.pop %v340
    %344 = vst.msk [vmem:[#allocation28] sm:$0xff] %vm324, %v342
    %345 = vst.msk [vmem:[#allocation28 + $0x8] sm:$0xff] %vm324, %v343
    %v346 = vpack.c.bf16 %v300, %v299
    %v347 = vld [vmem:[%s5] sm:$0xf]
    %v348 = vld [vmem:[%s5 + $0x4] sm:$0xf]
    %v349 = vld [vmem:[%s5 + $0x8] sm:$0xf]
    %v350 = vld [vmem:[%s5 + $0xc] sm:$0xf]
    %v351 = vld [vmem:[#allocation7] sm:$0x1]
    %v353 = vperm.slane %v351, 0
    %v359 = vunpack.c.l.b16 %v347
    %v360 = vunpack.c.l.b16 %v348
    %v361 = vunpack.c.l.b16 %v349
    %v362 = vunpack.c.l.b16 %v350
    %v363 = vpack.c.b16 %v360, %v359
    %v364 = vpack.c.b16 %v362, %v361
    %v368 = vsel %vm324, %v346, 0
    %370 = vmatpush.bf16.msra.mxu0 0
    %371 = vmatpush.bf16.msra.mxu0 0
    %372 = vmatpush.bf16.msra.mxu0 0
    %373 = vmatpush.bf16.msra.mxu0 0
    %374 = vmatpush.bf16.msra.mxu0 0
    %375 = vmatpush.bf16.msra.mxu0 0
    %376 = vmatpush.bf16.msra.mxu0 %v364
    %377 = vmatpush.bf16.msra.mxu0 %v363
    %378 = vmatmul.bf16.gmra.mxu0 %v368
    %v379 = vpop.f32.mrf.mxu0
    %v380 = vadd.f32 %v353, %v379
    %v381 = vpop.f32.mrf.mxu0
    %v382 = vadd.f32 %v353, %v381
    %383 = vdwg.mxu0
    %v384 = vpack.c.bf16 %v343, %v342
    %v385 = vld [vmem:[%s7] sm:$0xf]
    %v386 = vld [vmem:[%s7 + $0x4] sm:$0xf]
    %v387 = vld [vmem:[%s7 + $0x8] sm:$0xf]
    %v388 = vld [vmem:[%s7 + $0xc] sm:$0xf]
    %v389 = vld [vmem:[#allocation8] sm:$0x1]
    %v391 = vperm.slane %v389, 0
    %v397 = vunpack.c.l.b16 %v385
    %v398 = vunpack.c.l.b16 %v386
    %v399 = vunpack.c.l.b16 %v387
    %v400 = vunpack.c.l.b16 %v388
    %v401 = vpack.c.b16 %v398, %v397
    %v402 = vpack.c.b16 %v400, %v399
    %v406 = vsel %vm324, %v384, 0
    %408 = vmatpush.bf16.msra.mxu0 0
    %409 = vmatpush.bf16.msra.mxu0 0
    %410 = vmatpush.bf16.msra.mxu0 0
    %411 = vmatpush.bf16.msra.mxu0 0
    %412 = vmatpush.bf16.msra.mxu0 0
    %413 = vmatpush.bf16.msra.mxu0 0
    %414 = vmatpush.bf16.msra.mxu0 %v402
    %415 = vmatpush.bf16.msra.mxu0 %v401
    %416 = vmatmul.bf16.gmra.mxu0 %v406
    %v417 = vpop.f32.mrf.mxu0
    %v418 = vadd.f32 %v391, %v417
    %v419 = vpop.f32.mrf.mxu0
    %v420 = vadd.f32 %v391, %v419
    %421 = vdwg.mxu0
    %v422 = vld [vmem:[%s9] sm:$0xf]
    %v423 = vld [vmem:[%s9 + $0x4] sm:$0xf]
    %v424 = vld [vmem:[%s9 + $0x8] sm:$0xf]
    %v425 = vld [vmem:[%s9 + $0xc] sm:$0xf]
    %v426 = vld [vmem:[#allocation10] sm:$0x1]
    %v428 = vperm.slane %v426, 0
    %v434 = vunpack.c.l.b16 %v422
    %v435 = vunpack.c.l.b16 %v423
    %v436 = vunpack.c.l.b16 %v424
    %v437 = vunpack.c.l.b16 %v425
    %v438 = vpack.c.b16 %v435, %v434
    %v439 = vpack.c.b16 %v437, %v436
    %442 = vmatpush.bf16.msra.mxu0 0
    %443 = vmatpush.bf16.msra.mxu0 0
    %444 = vmatpush.bf16.msra.mxu0 0
    %445 = vmatpush.bf16.msra.mxu0 0
    %446 = vmatpush.bf16.msra.mxu0 0
    %447 = vmatpush.bf16.msra.mxu0 0
    %448 = vmatpush.bf16.msra.mxu0 %v439
    %449 = vmatpush.bf16.msra.mxu0 %v438
    %450 = vmatmul.bf16.gmra.mxu0 %v406
    %v451 = vpop.f32.mrf.mxu0
    %v452 = vadd.f32 %v428, %v451
    %v453 = vpop.f32.mrf.mxu0
    %v454 = vadd.f32 %v428, %v453
    %455 = vdwg.mxu0
    %v456 = vld [vmem:[#allocation2] sm:$0xff]
    %459 = vrot.lane.b32.xlu0 %v380, 120
    %v460 = vpop.permute.xlu0 %459
    %461 = vrot.lane.b32.xlu0 %v382, 120
    %v462 = vpop.permute.xlu0 %461
    %465 = vrot.lane.b32.xlu0 %v380, 112
    %v466 = vpop.permute.xlu0 %465
    %467 = vrot.lane.b32.xlu0 %v382, 112
    %v468 = vpop.permute.xlu0 %467
    %471 = vrot.lane.b32.xlu0 %v380, 104
    %v472 = vpop.permute.xlu0 %471
    %473 = vrot.lane.b32.xlu0 %v382, 104
    %v474 = vpop.permute.xlu0 %473
    %v477 = vpack.c.bf16 %v380, %v380
    %v478 = vpack.c.bf16 %v382, %v382
    %v479 = vpack.c.bf16 %v460, %v460
    %v480 = vpack.c.bf16 %v462, %v462
    %v481 = vpack.c.bf16 %v466, %v466
    %v482 = vpack.c.bf16 %v468, %v468
    %v483 = vpack.c.bf16 %v472, %v472
    %v484 = vpack.c.bf16 %v474, %v474
    %487 = vrot.lane.b32.xlu0 %v418, 120
    %v488 = vpop.permute.xlu0 %487
    %489 = vrot.lane.b32.xlu0 %v420, 120
    %v490 = vpop.permute.xlu0 %489
    %493 = vrot.lane.b32.xlu0 %v418, 112
    %v494 = vpop.permute.xlu0 %493
    %495 = vrot.lane.b32.xlu0 %v420, 112
    %v496 = vpop.permute.xlu0 %495
    %499 = vrot.lane.b32.xlu0 %v418, 104
    %v500 = vpop.permute.xlu0 %499
    %501 = vrot.lane.b32.xlu0 %v420, 104
    %v502 = vpop.permute.xlu0 %501
    %v505 = vpack.c.bf16 %v418, %v418
    %v506 = vpack.c.bf16 %v420, %v420
    %v507 = vpack.c.bf16 %v488, %v488
    %v508 = vpack.c.bf16 %v490, %v490
    %v509 = vpack.c.bf16 %v494, %v494
    %v510 = vpack.c.bf16 %v496, %v496
    %v511 = vpack.c.bf16 %v500, %v500
    %v512 = vpack.c.bf16 %v502, %v502
    %515 = vrot.lane.b32.xlu0 %v452, 120
    %v516 = vpop.permute.xlu0 %515
    %517 = vrot.lane.b32.xlu0 %v454, 120
    %v518 = vpop.permute.xlu0 %517
    %521 = vrot.lane.b32.xlu0 %v452, 112
    %v522 = vpop.permute.xlu0 %521
    %523 = vrot.lane.b32.xlu0 %v454, 112
    %v524 = vpop.permute.xlu0 %523
    %527 = vrot.lane.b32.xlu0 %v452, 104
    %v528 = vpop.permute.xlu0 %527
    %529 = vrot.lane.b32.xlu0 %v454, 104
    %v530 = vpop.permute.xlu0 %529
    %v533 = vpack.c.bf16 %v452, %v452
    %v534 = vpack.c.bf16 %v454, %v454
    %v535 = vpack.c.bf16 %v516, %v516
    %v536 = vpack.c.bf16 %v518, %v518
    %v537 = vpack.c.bf16 %v522, %v522
    %v538 = vpack.c.bf16 %v524, %v524
    %v539 = vpack.c.bf16 %v528, %v528
    %v540 = vpack.c.bf16 %v530, %v530
    %vm541 = vcmask 64512
    %v543 = vsel %vm541, %v477, 0
    %v546 = vsel %vm541, %v505, 0
    %548 = vmatpush.bf16.xpose.msra.mxu0 0
    %549 = vmatpush.bf16.xpose.msra.mxu0 0
    %550 = vmatpush.bf16.xpose.msra.mxu0 0
    %551 = vmatpush.bf16.xpose.msra.mxu0 0
    %552 = vmatpush.bf16.xpose.msra.mxu0 0
    %553 = vmatpush.bf16.xpose.msra.mxu0 0
    %554 = vmatpush.bf16.xpose.msra.mxu0 0
    %555 = vmatpush.bf16.xpose.msra.mxu0 %v546
    %556 = vmatmul.bf16.gmra.mxu0 %v543
    %v557 = vpop.f32.mrf.mxu0
    %v558 = vadd.f32 %v456, %v557
    %v559 = vpop.f32.mrf.mxu0
    %560 = vdwg.mxu0
    %v562 = vsel %vm541, %v478, 0
    %v565 = vsel %vm541, %v506, 0
    %567 = vmatpush.bf16.xpose.msra.mxu0 0
    %568 = vmatpush.bf16.xpose.msra.mxu0 0
    %569 = vmatpush.bf16.xpose.msra.mxu0 0
    %570 = vmatpush.bf16.xpose.msra.mxu0 0
    %571 = vmatpush.bf16.xpose.msra.mxu0 0
    %572 = vmatpush.bf16.xpose.msra.mxu0 0
    %573 = vmatpush.bf16.xpose.msra.mxu0 0
    %574 = vmatpush.bf16.xpose.msra.mxu0 %v565
    %575 = vmatmul.bf16.gmra.mxu0 %v562
    %v576 = vpop.f32.mrf.mxu0
    %v577 = vadd.f32 %v456, %v576
    %v578 = vpop.f32.mrf.mxu0
    %579 = vdwg.mxu0
    %v581 = vsel %vm541, %v479, 0
    %v584 = vsel %vm541, %v507, 0
    %586 = vmatpush.bf16.xpose.msra.mxu0 0
    %587 = vmatpush.bf16.xpose.msra.mxu0 0
    %588 = vmatpush.bf16.xpose.msra.mxu0 0
    %589 = vmatpush.bf16.xpose.msra.mxu0 0
    %590 = vmatpush.bf16.xpose.msra.mxu0 0
    %591 = vmatpush.bf16.xpose.msra.mxu0 0
    %592 = vmatpush.bf16.xpose.msra.mxu0 0
    %593 = vmatpush.bf16.xpose.msra.mxu0 %v584
    %594 = vmatmul.bf16.gmra.mxu0 %v581
    %v595 = vpop.f32.mrf.mxu0
    %v596 = vadd.f32 %v456, %v595
    %v597 = vpop.f32.mrf.mxu0
    %598 = vdwg.mxu0
    %v600 = vsel %vm541, %v480, 0
    %v603 = vsel %vm541, %v508, 0
    %605 = vmatpush.bf16.xpose.msra.mxu0 0
    %606 = vmatpush.bf16.xpose.msra.mxu0 0
    %607 = vmatpush.bf16.xpose.msra.mxu0 0
    %608 = vmatpush.bf16.xpose.msra.mxu0 0
    %609 = vmatpush.bf16.xpose.msra.mxu0 0
    %610 = vmatpush.bf16.xpose.msra.mxu0 0
    %611 = vmatpush.bf16.xpose.msra.mxu0 0
    %612 = vmatpush.bf16.xpose.msra.mxu0 %v603
    %613 = vmatmul.bf16.gmra.mxu0 %v600
    %v614 = vpop.f32.mrf.mxu0
    %v615 = vadd.f32 %v456, %v614
    %v616 = vpop.f32.mrf.mxu0
    %617 = vdwg.mxu0
    %v619 = vsel %vm541, %v481, 0
    %v622 = vsel %vm541, %v509, 0
    %624 = vmatpush.bf16.xpose.msra.mxu0 0
    %625 = vmatpush.bf16.xpose.msra.mxu0 0
    %626 = vmatpush.bf16.xpose.msra.mxu0 0
    %627 = vmatpush.bf16.xpose.msra.mxu0 0
    %628 = vmatpush.bf16.xpose.msra.mxu0 0
    %629 = vmatpush.bf16.xpose.msra.mxu0 0
    %630 = vmatpush.bf16.xpose.msra.mxu0 0
    %631 = vmatpush.bf16.xpose.msra.mxu0 %v622
    %632 = vmatmul.bf16.gmra.mxu0 %v619
    %v633 = vpop.f32.mrf.mxu0
    %v634 = vadd.f32 %v456, %v633
    %v635 = vpop.f32.mrf.mxu0
    %636 = vdwg.mxu0
    %v638 = vsel %vm541, %v482, 0
    %v641 = vsel %vm541, %v510, 0
    %643 = vmatpush.bf16.xpose.msra.mxu0 0
    %644 = vmatpush.bf16.xpose.msra.mxu0 0
    %645 = vmatpush.bf16.xpose.msra.mxu0 0
    %646 = vmatpush.bf16.xpose.msra.mxu0 0
    %647 = vmatpush.bf16.xpose.msra.mxu0 0
    %648 = vmatpush.bf16.xpose.msra.mxu0 0
    %649 = vmatpush.bf16.xpose.msra.mxu0 0
    %650 = vmatpush.bf16.xpose.msra.mxu0 %v641
    %651 = vmatmul.bf16.gmra.mxu0 %v638
    %v652 = vpop.f32.mrf.mxu0
    %v653 = vadd.f32 %v456, %v652
    %v654 = vpop.f32.mrf.mxu0
    %655 = vdwg.mxu0
    %v657 = vsel %vm541, %v483, 0
    %v660 = vsel %vm541, %v511, 0
    %662 = vmatpush.bf16.xpose.msra.mxu0 0
    %663 = vmatpush.bf16.xpose.msra.mxu0 0
    %664 = vmatpush.bf16.xpose.msra.mxu0 0
    %665 = vmatpush.bf16.xpose.msra.mxu0 0
    %666 = vmatpush.bf16.xpose.msra.mxu0 0
    %667 = vmatpush.bf16.xpose.msra.mxu0 0
    %668 = vmatpush.bf16.xpose.msra.mxu0 0
    %669 = vmatpush.bf16.xpose.msra.mxu0 %v660
    %670 = vmatmul.bf16.gmra.mxu0 %v657
    %v671 = vpop.f32.mrf.mxu0
    %v672 = vadd.f32 %v456, %v671
    %v673 = vpop.f32.mrf.mxu0
    %674 = vdwg.mxu0
    %v676 = vsel %vm541, %v484, 0
    %v679 = vsel %vm541, %v512, 0
    %681 = vmatpush.bf16.xpose.msra.mxu0 0
    %682 = vmatpush.bf16.xpose.msra.mxu0 0
    %683 = vmatpush.bf16.xpose.msra.mxu0 0
    %684 = vmatpush.bf16.xpose.msra.mxu0 0
    %685 = vmatpush.bf16.xpose.msra.mxu0 0
    %686 = vmatpush.bf16.xpose.msra.mxu0 0
    %687 = vmatpush.bf16.xpose.msra.mxu0 0
    %688 = vmatpush.bf16.xpose.msra.mxu0 %v679
    %689 = vmatmul.bf16.gmra.mxu0 %v676
    %v690 = vpop.f32.mrf.mxu0
    %v691 = vadd.f32 %v456, %v690
    %v692 = vpop.f32.mrf.mxu0
    %693 = vdwg.mxu0
    %v694 = vsel %vm541, %v558, -inf
    %695 = vmax.xlane.f32.xlu0 %v694
    %v696 = vpop.xlane.xlu0 %695
    %v697 = vsel %vm541, %v577, -inf
    %698 = vmax.xlane.f32.xlu0 %v697
    %v699 = vpop.xlane.xlu0 %698
    %v700 = vsel %vm541, %v596, -inf
    %701 = vmax.xlane.f32.xlu0 %v700
    %v702 = vpop.xlane.xlu0 %701
    %v703 = vsel %vm541, %v615, -inf
    %704 = vmax.xlane.f32.xlu0 %v703
    %v705 = vpop.xlane.xlu0 %704
    %v706 = vsel %vm541, %v634, -inf
    %707 = vmax.xlane.f32.xlu0 %v706
    %v708 = vpop.xlane.xlu0 %707
    %v709 = vsel %vm541, %v653, -inf
    %710 = vmax.xlane.f32.xlu0 %v709
    %v711 = vpop.xlane.xlu0 %710
    %v712 = vsel %vm541, %v672, -inf
    %713 = vmax.xlane.f32.xlu0 %v712
    %v714 = vpop.xlane.xlu0 %713
    %v715 = vsel %vm541, %v691, -inf
    %716 = vmax.xlane.f32.xlu0 %v715
    %v717 = vpop.xlane.xlu0 %716
    %v718 = vsub.f32 %v558, %v696
    %v719 = vsub.f32 %v577, %v699
    %v720 = vsub.f32 %v596, %v702
    %v721 = vsub.f32 %v615, %v705
    %v722 = vsub.f32 %v634, %v708
    %v723 = vsub.f32 %v653, %v711
    %v724 = vsub.f32 %v672, %v714
    %v725 = vsub.f32 %v691, %v717
    %v726 = vmul.f32 %v718, 1.442695
    %v727 = vpow.pop %v726
    %v728 = vmul.f32 %v719, 1.442695
    %v729 = vpow.pop %v728
    %v730 = vmul.f32 %v720, 1.442695
    %v731 = vpow.pop %v730
    %v732 = vmul.f32 %v721, 1.442695
    %v733 = vpow.pop %v732
    %v734 = vmul.f32 %v722, 1.442695
    %v735 = vpow.pop %v734
    %v736 = vmul.f32 %v723, 1.442695
    %v737 = vpow.pop %v736
    %v738 = vmul.f32 %v724, 1.442695
    %v739 = vpow.pop %v738
    %v740 = vmul.f32 %v725, 1.442695
    %v741 = vpow.pop %v740
    %v742 = vsel %vm541, %v727, 0.0
    %743 = vadd.xlane.f32.xlu0 %v742
    %v744 = vpop.xlane.xlu0 %743
    %v745 = vsel %vm541, %v729, 0.0
    %746 = vadd.xlane.f32.xlu0 %v745
    %v747 = vpop.xlane.xlu0 %746
    %v748 = vsel %vm541, %v731, 0.0
    %749 = vadd.xlane.f32.xlu0 %v748
    %v750 = vpop.xlane.xlu0 %749
    %v751 = vsel %vm541, %v733, 0.0
    %752 = vadd.xlane.f32.xlu0 %v751
    %v753 = vpop.xlane.xlu0 %752
    %v754 = vsel %vm541, %v735, 0.0
    %755 = vadd.xlane.f32.xlu0 %v754
    %v756 = vpop.xlane.xlu0 %755
    %v757 = vsel %vm541, %v737, 0.0
    %758 = vadd.xlane.f32.xlu0 %v757
    %v759 = vpop.xlane.xlu0 %758
    %v760 = vsel %vm541, %v739, 0.0
    %761 = vadd.xlane.f32.xlu0 %v760
    %v762 = vpop.xlane.xlu0 %761
    %v763 = vsel %vm541, %v741, 0.0
    %764 = vadd.xlane.f32.xlu0 %v763
    %v765 = vpop.xlane.xlu0 %764
    %v766 = vrcp.pop %v744
    %v767 = vmul.f32 %v744, %v766
    %v768 = vsub.f32 1.0, %v767
    %v769 = vmul.f32 %v766, %v768
    %v770 = vadd.f32 %v766, %v769
    %vm771 = vweird.f32 %v744
    %vm772 = vweird.f32 %v766
    %vm773 = vmor %vm771, %vm772
    %v774 = vsel %vm773, %v766, %v770
    %v775 = vand.u32 2147483647, %v744
    %vm776 = vcmp.eq.f32.partialorder %v775, 8.507059e+37
    %v777 = vand.u32 %v744, 2147483648
    %v778 = vor.u32 1.1754944e-38, %v777
    %v779 = vsel %vm776, %v778, %v774
    %v780 = vmul.f32 %v727, %v779
    %v781 = vrcp.pop %v747
    %v782 = vmul.f32 %v747, %v781
    %v783 = vsub.f32 1.0, %v782
    %v784 = vmul.f32 %v781, %v783
    %v785 = vadd.f32 %v781, %v784
    %vm786 = vweird.f32 %v747
    %vm787 = vweird.f32 %v781
    %vm788 = vmor %vm786, %vm787
    %v789 = vsel %vm788, %v781, %v785
    %v790 = vand.u32 2147483647, %v747
    %vm791 = vcmp.eq.f32.partialorder %v790, 8.507059e+37
    %v792 = vand.u32 %v747, 2147483648
    %v793 = vor.u32 1.1754944e-38, %v792
    %v794 = vsel %vm791, %v793, %v789
    %v795 = vmul.f32 %v729, %v794
    %v796 = vrcp.pop %v750
    %v797 = vmul.f32 %v750, %v796
    %v798 = vsub.f32 1.0, %v797
    %v799 = vmul.f32 %v796, %v798
    %v800 = vadd.f32 %v796, %v799
    %vm801 = vweird.f32 %v750
    %vm802 = vweird.f32 %v796
    %vm803 = vmor %vm801, %vm802
    %v804 = vsel %vm803, %v796, %v800
    %v805 = vand.u32 2147483647, %v750
    %vm806 = vcmp.eq.f32.partialorder %v805, 8.507059e+37
    %v807 = vand.u32 %v750, 2147483648
    %v808 = vor.u32 1.1754944e-38, %v807
    %v809 = vsel %vm806, %v808, %v804
    %v810 = vmul.f32 %v731, %v809
    %v811 = vrcp.pop %v753
    %v812 = vmul.f32 %v753, %v811
    %v813 = vsub.f32 1.0, %v812
    %v814 = vmul.f32 %v811, %v813
    %v815 = vadd.f32 %v811, %v814
    %vm816 = vweird.f32 %v753
    %vm817 = vweird.f32 %v811
    %vm818 = vmor %vm816, %vm817
    %v819 = vsel %vm818, %v811, %v815
    %v820 = vand.u32 2147483647, %v753
    %vm821 = vcmp.eq.f32.partialorder %v820, 8.507059e+37
    %v822 = vand.u32 %v753, 2147483648
    %v823 = vor.u32 1.1754944e-38, %v822
    %v824 = vsel %vm821, %v823, %v819
    %v825 = vmul.f32 %v733, %v824
    %v826 = vrcp.pop %v756
    %v827 = vmul.f32 %v756, %v826
    %v828 = vsub.f32 1.0, %v827
    %v829 = vmul.f32 %v826, %v828
    %v830 = vadd.f32 %v826, %v829
    %vm831 = vweird.f32 %v756
    %vm832 = vweird.f32 %v826
    %vm833 = vmor %vm831, %vm832
    %v834 = vsel %vm833, %v826, %v830
    %v835 = vand.u32 2147483647, %v756
    %vm836 = vcmp.eq.f32.partialorder %v835, 8.507059e+37
    %v837 = vand.u32 %v756, 2147483648
    %v838 = vor.u32 1.1754944e-38, %v837
    %v839 = vsel %vm836, %v838, %v834
    %v840 = vmul.f32 %v735, %v839
    %v841 = vrcp.pop %v759
    %v842 = vmul.f32 %v759, %v841
    %v843 = vsub.f32 1.0, %v842
    %v844 = vmul.f32 %v841, %v843
    %v845 = vadd.f32 %v841, %v844
    %vm846 = vweird.f32 %v759
    %vm847 = vweird.f32 %v841
    %vm848 = vmor %vm846, %vm847
    %v849 = vsel %vm848, %v841, %v845
    %v850 = vand.u32 2147483647, %v759
    %vm851 = vcmp.eq.f32.partialorder %v850, 8.507059e+37
    %v852 = vand.u32 %v759, 2147483648
    %v853 = vor.u32 1.1754944e-38, %v852
    %v854 = vsel %vm851, %v853, %v849
    %v855 = vmul.f32 %v737, %v854
    %v856 = vrcp.pop %v762
    %v857 = vmul.f32 %v762, %v856
    %v858 = vsub.f32 1.0, %v857
    %v859 = vmul.f32 %v856, %v858
    %v860 = vadd.f32 %v856, %v859
    %vm861 = vweird.f32 %v762
    %vm862 = vweird.f32 %v856
    %vm863 = vmor %vm861, %vm862
    %v864 = vsel %vm863, %v856, %v860
    %v865 = vand.u32 2147483647, %v762
    %vm866 = vcmp.eq.f32.partialorder %v865, 8.507059e+37
    %v867 = vand.u32 %v762, 2147483648
    %v868 = vor.u32 1.1754944e-38, %v867
    %v869 = vsel %vm866, %v868, %v864
    %v870 = vmul.f32 %v739, %v869
    %v871 = vrcp.pop %v765
    %v872 = vmul.f32 %v765, %v871
    %v873 = vsub.f32 1.0, %v872
    %v874 = vmul.f32 %v871, %v873
    %v875 = vadd.f32 %v871, %v874
    %vm876 = vweird.f32 %v765
    %vm877 = vweird.f32 %v871
    %vm878 = vmor %vm876, %vm877
    %v879 = vsel %vm878, %v871, %v875
    %v880 = vand.u32 2147483647, %v765
    %vm881 = vcmp.eq.f32.partialorder %v880, 8.507059e+37
    %v882 = vand.u32 %v765, 2147483648
    %v883 = vor.u32 1.1754944e-38, %v882
    %v884 = vsel %vm881, %v883, %v879
    %v885 = vmul.f32 %v741, %v884
    %v886 = vpack.c.bf16 %v780, %v780
    %v887 = vpack.c.bf16 %v795, %v795
    %v888 = vpack.c.bf16 %v810, %v810
    %v889 = vpack.c.bf16 %v825, %v825
    %v890 = vpack.c.bf16 %v840, %v840
    %v891 = vpack.c.bf16 %v855, %v855
    %v892 = vpack.c.bf16 %v870, %v870
    %v893 = vpack.c.bf16 %v885, %v885
    %v895 = vsel %vm541, %v886, 0
    %vm897 = vcmask 1043456
    %v899 = vsel %vm897, %v533, 0
    %901 = vmatpush.bf16.msra.mxu0 0
    %902 = vmatpush.bf16.msra.mxu0 0
    %903 = vmatpush.bf16.msra.mxu0 0
    %904 = vmatpush.bf16.msra.mxu0 0
    %905 = vmatpush.bf16.msra.mxu0 0
    %906 = vmatpush.bf16.msra.mxu0 0
    %907 = vmatpush.bf16.msra.mxu0 0
    %908 = vmatpush.bf16.msra.mxu0 %v899
    %909 = vmatmul.bf16.gmra.mxu0 %v895
    %v910 = vpop.f32.mrf.mxu0
    %v911 = vadd.f32 0.0, %v910
    %v912 = vpop.f32.mrf.mxu0
    %913 = vdwg.mxu0
    %v915 = vsel %vm541, %v887, 0
    %v918 = vsel %vm897, %v534, 0
    %920 = vmatpush.bf16.msra.mxu0 0
    %921 = vmatpush.bf16.msra.mxu0 0
    %922 = vmatpush.bf16.msra.mxu0 0
    %923 = vmatpush.bf16.msra.mxu0 0
    %924 = vmatpush.bf16.msra.mxu0 0
    %925 = vmatpush.bf16.msra.mxu0 0
    %926 = vmatpush.bf16.msra.mxu0 0
    %927 = vmatpush.bf16.msra.mxu0 %v918
    %928 = vmatmul.bf16.gmra.mxu0 %v915
    %v929 = vpop.f32.mrf.mxu0
    %v930 = vadd.f32 0.0, %v929
    %v931 = vpop.f32.mrf.mxu0
    %932 = vdwg.mxu0
    %v934 = vsel %vm541, %v888, 0
    %v937 = vsel %vm897, %v535, 0
    %939 = vmatpush.bf16.msra.mxu0 0
    %940 = vmatpush.bf16.msra.mxu0 0
    %941 = vmatpush.bf16.msra.mxu0 0
    %942 = vmatpush.bf16.msra.mxu0 0
    %943 = vmatpush.bf16.msra.mxu0 0
    %944 = vmatpush.bf16.msra.mxu0 0
    %945 = vmatpush.bf16.msra.mxu0 0
    %946 = vmatpush.bf16.msra.mxu0 %v937
    %947 = vmatmul.bf16.gmra.mxu0 %v934
    %v948 = vpop.f32.mrf.mxu0
    %v949 = vadd.f32 0.0, %v948
    %v950 = vpop.f32.mrf.mxu0
    %951 = vdwg.mxu0
    %v953 = vsel %vm541, %v889, 0
    %v956 = vsel %vm897, %v536, 0
    %958 = vmatpush.bf16.msra.mxu0 0
    %959 = vmatpush.bf16.msra.mxu0 0
    %960 = vmatpush.bf16.msra.mxu0 0
    %961 = vmatpush.bf16.msra.mxu0 0
    %962 = vmatpush.bf16.msra.mxu0 0
    %963 = vmatpush.bf16.msra.mxu0 0
    %964 = vmatpush.bf16.msra.mxu0 0
    %965 = vmatpush.bf16.msra.mxu0 %v956
    %966 = vmatmul.bf16.gmra.mxu0 %v953
    %v967 = vpop.f32.mrf.mxu0
    %v968 = vadd.f32 0.0, %v967
    %v969 = vpop.f32.mrf.mxu0
    %970 = vdwg.mxu0
    %v972 = vsel %vm541, %v890, 0
    %v975 = vsel %vm897, %v537, 0
    %977 = vmatpush.bf16.msra.mxu0 0
    %978 = vmatpush.bf16.msra.mxu0 0
    %979 = vmatpush.bf16.msra.mxu0 0
    %980 = vmatpush.bf16.msra.mxu0 0
    %981 = vmatpush.bf16.msra.mxu0 0
    %982 = vmatpush.bf16.msra.mxu0 0
    %983 = vmatpush.bf16.msra.mxu0 0
    %984 = vmatpush.bf16.msra.mxu0 %v975
    %985 = vmatmul.bf16.gmra.mxu0 %v972
    %v986 = vpop.f32.mrf.mxu0
    %v987 = vadd.f32 0.0, %v986
    %v988 = vpop.f32.mrf.mxu0
    %989 = vdwg.mxu0
    %v991 = vsel %vm541, %v891, 0
    %v994 = vsel %vm897, %v538, 0
    %996 = vmatpush.bf16.msra.mxu0 0
    %997 = vmatpush.bf16.msra.mxu0 0
    %998 = vmatpush.bf16.msra.mxu0 0
    %999 = vmatpush.bf16.msra.mxu0 0
    %1000 = vmatpush.bf16.msra.mxu0 0
    %1001 = vmatpush.bf16.msra.mxu0 0
    %1002 = vmatpush.bf16.msra.mxu0 0
    %1003 = vmatpush.bf16.msra.mxu0 %v994
    %1004 = vmatmul.bf16.gmra.mxu0 %v991
    %v1005 = vpop.f32.mrf.mxu0
    %v1006 = vadd.f32 0.0, %v1005
    %v1007 = vpop.f32.mrf.mxu0
    %1008 = vdwg.mxu0
    %v1010 = vsel %vm541, %v892, 0
    %v1013 = vsel %vm897, %v539, 0
    %1015 = vmatpush.bf16.msra.mxu0 0
    %1016 = vmatpush.bf16.msra.mxu0 0
    %1017 = vmatpush.bf16.msra.mxu0 0
    %1018 = vmatpush.bf16.msra.mxu0 0
    %1019 = vmatpush.bf16.msra.mxu0 0
    %1020 = vmatpush.bf16.msra.mxu0 0
    %1021 = vmatpush.bf16.msra.mxu0 0
    %1022 = vmatpush.bf16.msra.mxu0 %v1013
    %1023 = vmatmul.bf16.gmra.mxu0 %v1010
    %v1024 = vpop.f32.mrf.mxu0
    %v1025 = vadd.f32 0.0, %v1024
    %v1026 = vpop.f32.mrf.mxu0
    %1027 = vdwg.mxu0
    %v1029 = vsel %vm541, %v893, 0
    %v1032 = vsel %vm897, %v540, 0
    %1034 = vmatpush.bf16.msra.mxu0 0
    %1035 = vmatpush.bf16.msra.mxu0 0
    %1036 = vmatpush.bf16.msra.mxu0 0
    %1037 = vmatpush.bf16.msra.mxu0 0
    %1038 = vmatpush.bf16.msra.mxu0 0
    %1039 = vmatpush.bf16.msra.mxu0 0
    %1040 = vmatpush.bf16.msra.mxu0 0
    %1041 = vmatpush.bf16.msra.mxu0 %v1032
    %1042 = vmatmul.bf16.gmra.mxu0 %v1029
    %v1043 = vpop.f32.mrf.mxu0
    %v1044 = vadd.f32 0.0, %v1043
    %v1045 = vpop.f32.mrf.mxu0
    %1046 = vdwg.mxu0
    %1049 = vrot.lane.b32.xlu0 %v949, 8
    %v1050 = vpop.permute.xlu0 %1049
    %1051 = vrot.lane.b32.xlu0 %v968, 8
    %v1052 = vpop.permute.xlu0 %1051
    %1057 = vrot.lane.b32.xlu0 %v987, 16
    %v1058 = vpop.permute.xlu0 %1057
    %1059 = vrot.lane.b32.xlu0 %v1006, 16
    %v1060 = vpop.permute.xlu0 %1059
    %1065 = vrot.lane.b32.xlu0 %v1025, 24
    %v1066 = vpop.permute.xlu0 %1065
    %1067 = vrot.lane.b32.xlu0 %v1044, 24
    %v1068 = vpop.permute.xlu0 %1067
    %v1071 = vsel %vm541, %v911, %v1050
    %v1072 = vsel %vm541, %v930, %v1052
    %vm1073 = vcmask 130048
    %v1074 = vsel %vm1073, %v1071, %v1058
    %v1075 = vsel %vm1073, %v1072, %v1060
    %vm1076 = vcmask 195584
    %v1077 = vsel %vm1076, %v1074, %v1066
    %v1078 = vsel %vm1076, %v1075, %v1068
    %v1079 = vpack.c.bf16 %v1078, %v1077
    %v1080 = vld [vmem:[#allocation11] sm:$0xf]
    %v1081 = vld [vmem:[#allocation11 + $0x4] sm:$0xf]
    %v1082 = vld [vmem:[#allocation11 + $0x8] sm:$0xf]
    %v1083 = vld [vmem:[#allocation11 + $0xc] sm:$0xf]
    %v1084 = vld [vmem:[#allocation13] sm:$0x1]
    %v1086 = vperm.slane %v1084, 0
    %v1092 = vunpack.c.l.b16 %v1080
    %v1093 = vunpack.c.l.b16 %v1081
    %v1094 = vunpack.c.l.b16 %v1082
    %v1095 = vunpack.c.l.b16 %v1083
    %v1096 = vpack.c.b16 %v1093, %v1092
    %v1097 = vpack.c.b16 %v1095, %v1094
    %v1101 = vsel %vm324, %v1079, 0
    %1103 = vmatpush.bf16.msra.mxu0 0
    %1104 = vmatpush.bf16.msra.mxu0 0
    %1105 = vmatpush.bf16.msra.mxu0 0
    %1106 = vmatpush.bf16.msra.mxu0 0
    %1107 = vmatpush.bf16.msra.mxu0 0
    %1108 = vmatpush.bf16.msra.mxu0 0
    %1109 = vmatpush.bf16.msra.mxu0 %v1097
    %1110 = vmatpush.bf16.msra.mxu0 %v1096
    %1111 = vmatmul.bf16.gmra.mxu0 %v1101
    %v1112 = vpop.f32.mrf.mxu0
    %v1113 = vadd.f32 %v1086, %v1112
    %v1114 = vpop.f32.mrf.mxu0
    %v1115 = vadd.f32 %v1086, %v1114
    %1116 = vdwg.mxu0
    %v1117 = vadd.f32 %v299, %v1113
    %v1118 = vadd.f32 %v300, %v1115
    %v1119 = vld [vmem:[#allocation14] sm:$0x1]
    %v1120 = vld [vmem:[#allocation16] sm:$0x1]
    %v1121 = vsel %vm324, %v1117, 0.0
    %1122 = vadd.xlane.f32.xlu0 %v1121
    %v1123 = vpop.xlane.xlu0 %1122
    %v1124 = vsel %vm324, %v1118, 0.0
    %1125 = vadd.xlane.f32.xlu0 %v1124
    %v1126 = vpop.xlane.xlu0 %1125
    %v1127 = vrcp.pop 32.0
    %v1128 = vmul.f32 32.0, %v1127
    %v1129 = vsub.f32 1.0, %v1128
    %v1130 = vmul.f32 %v1127, %v1129
    %v1131 = vadd.f32 %v1127, %v1130
    %vm1132 = vweird.f32 %v1127
    %v1133 = vsel %vm1132, %v1127, %v1131
    %v1134 = vmul.f32 %v1123, %v1133
    %v1135 = vmul.f32 %v1126, %v1133
    %v1136 = vsub.f32 %v1117, %v1134
    %v1137 = vsub.f32 %v1118, %v1135
    %v1138 = vmul.f32 %v1136, %v1136
    %v1139 = vmul.f32 %v1137, %v1137
    %v1140 = vsel %vm324, %v1138, 0.0
    %1141 = vadd.xlane.f32.xlu0 %v1140
    %v1142 = vpop.xlane.xlu0 %1141
    %v1143 = vsel %vm324, %v1139, 0.0
    %1144 = vadd.xlane.f32.xlu0 %v1143
    %v1145 = vpop.xlane.xlu0 %1144
    %v1146 = vmul.f32 %v1142, %v1133
    %v1147 = vmul.f32 %v1145, %v1133
    %v1148 = vadd.f32 %v1146, 1e-05
    %v1149 = vadd.f32 %v1147, 1e-05
    %v1150 = vrsqrt.pop %v1148
    %v1151 = vmul.f32 %v1150, %v1148
    %v1152 = vmul.f32 %v1151, %v1150
    %v1153 = vmul.f32 0.5, %v1152
    %v1154 = vsub.f32 1.5, %v1153
    %v1155 = vmul.f32 %v1150, %v1154
    %vm1156 = vweird.f32 %v1148
    %vm1157 = vweird.f32 %v1150
    %vm1158 = vmor %vm1156, %vm1157
    %v1159 = vsel %vm1158, %v1150, %v1155
    %v1160 = vrsqrt.pop %v1149
    %v1161 = vmul.f32 %v1160, %v1149
    %v1162 = vmul.f32 %v1161, %v1160
    %v1163 = vmul.f32 0.5, %v1162
    %v1164 = vsub.f32 1.5, %v1163
    %v1165 = vmul.f32 %v1160, %v1164
    %vm1166 = vweird.f32 %v1149
    %vm1167 = vweird.f32 %v1160
    %vm1168 = vmor %vm1166, %vm1167
    %v1169 = vsel %vm1168, %v1160, %v1165
    %v1170 = vmul.f32 %v1136, %v1159
    %v1171 = vmul.f32 %v1137, %v1169
    %v1173 = vperm.slane %v1119, 0
    %v1175 = vmul.f32 %v1170, %v1173
    %v1176 = vmul.f32 %v1171, %v1173
    %v1178 = vperm.slane %v1120, 0
    %v1180 = vadd.f32 %v1175, %v1178
    %v1181 = vadd.f32 %v1176, %v1178
    %v1182 = vpack.c.bf16 %v1181, %v1180
    %v1183 = vld [vmem:[#allocation17] sm:$0xf]
    %v1184 = vld [vmem:[#allocation17 + $0x4] sm:$0xf]
    %v1185 = vld [vmem:[#allocation17 + $0x8] sm:$0xf]
    %v1186 = vld [vmem:[#allocation17 + $0xc] sm:$0xf]
    %v1187 = vld [vmem:[#allocation19] sm:$0x1]
    %v1189 = vperm.slane %v1187, 0
    %v1195 = vunpack.c.l.b16 %v1183
    %v1196 = vunpack.c.l.b16 %v1184
    %v1197 = vunpack.c.l.b16 %v1185
    %v1198 = vunpack.c.l.b16 %v1186
    %v1199 = vpack.c.b16 %v1196, %v1195
    %v1200 = vpack.c.b16 %v1198, %v1197
    %v1204 = vsel %vm324, %v1182, 0
    %1206 = vmatpush.bf16.msra.mxu0 0
    %1207 = vmatpush.bf16.msra.mxu0 0
    %1208 = vmatpush.bf16.msra.mxu0 0
    %1209 = vmatpush.bf16.msra.mxu0 0
    %1210 = vmatpush.bf16.msra.mxu0 0
    %1211 = vmatpush.bf16.msra.mxu0 0
    %1212 = vmatpush.bf16.msra.mxu0 %v1200
    %1213 = vmatpush.bf16.msra.mxu0 %v1199
    %1214 = vmatmul.bf16.gmra.mxu0 %v1204
    %v1215 = vpop.f32.mrf.mxu0
    %v1216 = vadd.f32 %v1189, %v1215
    %v1217 = vpop.f32.mrf.mxu0
    %v1218 = vadd.f32 %v1189, %v1217
    %1219 = vdwg.mxu0
    %v1220 = vmax.f32 %v1216, 0.0
    %v1221 = vmax.f32 %v1218, 0.0
    %v1222 = vpack.c.bf16 %v1221, %v1220
    %v1223 = vld [vmem:[%s17] sm:$0xf]
    %v1224 = vld [vmem:[%s17 + $0x4] sm:$0xf]
    %v1225 = vld [vmem:[%s17 + $0x8] sm:$0xf]
    %v1226 = vld [vmem:[%s17 + $0xc] sm:$0xf]
    %v1227 = vld [vmem:[%s17 + $0x10] sm:$0xf]
    %v1228 = vld [vmem:[%s17 + $0x14] sm:$0xf]
    %v1229 = vld [vmem:[%s17 + $0x18] sm:$0xf]
    %v1230 = vld [vmem:[%s17 + $0x1c] sm:$0xf]
    %v1231 = vld [vmem:[#allocation20] sm:$0x1]
    %v1233 = vperm.slane %v1231, 0
    %v1243 = vunpack.c.l.b16 %v1223
    %v1244 = vunpack.c.l.b16 %v1224
    %v1245 = vunpack.c.l.b16 %v1225
    %v1246 = vunpack.c.l.b16 %v1226
    %v1247 = vunpack.c.l.b16 %v1227
    %v1248 = vunpack.c.l.b16 %v1228
    %v1249 = vunpack.c.l.b16 %v1229
    %v1250 = vunpack.c.l.b16 %v1230
    %v1251 = vpack.c.b16 %v1244, %v1243
    %v1252 = vpack.c.b16 %v1246, %v1245
    %v1253 = vpack.c.b16 %v1248, %v1247
    %v1254 = vpack.c.b16 %v1250, %v1249
    %vm1259 = vcmask 523264
    %v1261 = vsel %vm1259, %v1222, 0
    %1263 = vmatpush.bf16.msra.mxu0 0
    %1264 = vmatpush.bf16.msra.mxu0 0
    %1265 = vmatpush.bf16.msra.mxu0 0
    %1266 = vmatpush.bf16.msra.mxu0 0
    %1267 = vmatpush.bf16.msra.mxu0 %v1254
    %1268 = vmatpush.bf16.msra.mxu0 %v1253
    %1269 = vmatpush.bf16.msra.mxu0 %v1252
    %1270 = vmatpush.bf16.msra.mxu0 %v1251
    %1271 = vmatmul.bf16.gmra.mxu0 %v1261
    %v1272 = vpop.f32.mrf.mxu0
    %v1273 = vadd.f32 %v1233, %v1272
    %v1274 = vpop.f32.mrf.mxu0
    %v1275 = vadd.f32 %v1233, %v1274
    %1276 = vdwg.mxu0
    %v1277 = vadd.f32 %v1180, %v1273
    %v1278 = vadd.f32 %v1181, %v1275
    %v1279 = vld [vmem:[#allocation22] sm:$0x1]
    %v1280 = vld [vmem:[#allocation23] sm:$0x1]
    %v1281 = vsel %vm324, %v1277, 0.0
    %1282 = vadd.xlane.f32.xlu0 %v1281
    %v1283 = vpop.xlane.xlu0 %1282
    %v1284 = vsel %vm324, %v1278, 0.0
    %1285 = vadd.xlane.f32.xlu0 %v1284
    %v1286 = vpop.xlane.xlu0 %1285
    %v1287 = vmul.f32 %v1283, %v1133
    %v1288 = vmul.f32 %v1286, %v1133
    %v1289 = vsub.f32 %v1277, %v1287
    %v1290 = vsub.f32 %v1278, %v1288
    %v1291 = vmul.f32 %v1289, %v1289
    %v1292 = vmul.f32 %v1290, %v1290
    %v1293 = vsel %vm324, %v1291, 0.0
    %1294 = vadd.xlane.f32.xlu0 %v1293
    %v1295 = vpop.xlane.xlu0 %1294
    %v1296 = vsel %vm324, %v1292, 0.0
    %1297 = vadd.xlane.f32.xlu0 %v1296
    %v1298 = vpop.xlane.xlu0 %1297
    %v1299 = vmul.f32 %v1295, %v1133
    %v1300 = vmul.f32 %v1298, %v1133
    %v1301 = vadd.f32 %v1299, 1e-05
    %v1302 = vadd.f32 %v1300, 1e-05
    %v1303 = vrsqrt.pop %v1301
    %v1304 = vmul.f32 %v1303, %v1301
    %v1305 = vmul.f32 %v1304, %v1303
    %v1306 = vmul.f32 0.5, %v1305
    %v1307 = vsub.f32 1.5, %v1306
    %v1308 = vmul.f32 %v1303, %v1307
    %vm1309 = vweird.f32 %v1301
    %vm1310 = vweird.f32 %v1303
    %vm1311 = vmor %vm1309, %vm1310
    %v1312 = vsel %vm1311, %v1303, %v1308
    %v1313 = vrsqrt.pop %v1302
    %v1314 = vmul.f32 %v1313, %v1302
    %v1315 = vmul.f32 %v1314, %v1313
    %v1316 = vmul.f32 0.5, %v1315
    %v1317 = vsub.f32 1.5, %v1316
    %v1318 = vmul.f32 %v1313, %v1317
    %vm1319 = vweird.f32 %v1302
    %vm1320 = vweird.f32 %v1313
    %vm1321 = vmor %vm1319, %vm1320
    %v1322 = vsel %vm1321, %v1313, %v1318
    %v1323 = vmul.f32 %v1289, %v1312
    %v1324 = vmul.f32 %v1290, %v1322
    %v1326 = vperm.slane %v1279, 0
    %v1328 = vmul.f32 %v1323, %v1326
    %v1329 = vmul.f32 %v1324, %v1326
    %v1331 = vperm.slane %v1280, 0
    %v1333 = vadd.f32 %v1328, %v1331
    %v1334 = vadd.f32 %v1329, %v1331
    %v1335 = vld [vmem:[#allocation25] sm:$0x1]
    %v1336 = vld [vmem:[#allocation26] sm:$0x1]
    %v1337 = vsel %vm324, %v1333, 0.0
    %1338 = vadd.xlane.f32.xlu0 %v1337
    %v1339 = vpop.xlane.xlu0 %1338
    %v1340 = vsel %vm324, %v1334, 0.0
    %1341 = vadd.xlane.f32.xlu0 %v1340
    %v1342 = vpop.xlane.xlu0 %1341
    %v1343 = vmul.f32 %v1339, %v1133
    %v1344 = vmul.f32 %v1342, %v1133
    %v1345 = vsub.f32 %v1333, %v1343
    %v1346 = vsub.f32 %v1334, %v1344
    %v1347 = vmul.f32 %v1345, %v1345
    %v1348 = vmul.f32 %v1346, %v1346
    %v1349 = vsel %vm324, %v1347, 0.0
    %1350 = vadd.xlane.f32.xlu0 %v1349
    %v1351 = vpop.xlane.xlu0 %1350
    %v1352 = vsel %vm324, %v1348, 0.0
    %1353 = vadd.xlane.f32.xlu0 %v1352
    %v1354 = vpop.xlane.xlu0 %1353
    %v1355 = vmul.f32 %v1351, %v1133
    %v1356 = vmul.f32 %v1354, %v1133
    %v1357 = vadd.f32 %v1355, 1e-05
    %v1358 = vadd.f32 %v1356, 1e-05
    %v1359 = vrsqrt.pop %v1357
    %v1360 = vmul.f32 %v1359, %v1357
    %v1361 = vmul.f32 %v1360, %v1359
    %v1362 = vmul.f32 0.5, %v1361
    %v1363 = vsub.f32 1.5, %v1362
    %v1364 = vmul.f32 %v1359, %v1363
    %vm1365 = vweird.f32 %v1357
    %vm1366 = vweird.f32 %v1359
    %vm1367 = vmor %vm1365, %vm1366
    %v1368 = vsel %vm1367, %v1359, %v1364
    %v1369 = vrsqrt.pop %v1358
    %v1370 = vmul.f32 %v1369, %v1358
    %v1371 = vmul.f32 %v1370, %v1369
    %v1372 = vmul.f32 0.5, %v1371
    %v1373 = vsub.f32 1.5, %v1372
    %v1374 = vmul.f32 %v1369, %v1373
    %vm1375 = vweird.f32 %v1358
    %vm1376 = vweird.f32 %v1369
    %vm1377 = vmor %vm1375, %vm1376
    %v1378 = vsel %vm1377, %v1369, %v1374
    %v1379 = vmul.f32 %v1345, %v1368
    %v1380 = vmul.f32 %v1346, %v1378
    %v1382 = vperm.slane %v1335, 0
    %v1384 = vmul.f32 %v1379, %v1382
    %v1385 = vmul.f32 %v1380, %v1382
    %v1387 = vperm.slane %v1336, 0
    %v1389 = vadd.f32 %v1384, %v1387
    %v1390 = vadd.f32 %v1385, %v1387
    %1391 = vst.msk [vmem:[%s23] sm:$0xff] %vm324, %v1389
    %1392 = vst.msk [vmem:[%s23 + $0x8] sm:$0xff] %vm324, %v1390
    // Predicated region
    $region158: #{segmental_transformer_encoder.3} parent=1 // pred_check
      _
    $region159: #{segmental_transformer_encoder.3} parent=1 // pred_check_branch
      %1394 = sbr.rel (0) target = $region161
    $region160: #{segmental_transformer_encoder.3} parent=1 // pred_region
      _
    $region161: #{segmental_transformer_encoder.3} parent=1 // pred_fallthru
      _
    // Predicated region
    $region162: #{segmental_transformer_encoder.3} parent=1 // pred_check
      _
    $region163: #{segmental_transformer_encoder.3} parent=1 // pred_check_branch
      %1396 = sbr.rel (0) target = $region165
    $region164: #{segmental_transformer_encoder.3} parent=1 // pred_region
      %1398 = vsyncadd [#allocation4], 0
      %s1399 = sshll.u32 [#allocation28], 4
      %s1400 = int_to_ptr.vmem [resolvable:$true] %s1399
      %s1401 = sshll.u32 %s24, 4
      %s1402 = int_to_ptr.hbm [resolvable:$true] %s1401
      %1407 = dma.vmem_to_hbm [thread:$0]  %s1400, 256, %s1402, [#allocation4], 128, 128, 8
    $region165: #{segmental_transformer_encoder.3} parent=1 // pred_fallthru
      _
    // Predicated region
    $region166: #{segmental_transformer_encoder.3} parent=1 // pred_check
      _
    $region167: #{segmental_transformer_encoder.3} parent=1 // pred_check_branch
      %1409 = sbr.rel (0) target = $region169
    $region168: #{segmental_transformer_encoder.3} parent=1 // pred_region
      _
    $region169: #{segmental_transformer_encoder.3} parent=1 // pred_fallthru
      _
    // Predicated region
    $region170: #{segmental_transformer_encoder.3} parent=1 // pred_check
      _
    $region171: #{segmental_transformer_encoder.3} parent=1 // pred_check_branch
      %1411 = sbr.rel (0) target = $region173
    $region172: #{segmental_transformer_encoder.3} parent=1 // pred_region
      %1413 = dma.done [#allocation4], 256
    $region173: #{segmental_transformer_encoder.3} parent=1 // pred_fallthru
      _
    %1414 = vsyncpa [#allocation3], 1
    %1415 = vsyncpa [#allocation6], 1
    %1416 = vsyncpa [#allocation9], 1
    %1417 = vsyncpa [#allocation12], 1
    %1418 = vsyncpa [#allocation15], 1
    %1419 = vsyncpa [#allocation18], 1
    %1420 = vsyncpa [#allocation21], 1
    %1421 = vsyncpa [#allocation24], 1
    %1422 = vsyncpa [#allocation27], 1
    %1423 = vsyncpa [#allocation4], 1

// kernel: segmental_transformer_encoder.2
$region0: #{segmental_transformer_encoder.2}
  #allocation0 [shape = 'u32[]', space=smem, size = 0x4, offset = 0x4, fixed_abs, tag = 'smem constant byte address 0x4 - core index']
  #allocation1 [shape = 'u32[72,128]{1,0:T(1,128)}', space=vmem, size = 0x9000, scoped, tag = 'internal scratch']
  %s0 = inlined_call_operand.vmem [shape: f32[2,8,32], index: 0, kind: input, shape index: {}]
  %s1 = inlined_call_operand.hbm [shape: f32[8,8], index: 1, kind: input, shape index: {}]
  %s2 = inlined_call_operand.vmem [shape: bf16[32,32], index: 2, kind: input, shape index: {}]
  %s3 = inlined_call_operand.hbm [shape: f32[1,32], index: 3, kind: input, shape index: {}]
  %s4 = inlined_call_operand.vmem [shape: bf16[32,32], index: 4, kind: input, shape index: {}]
  %s5 = inlined_call_operand.hbm [shape: f32[1,32], index: 5, kind: input, shape index: {}]
  %s6 = inlined_call_operand.vmem [shape: bf16[32,32], index: 6, kind: input, shape index: {}]
  %s7 = inlined_call_operand.hbm [shape: f32[1,32], index: 7, kind: input, shape index: {}]
  %s8 = inlined_call_operand.vmem [shape: bf16[32,32], index: 8, kind: input, shape index: {}]
  %s9 = inlined_call_operand.hbm [shape: f32[1,32], index: 9, kind: input, shape index: {}]
  %s10 = inlined_call_operand.hbm [shape: f32[1,32], index: 10, kind: input, shape index: {}]
  %s11 = inlined_call_operand.hbm [shape: f32[1,32], index: 11, kind: input, shape index: {}]
  %s12 = inlined_call_operand.hbm [shape: bf16[32,64], index: 12, kind: input, shape index: {}]
  %s13 = inlined_call_operand.hbm [shape: f32[1,64], index: 13, kind: input, shape index: {}]
  %s14 = inlined_call_operand.vmem [shape: bf16[64,32], index: 14, kind: input, shape index: {}]
  %s15 = inlined_call_operand.hbm [shape: f32[1,32], index: 15, kind: input, shape index: {}]
  %s16 = inlined_call_operand.hbm [shape: f32[1,32], index: 16, kind: input, shape index: {}]
  %s17 = inlined_call_operand.hbm [shape: f32[1,32], index: 17, kind: input, shape index: {}]
  %s18 = inlined_call_operand.vmem [shape: f32[2,8,32], index: 18, kind: output, shape index: {}]
  %s19 = sld [smem:[#allocation0]]
  $region130: #{segmental_transformer_encoder.2} parent=0
    _
  %s21 = ssub.s32 1, %s19
  %s22 = scalar_select 0, %s21, %s19
  $region1: #{segmental_transformer_encoder.2} parent=0
    #allocation2 [shape = 'u8[4096]{0}', space=vmem, size = 0x1000, scoped, tag = 'input window, operand 1, single buffered']
    #allocation3 [shape = 's32[1]{0}', space=sflag, size = 0x4, scoped, tag = 'scoped memory for segmental_transformer_encoder.2']
    #allocation4 [shape = 'u8[512]{0}', space=vmem, size = 0x400, scoped, tag = 'input window, operand 3, single buffered']
    #allocation5 [shape = 's32[1]{0}', space=sflag, size = 0x4, scoped, tag = 'scoped memory for segmental_transformer_encoder.2']
    #allocation6 [shape = 'u8[512]{0}', space=vmem, size = 0x400, scoped, tag = 'input window, operand 5, single buffered']
    #allocation7 [shape = 'u8[512]{0}', space=vmem, size = 0x400, scoped, tag = 'input window, operand 7, single buffered']
    #allocation8 [shape = 's32[1]{0}', space=sflag, size = 0x4, scoped, tag = 'scoped memory for segmental_transformer_encoder.2']
    #allocation9 [shape = 'u8[512]{0}', space=vmem, size = 0x400, scoped, tag = 'input window, operand 9, single buffered']
    #allocation10 [shape = 'u8[512]{0}', space=vmem, size = 0x400, scoped, tag = 'input window, operand 10, single buffered']
    #allocation11 [shape = 's32[1]{0}', space=sflag, size = 0x4, scoped, tag = 'scoped memory for segmental_transformer_encoder.2']
    #allocation12 [shape = 'u8[512]{0}', space=vmem, size = 0x400, scoped, tag = 'input window, operand 11, single buffered']
    #allocation13 [shape = 'u8[8192]{0}', space=vmem, size = 0x2000, scoped, tag = 'input window, operand 12, single buffered']
    #allocation14 [shape = 's32[1]{0}', space=sflag, size = 0x4, scoped, tag = 'scoped memory for segmental_transformer_encoder.2']
    #allocation15 [shape = 'u8[512]{0}', space=vmem, size = 0x400, scoped, tag = 'input window, operand 13, single buffered']
    #allocation16 [shape = 'u8[512]{0}', space=vmem, size = 0x400, scoped, tag = 'input window, operand 15, single buffered']
    #allocation17 [shape = 's32[1]{0}', space=sflag, size = 0x4, scoped, tag = 'scoped memory for segmental_transformer_encoder.2']
    #allocation18 [shape = 'u8[512]{0}', space=vmem, size = 0x400, scoped, tag = 'input window, operand 16, single buffered']
    #allocation19 [shape = 'u8[512]{0}', space=vmem, size = 0x400, scoped, tag = 'input window, operand 17, single buffered']
    #allocation20 [shape = 's32[1]{0}', space=sflag, size = 0x4, scoped, tag = 'scoped memory for segmental_transformer_encoder.2']
    %23 = vsyncpa [#allocation3], 0
    %24 = vsyncpa [#allocation5], 0
    %25 = vsyncpa [#allocation8], 0
    %26 = vsyncpa [#allocation11], 0
    %27 = vsyncpa [#allocation14], 0
    %28 = vsyncpa [#allocation17], 0
    %29 = vsyncpa [#allocation20], 0
    // Predicated region
    $region2: #{segmental_transformer_encoder.2} parent=1 // pred_check
      _
    $region3: #{segmental_transformer_encoder.2} parent=1 // pred_check_branch
      %31 = sbr.rel (0) target = $region5
    $region4: #{segmental_transformer_encoder.2} parent=1 // pred_region
      _
    $region5: #{segmental_transformer_encoder.2} parent=1 // pred_fallthru
      _
    // Predicated region
    $region6: #{segmental_transformer_encoder.2} parent=1 // pred_check
      _
    $region7: #{segmental_transformer_encoder.2} parent=1 // pred_check_branch
      %33 = sbr.rel (0) target = $region9
    $region8: #{segmental_transformer_encoder.2} parent=1 // pred_region
      %35 = vsyncadd [#allocation3], 0
      %s37 = sshll.u32 %s1, 4
      %s38 = int_to_ptr.hbm [resolvable:$true] %s37
      %s39 = sshll.u32 [#allocation2], 4
      %s40 = int_to_ptr.vmem [resolvable:$true] %s39
      %42 = dma.hbm_to_vmem [thread:$0]  %s38, 128, %s40, [#allocation3]
    $region9: #{segmental_transformer_encoder.2} parent=1 // pred_fallthru
      _
    // Predicated region
    $region10: #{segmental_transformer_encoder.2} parent=1 // pred_check
      _
    $region11: #{segmental_transformer_encoder.2} parent=1 // pred_check_branch
      %44 = sbr.rel (0) target = $region13
    $region12: #{segmental_transformer_encoder.2} parent=1 // pred_region
      _
    $region13: #{segmental_transformer_encoder.2} parent=1 // pred_fallthru
      _
    // Predicated region
    $region14: #{segmental_transformer_encoder.2} parent=1 // pred_check
      _
    $region15: #{segmental_transformer_encoder.2} parent=1 // pred_check_branch
      %46 = sbr.rel (0) target = $region17
    $region16: #{segmental_transformer_encoder.2} parent=1 // pred_region
      %48 = vsyncadd [#allocation5], 0
      %s50 = sshll.u32 %s3, 4
      %s51 = int_to_ptr.hbm [resolvable:$true] %s50
      %s52 = sshll.u32 [#allocation4], 4
      %s53 = int_to_ptr.vmem [resolvable:$true] %s52
      %55 = dma.hbm_to_vmem [thread:$0]  %s51, 16, %s53, [#allocation5]
    $region17: #{segmental_transformer_encoder.2} parent=1 // pred_fallthru
      _
    // Predicated region
    $region18: #{segmental_transformer_encoder.2} parent=1 // pred_check
      _
    $region19: #{segmental_transformer_encoder.2} parent=1 // pred_check_branch
      %57 = sbr.rel (0) target = $region21
    $region20: #{segmental_transformer_encoder.2} parent=1 // pred_region
      _
    $region21: #{segmental_transformer_encoder.2} parent=1 // pred_fallthru
      _
    // Predicated region
    $region22: #{segmental_transformer_encoder.2} parent=1 // pred_check
      _
    $region23: #{segmental_transformer_encoder.2} parent=1 // pred_check_branch
      %59 = sbr.rel (0) target = $region25
    $region24: #{segmental_transformer_encoder.2} parent=1 // pred_region
      %61 = vsyncadd [#allocation5], 0
      %s63 = sshll.u32 %s5, 4
      %s64 = int_to_ptr.hbm [resolvable:$true] %s63
      %s65 = sshll.u32 [#allocation6], 4
      %s66 = int_to_ptr.vmem [resolvable:$true] %s65
      %68 = dma.hbm_to_vmem [thread:$0]  %s64, 16, %s66, [#allocation5]
    $region25: #{segmental_transformer_encoder.2} parent=1 // pred_fallthru
      _
    // Predicated region
    $region26: #{segmental_transformer_encoder.2} parent=1 // pred_check
      _
    $region27: #{segmental_transformer_encoder.2} parent=1 // pred_check_branch
      %70 = sbr.rel (0) target = $region29
    $region28: #{segmental_transformer_encoder.2} parent=1 // pred_region
      _
    $region29: #{segmental_transformer_encoder.2} parent=1 // pred_fallthru
      _
    // Predicated region
    $region30: #{segmental_transformer_encoder.2} parent=1 // pred_check
      _
    $region31: #{segmental_transformer_encoder.2} parent=1 // pred_check_branch
      %72 = sbr.rel (0) target = $region33
    $region32: #{segmental_transformer_encoder.2} parent=1 // pred_region
      %74 = vsyncadd [#allocation8], 0
      %s76 = sshll.u32 %s7, 4
      %s77 = int_to_ptr.hbm [resolvable:$true] %s76
      %s78 = sshll.u32 [#allocation7], 4
      %s79 = int_to_ptr.vmem [resolvable:$true] %s78
      %81 = dma.hbm_to_vmem [thread:$0]  %s77, 16, %s79, [#allocation8]
    $region33: #{segmental_transformer_encoder.2} parent=1 // pred_fallthru
      _
    // Predicated region
    $region34: #{segmental_transformer_encoder.2} parent=1 // pred_check
      _
    $region35: #{segmental_transformer_encoder.2} parent=1 // pred_check_branch
      %83 = sbr.rel (0) target = $region37
    $region36: #{segmental_transformer_encoder.2} parent=1 // pred_region
      _
    $region37: #{segmental_transformer_encoder.2} parent=1 // pred_fallthru
      _
    // Predicated region
    $region38: #{segmental_transformer_encoder.2} parent=1 // pred_check
      _
    $region39: #{segmental_transformer_encoder.2} parent=1 // pred_check_branch
      %85 = sbr.rel (0) target = $region41
    $region40: #{segmental_transformer_encoder.2} parent=1 // pred_region
      %87 = vsyncadd [#allocation8], 0
      %s89 = sshll.u32 %s9, 4
      %s90 = int_to_ptr.hbm [resolvable:$true] %s89
      %s91 = sshll.u32 [#allocation9], 4
      %s92 = int_to_ptr.vmem [resolvable:$true] %s91
      %94 = dma.hbm_to_vmem [thread:$0]  %s90, 16, %s92, [#allocation8]
    $region41: #{segmental_transformer_encoder.2} parent=1 // pred_fallthru
      _
    // Predicated region
    $region42: #{segmental_transformer_encoder.2} parent=1 // pred_check
      _
    $region43: #{segmental_transformer_encoder.2} parent=1 // pred_check_branch
      %96 = sbr.rel (0) target = $region45
    $region44: #{segmental_transformer_encoder.2} parent=1 // pred_region
      %98 = vsyncadd [#allocation11], 0
      %s100 = sshll.u32 %s10, 4
      %s101 = int_to_ptr.hbm [resolvable:$true] %s100
      %s102 = sshll.u32 [#allocation10], 4
      %s103 = int_to_ptr.vmem [resolvable:$true] %s102
      %105 = dma.hbm_to_vmem [thread:$0]  %s101, 16, %s103, [#allocation11]
    $region45: #{segmental_transformer_encoder.2} parent=1 // pred_fallthru
      _
    // Predicated region
    $region46: #{segmental_transformer_encoder.2} parent=1 // pred_check
      _
    $region47: #{segmental_transformer_encoder.2} parent=1 // pred_check_branch
      %107 = sbr.rel (0) target = $region49
    $region48: #{segmental_transformer_encoder.2} parent=1 // pred_region
      %109 = vsyncadd [#allocation11], 0
      %s111 = sshll.u32 %s11, 4
      %s112 = int_to_ptr.hbm [resolvable:$true] %s111
      %s113 = sshll.u32 [#allocation12], 4
      %s114 = int_to_ptr.vmem [resolvable:$true] %s113
      %116 = dma.hbm_to_vmem [thread:$0]  %s112, 16, %s114, [#allocation11]
    $region49: #{segmental_transformer_encoder.2} parent=1 // pred_fallthru
      _
    // Predicated region
    $region50: #{segmental_transformer_encoder.2} parent=1 // pred_check
      _
    $region51: #{segmental_transformer_encoder.2} parent=1 // pred_check_branch
      %118 = sbr.rel (0) target = $region53
    $region52: #{segmental_transformer_encoder.2} parent=1 // pred_region
      %120 = vsyncadd [#allocation14], 0
      %s121 = sshll.u32 %s12, 4
      %s122 = int_to_ptr.hbm [resolvable:$true] %s121
      %s123 = sshll.u32 [#allocation13], 4
      %s124 = int_to_ptr.vmem [resolvable:$true] %s123
      %129 = dma.hbm_to_vmem [thread:$0]  %s122, 256, %s124, [#allocation14], 64, 64, 4
    $region53: #{segmental_transformer_encoder.2} parent=1 // pred_fallthru
      _
    // Predicated region
    $region54: #{segmental_transformer_encoder.2} parent=1 // pred_check
      _
    $region55: #{segmental_transformer_encoder.2} parent=1 // pred_check_branch
      %131 = sbr.rel (0) target = $region57
    $region56: #{segmental_transformer_encoder.2} parent=1 // pred_region
      %133 = vsyncadd [#allocation14], 0
      %s135 = sshll.u32 %s13, 4
      %s136 = int_to_ptr.hbm [resolvable:$true] %s135
      %s137 = sshll.u32 [#allocation15], 4
      %s138 = int_to_ptr.vmem [resolvable:$true] %s137
      %140 = dma.hbm_to_vmem [thread:$0]  %s136, 16, %s138, [#allocation14]
    $region57: #{segmental_transformer_encoder.2} parent=1 // pred_fallthru
      _
    // Predicated region
    $region58: #{segmental_transformer_encoder.2} parent=1 // pred_check
      _
    $region59: #{segmental_transformer_encoder.2} parent=1 // pred_check_branch
      %142 = sbr.rel (0) target = $region61
    $region60: #{segmental_transformer_encoder.2} parent=1 // pred_region
      _
    $region61: #{segmental_transformer_encoder.2} parent=1 // pred_fallthru
      _
    // Predicated region
    $region62: #{segmental_transformer_encoder.2} parent=1 // pred_check
      _
    $region63: #{segmental_transformer_encoder.2} parent=1 // pred_check_branch
      %144 = sbr.rel (0) target = $region65
    $region64: #{segmental_transformer_encoder.2} parent=1 // pred_region
      %146 = vsyncadd [#allocation17], 0
      %s148 = sshll.u32 %s15, 4
      %s149 = int_to_ptr.hbm [resolvable:$true] %s148
      %s150 = sshll.u32 [#allocation16], 4
      %s151 = int_to_ptr.vmem [resolvable:$true] %s150
      %153 = dma.hbm_to_vmem [thread:$0]  %s149, 16, %s151, [#allocation17]
    $region65: #{segmental_transformer_encoder.2} parent=1 // pred_fallthru
      _
    // Predicated region
    $region66: #{segmental_transformer_encoder.2} parent=1 // pred_check
      _
    $region67: #{segmental_transformer_encoder.2} parent=1 // pred_check_branch
      %155 = sbr.rel (0) target = $region69
    $region68: #{segmental_transformer_encoder.2} parent=1 // pred_region
      %157 = vsyncadd [#allocation17], 0
      %s159 = sshll.u32 %s16, 4
      %s160 = int_to_ptr.hbm [resolvable:$true] %s159
      %s161 = sshll.u32 [#allocation18], 4
      %s162 = int_to_ptr.vmem [resolvable:$true] %s161
      %164 = dma.hbm_to_vmem [thread:$0]  %s160, 16, %s162, [#allocation17]
    $region69: #{segmental_transformer_encoder.2} parent=1 // pred_fallthru
      _
    // Predicated region
    $region70: #{segmental_transformer_encoder.2} parent=1 // pred_check
      _
    $region71: #{segmental_transformer_encoder.2} parent=1 // pred_check_branch
      %166 = sbr.rel (0) target = $region73
    $region72: #{segmental_transformer_encoder.2} parent=1 // pred_region
      %168 = vsyncadd [#allocation20], 0
      %s170 = sshll.u32 %s17, 4
      %s171 = int_to_ptr.hbm [resolvable:$true] %s170
      %s172 = sshll.u32 [#allocation19], 4
      %s173 = int_to_ptr.vmem [resolvable:$true] %s172
      %175 = dma.hbm_to_vmem [thread:$0]  %s171, 16, %s173, [#allocation20]
    $region73: #{segmental_transformer_encoder.2} parent=1 // pred_fallthru
      _
    // Predicated region
    $region74: #{segmental_transformer_encoder.2} parent=1 // pred_check
      _
    $region75: #{segmental_transformer_encoder.2} parent=1 // pred_check_branch
      %177 = sbr.rel (0) target = $region77
    $region76: #{segmental_transformer_encoder.2} parent=1 // pred_region
      %179 = dma.done [#allocation3], 128
    $region77: #{segmental_transformer_encoder.2} parent=1 // pred_fallthru
      _
    // Predicated region
    $region78: #{segmental_transformer_encoder.2} parent=1 // pred_check
      _
    $region79: #{segmental_transformer_encoder.2} parent=1 // pred_check_branch
      %181 = sbr.rel (0) target = $region81
    $region80: #{segmental_transformer_encoder.2} parent=1 // pred_region
      %183 = dma.done [#allocation5], 16
    $region81: #{segmental_transformer_encoder.2} parent=1 // pred_fallthru
      _
    // Predicated region
    $region82: #{segmental_transformer_encoder.2} parent=1 // pred_check
      _
    $region83: #{segmental_transformer_encoder.2} parent=1 // pred_check_branch
      %185 = sbr.rel (0) target = $region85
    $region84: #{segmental_transformer_encoder.2} parent=1 // pred_region
      %187 = dma.done [#allocation5], 16
    $region85: #{segmental_transformer_encoder.2} parent=1 // pred_fallthru
      _
    // Predicated region
    $region86: #{segmental_transformer_encoder.2} parent=1 // pred_check
      _
    $region87: #{segmental_transformer_encoder.2} parent=1 // pred_check_branch
      %189 = sbr.rel (0) target = $region89
    $region88: #{segmental_transformer_encoder.2} parent=1 // pred_region
      %191 = dma.done [#allocation8], 16
    $region89: #{segmental_transformer_encoder.2} parent=1 // pred_fallthru
      _
    // Predicated region
    $region90: #{segmental_transformer_encoder.2} parent=1 // pred_check
      _
    $region91: #{segmental_transformer_encoder.2} parent=1 // pred_check_branch
      %193 = sbr.rel (0) target = $region93
    $region92: #{segmental_transformer_encoder.2} parent=1 // pred_region
      %195 = dma.done [#allocation8], 16
    $region93: #{segmental_transformer_encoder.2} parent=1 // pred_fallthru
      _
    // Predicated region
    $region94: #{segmental_transformer_encoder.2} parent=1 // pred_check
      _
    $region95: #{segmental_transformer_encoder.2} parent=1 // pred_check_branch
      %197 = sbr.rel (0) target = $region97
    $region96: #{segmental_transformer_encoder.2} parent=1 // pred_region
      %199 = dma.done [#allocation11], 16
    $region97: #{segmental_transformer_encoder.2} parent=1 // pred_fallthru
      _
    // Predicated region
    $region98: #{segmental_transformer_encoder.2} parent=1 // pred_check
      _
    $region99: #{segmental_transformer_encoder.2} parent=1 // pred_check_branch
      %201 = sbr.rel (0) target = $region101
    $region100: #{segmental_transformer_encoder.2} parent=1 // pred_region
      %203 = dma.done [#allocation11], 16
    $region101: #{segmental_transformer_encoder.2} parent=1 // pred_fallthru
      _
    // Predicated region
    $region102: #{segmental_transformer_encoder.2} parent=1 // pred_check
      _
    $region103: #{segmental_transformer_encoder.2} parent=1 // pred_check_branch
      %205 = sbr.rel (0) target = $region105
    $region104: #{segmental_transformer_encoder.2} parent=1 // pred_region
      %207 = dma.done [#allocation14], 256
    $region105: #{segmental_transformer_encoder.2} parent=1 // pred_fallthru
      _
    // Predicated region
    $region106: #{segmental_transformer_encoder.2} parent=1 // pred_check
      _
    $region107: #{segmental_transformer_encoder.2} parent=1 // pred_check_branch
      %209 = sbr.rel (0) target = $region109
    $region108: #{segmental_transformer_encoder.2} parent=1 // pred_region
      %211 = dma.done [#allocation14], 16
    $region109: #{segmental_transformer_encoder.2} parent=1 // pred_fallthru
      _
    // Predicated region
    $region110: #{segmental_transformer_encoder.2} parent=1 // pred_check
      _
    $region111: #{segmental_transformer_encoder.2} parent=1 // pred_check_branch
      %213 = sbr.rel (0) target = $region113
    $region112: #{segmental_transformer_encoder.2} parent=1 // pred_region
      %215 = dma.done [#allocation17], 16
    $region113: #{segmental_transformer_encoder.2} parent=1 // pred_fallthru
      _
    // Predicated region
    $region114: #{segmental_transformer_encoder.2} parent=1 // pred_check
      _
    $region115: #{segmental_transformer_encoder.2} parent=1 // pred_check_branch
      %217 = sbr.rel (0) target = $region117
    $region116: #{segmental_transformer_encoder.2} parent=1 // pred_region
      %219 = dma.done [#allocation17], 16
    $region117: #{segmental_transformer_encoder.2} parent=1 // pred_fallthru
      _
    // Predicated region
    $region118: #{segmental_transformer_encoder.2} parent=1 // pred_check
      _
    $region119: #{segmental_transformer_encoder.2} parent=1 // pred_check_branch
      %221 = sbr.rel (0) target = $region121
    $region120: #{segmental_transformer_encoder.2} parent=1 // pred_region
      %223 = dma.done [#allocation20], 16
    $region121: #{segmental_transformer_encoder.2} parent=1 // pred_fallthru
      _
    %v225 = vld [vmem:[%s0] sm:$0xff]
    %v226 = vld [vmem:[%s0 + $0x8] sm:$0xff]
    %v227 = vpack.c.bf16 %v226, %v225
    %v228 = vld [vmem:[%s2] sm:$0xf]
    %v229 = vld [vmem:[%s2 + $0x4] sm:$0xf]
    %v230 = vld [vmem:[%s2 + $0x8] sm:$0xf]
    %v231 = vld [vmem:[%s2 + $0xc] sm:$0xf]
    %v232 = vld [vmem:[#allocation4] sm:$0x1]
    %v234 = vperm.slane %v232, 0
    %v240 = vunpack.c.l.b16 %v228
    %v241 = vunpack.c.l.b16 %v229
    %v242 = vunpack.c.l.b16 %v230
    %v243 = vunpack.c.l.b16 %v231
    %v244 = vpack.c.b16 %v241, %v240
    %v245 = vpack.c.b16 %v243, %v242
    %vm248 = vcmask 261120
    %v250 = vsel %vm248, %v227, 0
    %252 = vmatpush.bf16.msra.mxu0 0
    %253 = vmatpush.bf16.msra.mxu0 0
    %254 = vmatpush.bf16.msra.mxu0 0
    %255 = vmatpush.bf16.msra.mxu0 0
    %256 = vmatpush.bf16.msra.mxu0 0
    %257 = vmatpush.bf16.msra.mxu0 0
    %258 = vmatpush.bf16.msra.mxu0 %v245
    %259 = vmatpush.bf16.msra.mxu0 %v244
    %260 = vmatmul.bf16.gmra.mxu0 %v250
    %v261 = vpop.f32.mrf.mxu0
    %v262 = vadd.f32 %v234, %v261
    %v263 = vpop.f32.mrf.mxu0
    %v264 = vadd.f32 %v234, %v263
    %265 = vdwg.mxu0
    %v266 = vld [vmem:[%s4] sm:$0xf]
    %v267 = vld [vmem:[%s4 + $0x4] sm:$0xf]
    %v268 = vld [vmem:[%s4 + $0x8] sm:$0xf]
    %v269 = vld [vmem:[%s4 + $0xc] sm:$0xf]
    %v270 = vld [vmem:[#allocation6] sm:$0x1]
    %v272 = vperm.slane %v270, 0
    %v278 = vunpack.c.l.b16 %v266
    %v279 = vunpack.c.l.b16 %v267
    %v280 = vunpack.c.l.b16 %v268
    %v281 = vunpack.c.l.b16 %v269
    %v282 = vpack.c.b16 %v279, %v278
    %v283 = vpack.c.b16 %v281, %v280
    %286 = vmatpush.bf16.msra.mxu0 0
    %287 = vmatpush.bf16.msra.mxu0 0
    %288 = vmatpush.bf16.msra.mxu0 0
    %289 = vmatpush.bf16.msra.mxu0 0
    %290 = vmatpush.bf16.msra.mxu0 0
    %291 = vmatpush.bf16.msra.mxu0 0
    %292 = vmatpush.bf16.msra.mxu0 %v283
    %293 = vmatpush.bf16.msra.mxu0 %v282
    %294 = vmatmul.bf16.gmra.mxu0 %v250
    %v295 = vpop.f32.mrf.mxu0
    %v296 = vadd.f32 %v272, %v295
    %v297 = vpop.f32.mrf.mxu0
    %v298 = vadd.f32 %v272, %v297
    %299 = vdwg.mxu0
    %v300 = vld [vmem:[%s6] sm:$0xf]
    %v301 = vld [vmem:[%s6 + $0x4] sm:$0xf]
    %v302 = vld [vmem:[%s6 + $0x8] sm:$0xf]
    %v303 = vld [vmem:[%s6 + $0xc] sm:$0xf]
    %v304 = vld [vmem:[#allocation7] sm:$0x1]
    %v306 = vperm.slane %v304, 0
    %v312 = vunpack.c.l.b16 %v300
    %v313 = vunpack.c.l.b16 %v301
    %v314 = vunpack.c.l.b16 %v302
    %v315 = vunpack.c.l.b16 %v303
    %v316 = vpack.c.b16 %v313, %v312
    %v317 = vpack.c.b16 %v315, %v314
    %320 = vmatpush.bf16.msra.mxu0 0
    %321 = vmatpush.bf16.msra.mxu0 0
    %322 = vmatpush.bf16.msra.mxu0 0
    %323 = vmatpush.bf16.msra.mxu0 0
    %324 = vmatpush.bf16.msra.mxu0 0
    %325 = vmatpush.bf16.msra.mxu0 0
    %326 = vmatpush.bf16.msra.mxu0 %v317
    %327 = vmatpush.bf16.msra.mxu0 %v316
    %328 = vmatmul.bf16.gmra.mxu0 %v250
    %v329 = vpop.f32.mrf.mxu0
    %v330 = vadd.f32 %v306, %v329
    %v331 = vpop.f32.mrf.mxu0
    %v332 = vadd.f32 %v306, %v331
    %333 = vdwg.mxu0
    %v334 = vld [vmem:[#allocation2] sm:$0xff]
    %337 = vrot.lane.b32.xlu0 %v262, 120
    %v338 = vpop.permute.xlu0 %337
    %339 = vrot.lane.b32.xlu0 %v264, 120
    %v340 = vpop.permute.xlu0 %339
    %343 = vrot.lane.b32.xlu0 %v262, 112
    %v344 = vpop.permute.xlu0 %343
    %345 = vrot.lane.b32.xlu0 %v264, 112
    %v346 = vpop.permute.xlu0 %345
    %349 = vrot.lane.b32.xlu0 %v262, 104
    %v350 = vpop.permute.xlu0 %349
    %351 = vrot.lane.b32.xlu0 %v264, 104
    %v352 = vpop.permute.xlu0 %351
    %v355 = vpack.c.bf16 %v262, %v262
    %v356 = vpack.c.bf16 %v264, %v264
    %v357 = vpack.c.bf16 %v338, %v338
    %v358 = vpack.c.bf16 %v340, %v340
    %v359 = vpack.c.bf16 %v344, %v344
    %v360 = vpack.c.bf16 %v346, %v346
    %v361 = vpack.c.bf16 %v350, %v350
    %v362 = vpack.c.bf16 %v352, %v352
    %365 = vrot.lane.b32.xlu0 %v296, 120
    %v366 = vpop.permute.xlu0 %365
    %367 = vrot.lane.b32.xlu0 %v298, 120
    %v368 = vpop.permute.xlu0 %367
    %371 = vrot.lane.b32.xlu0 %v296, 112
    %v372 = vpop.permute.xlu0 %371
    %373 = vrot.lane.b32.xlu0 %v298, 112
    %v374 = vpop.permute.xlu0 %373
    %377 = vrot.lane.b32.xlu0 %v296, 104
    %v378 = vpop.permute.xlu0 %377
    %379 = vrot.lane.b32.xlu0 %v298, 104
    %v380 = vpop.permute.xlu0 %379
    %v383 = vpack.c.bf16 %v296, %v296
    %v384 = vpack.c.bf16 %v298, %v298
    %v385 = vpack.c.bf16 %v366, %v366
    %v386 = vpack.c.bf16 %v368, %v368
    %v387 = vpack.c.bf16 %v372, %v372
    %v388 = vpack.c.bf16 %v374, %v374
    %v389 = vpack.c.bf16 %v378, %v378
    %v390 = vpack.c.bf16 %v380, %v380
    %393 = vrot.lane.b32.xlu0 %v330, 120
    %v394 = vpop.permute.xlu0 %393
    %395 = vrot.lane.b32.xlu0 %v332, 120
    %v396 = vpop.permute.xlu0 %395
    %399 = vrot.lane.b32.xlu0 %v330, 112
    %v400 = vpop.permute.xlu0 %399
    %401 = vrot.lane.b32.xlu0 %v332, 112
    %v402 = vpop.permute.xlu0 %401
    %405 = vrot.lane.b32.xlu0 %v330, 104
    %v406 = vpop.permute.xlu0 %405
    %407 = vrot.lane.b32.xlu0 %v332, 104
    %v408 = vpop.permute.xlu0 %407
    %v411 = vpack.c.bf16 %v330, %v330
    %v412 = vpack.c.bf16 %v332, %v332
    %v413 = vpack.c.bf16 %v394, %v394
    %v414 = vpack.c.bf16 %v396, %v396
    %v415 = vpack.c.bf16 %v400, %v400
    %v416 = vpack.c.bf16 %v402, %v402
    %v417 = vpack.c.bf16 %v406, %v406
    %v418 = vpack.c.bf16 %v408, %v408
    %vm419 = vcmask 64512
    %v421 = vsel %vm419, %v355, 0
    %v424 = vsel %vm419, %v383, 0
    %426 = vmatpush.bf16.xpose.msra.mxu0 0
    %427 = vmatpush.bf16.xpose.msra.mxu0 0
    %428 = vmatpush.bf16.xpose.msra.mxu0 0
    %429 = vmatpush.bf16.xpose.msra.mxu0 0
    %430 = vmatpush.bf16.xpose.msra.mxu0 0
    %431 = vmatpush.bf16.xpose.msra.mxu0 0
    %432 = vmatpush.bf16.xpose.msra.mxu0 0
    %433 = vmatpush.bf16.xpose.msra.mxu0 %v424
    %434 = vmatmul.bf16.gmra.mxu0 %v421
    %v435 = vpop.f32.mrf.mxu0
    %v436 = vadd.f32 %v334, %v435
    %v437 = vpop.f32.mrf.mxu0
    %438 = vdwg.mxu0
    %v440 = vsel %vm419, %v356, 0
    %v443 = vsel %vm419, %v384, 0
    %445 = vmatpush.bf16.xpose.msra.mxu0 0
    %446 = vmatpush.bf16.xpose.msra.mxu0 0
    %447 = vmatpush.bf16.xpose.msra.mxu0 0
    %448 = vmatpush.bf16.xpose.msra.mxu0 0
    %449 = vmatpush.bf16.xpose.msra.mxu0 0
    %450 = vmatpush.bf16.xpose.msra.mxu0 0
    %451 = vmatpush.bf16.xpose.msra.mxu0 0
    %452 = vmatpush.bf16.xpose.msra.mxu0 %v443
    %453 = vmatmul.bf16.gmra.mxu0 %v440
    %v454 = vpop.f32.mrf.mxu0
    %v455 = vadd.f32 %v334, %v454
    %v456 = vpop.f32.mrf.mxu0
    %457 = vdwg.mxu0
    %v459 = vsel %vm419, %v357, 0
    %v462 = vsel %vm419, %v385, 0
    %464 = vmatpush.bf16.xpose.msra.mxu0 0
    %465 = vmatpush.bf16.xpose.msra.mxu0 0
    %466 = vmatpush.bf16.xpose.msra.mxu0 0
    %467 = vmatpush.bf16.xpose.msra.mxu0 0
    %468 = vmatpush.bf16.xpose.msra.mxu0 0
    %469 = vmatpush.bf16.xpose.msra.mxu0 0
    %470 = vmatpush.bf16.xpose.msra.mxu0 0
    %471 = vmatpush.bf16.xpose.msra.mxu0 %v462
    %472 = vmatmul.bf16.gmra.mxu0 %v459
    %v473 = vpop.f32.mrf.mxu0
    %v474 = vadd.f32 %v334, %v473
    %v475 = vpop.f32.mrf.mxu0
    %476 = vdwg.mxu0
    %v478 = vsel %vm419, %v358, 0
    %v481 = vsel %vm419, %v386, 0
    %483 = vmatpush.bf16.xpose.msra.mxu0 0
    %484 = vmatpush.bf16.xpose.msra.mxu0 0
    %485 = vmatpush.bf16.xpose.msra.mxu0 0
    %486 = vmatpush.bf16.xpose.msra.mxu0 0
    %487 = vmatpush.bf16.xpose.msra.mxu0 0
    %488 = vmatpush.bf16.xpose.msra.mxu0 0
    %489 = vmatpush.bf16.xpose.msra.mxu0 0
    %490 = vmatpush.bf16.xpose.msra.mxu0 %v481
    %491 = vmatmul.bf16.gmra.mxu0 %v478
    %v492 = vpop.f32.mrf.mxu0
    %v493 = vadd.f32 %v334, %v492
    %v494 = vpop.f32.mrf.mxu0
    %495 = vdwg.mxu0
    %v497 = vsel %vm419, %v359, 0
    %v500 = vsel %vm419, %v387, 0
    %502 = vmatpush.bf16.xpose.msra.mxu0 0
    %503 = vmatpush.bf16.xpose.msra.mxu0 0
    %504 = vmatpush.bf16.xpose.msra.mxu0 0
    %505 = vmatpush.bf16.xpose.msra.mxu0 0
    %506 = vmatpush.bf16.xpose.msra.mxu0 0
    %507 = vmatpush.bf16.xpose.msra.mxu0 0
    %508 = vmatpush.bf16.xpose.msra.mxu0 0
    %509 = vmatpush.bf16.xpose.msra.mxu0 %v500
    %510 = vmatmul.bf16.gmra.mxu0 %v497
    %v511 = vpop.f32.mrf.mxu0
    %v512 = vadd.f32 %v334, %v511
    %v513 = vpop.f32.mrf.mxu0
    %514 = vdwg.mxu0
    %v516 = vsel %vm419, %v360, 0
    %v519 = vsel %vm419, %v388, 0
    %521 = vmatpush.bf16.xpose.msra.mxu0 0
    %522 = vmatpush.bf16.xpose.msra.mxu0 0
    %523 = vmatpush.bf16.xpose.msra.mxu0 0
    %524 = vmatpush.bf16.xpose.msra.mxu0 0
    %525 = vmatpush.bf16.xpose.msra.mxu0 0
    %526 = vmatpush.bf16.xpose.msra.mxu0 0
    %527 = vmatpush.bf16.xpose.msra.mxu0 0
    %528 = vmatpush.bf16.xpose.msra.mxu0 %v519
    %529 = vmatmul.bf16.gmra.mxu0 %v516
    %v530 = vpop.f32.mrf.mxu0
    %v531 = vadd.f32 %v334, %v530
    %v532 = vpop.f32.mrf.mxu0
    %533 = vdwg.mxu0
    %v535 = vsel %vm419, %v361, 0
    %v538 = vsel %vm419, %v389, 0
    %540 = vmatpush.bf16.xpose.msra.mxu0 0
    %541 = vmatpush.bf16.xpose.msra.mxu0 0
    %542 = vmatpush.bf16.xpose.msra.mxu0 0
    %543 = vmatpush.bf16.xpose.msra.mxu0 0
    %544 = vmatpush.bf16.xpose.msra.mxu0 0
    %545 = vmatpush.bf16.xpose.msra.mxu0 0
    %546 = vmatpush.bf16.xpose.msra.mxu0 0
    %547 = vmatpush.bf16.xpose.msra.mxu0 %v538
    %548 = vmatmul.bf16.gmra.mxu0 %v535
    %v549 = vpop.f32.mrf.mxu0
    %v550 = vadd.f32 %v334, %v549
    %v551 = vpop.f32.mrf.mxu0
    %552 = vdwg.mxu0
    %v554 = vsel %vm419, %v362, 0
    %v557 = vsel %vm419, %v390, 0
    %559 = vmatpush.bf16.xpose.msra.mxu0 0
    %560 = vmatpush.bf16.xpose.msra.mxu0 0
    %561 = vmatpush.bf16.xpose.msra.mxu0 0
    %562 = vmatpush.bf16.xpose.msra.mxu0 0
    %563 = vmatpush.bf16.xpose.msra.mxu0 0
    %564 = vmatpush.bf16.xpose.msra.mxu0 0
    %565 = vmatpush.bf16.xpose.msra.mxu0 0
    %566 = vmatpush.bf16.xpose.msra.mxu0 %v557
    %567 = vmatmul.bf16.gmra.mxu0 %v554
    %v568 = vpop.f32.mrf.mxu0
    %v569 = vadd.f32 %v334, %v568
    %v570 = vpop.f32.mrf.mxu0
    %571 = vdwg.mxu0
    %v572 = vsel %vm419, %v436, -inf
    %573 = vmax.xlane.f32.xlu0 %v572
    %v574 = vpop.xlane.xlu0 %573
    %v575 = vsel %vm419, %v455, -inf
    %576 = vmax.xlane.f32.xlu0 %v575
    %v577 = vpop.xlane.xlu0 %576
    %v578 = vsel %vm419, %v474, -inf
    %579 = vmax.xlane.f32.xlu0 %v578
    %v580 = vpop.xlane.xlu0 %579
    %v581 = vsel %vm419, %v493, -inf
    %582 = vmax.xlane.f32.xlu0 %v581
    %v583 = vpop.xlane.xlu0 %582
    %v584 = vsel %vm419, %v512, -inf
    %585 = vmax.xlane.f32.xlu0 %v584
    %v586 = vpop.xlane.xlu0 %585
    %v587 = vsel %vm419, %v531, -inf
    %588 = vmax.xlane.f32.xlu0 %v587
    %v589 = vpop.xlane.xlu0 %588
    %v590 = vsel %vm419, %v550, -inf
    %591 = vmax.xlane.f32.xlu0 %v590
    %v592 = vpop.xlane.xlu0 %591
    %v593 = vsel %vm419, %v569, -inf
    %594 = vmax.xlane.f32.xlu0 %v593
    %v595 = vpop.xlane.xlu0 %594
    %v596 = vsub.f32 %v436, %v574
    %v597 = vsub.f32 %v455, %v577
    %v598 = vsub.f32 %v474, %v580
    %v599 = vsub.f32 %v493, %v583
    %v600 = vsub.f32 %v512, %v586
    %v601 = vsub.f32 %v531, %v589
    %v602 = vsub.f32 %v550, %v592
    %v603 = vsub.f32 %v569, %v595
    %v604 = vmul.f32 %v596, 1.442695
    %v605 = vpow.pop %v604
    %v606 = vmul.f32 %v597, 1.442695
    %v607 = vpow.pop %v606
    %v608 = vmul.f32 %v598, 1.442695
    %v609 = vpow.pop %v608
    %v610 = vmul.f32 %v599, 1.442695
    %v611 = vpow.pop %v610
    %v612 = vmul.f32 %v600, 1.442695
    %v613 = vpow.pop %v612
    %v614 = vmul.f32 %v601, 1.442695
    %v615 = vpow.pop %v614
    %v616 = vmul.f32 %v602, 1.442695
    %v617 = vpow.pop %v616
    %v618 = vmul.f32 %v603, 1.442695
    %v619 = vpow.pop %v618
    %v620 = vsel %vm419, %v605, 0.0
    %621 = vadd.xlane.f32.xlu0 %v620
    %v622 = vpop.xlane.xlu0 %621
    %v623 = vsel %vm419, %v607, 0.0
    %624 = vadd.xlane.f32.xlu0 %v623
    %v625 = vpop.xlane.xlu0 %624
    %v626 = vsel %vm419, %v609, 0.0
    %627 = vadd.xlane.f32.xlu0 %v626
    %v628 = vpop.xlane.xlu0 %627
    %v629 = vsel %vm419, %v611, 0.0
    %630 = vadd.xlane.f32.xlu0 %v629
    %v631 = vpop.xlane.xlu0 %630
    %v632 = vsel %vm419, %v613, 0.0
    %633 = vadd.xlane.f32.xlu0 %v632
    %v634 = vpop.xlane.xlu0 %633
    %v635 = vsel %vm419, %v615, 0.0
    %636 = vadd.xlane.f32.xlu0 %v635
    %v637 = vpop.xlane.xlu0 %636
    %v638 = vsel %vm419, %v617, 0.0
    %639 = vadd.xlane.f32.xlu0 %v638
    %v640 = vpop.xlane.xlu0 %639
    %v641 = vsel %vm419, %v619, 0.0
    %642 = vadd.xlane.f32.xlu0 %v641
    %v643 = vpop.xlane.xlu0 %642
    %v644 = vrcp.pop %v622
    %v645 = vmul.f32 %v622, %v644
    %v646 = vsub.f32 1.0, %v645
    %v647 = vmul.f32 %v644, %v646
    %v648 = vadd.f32 %v644, %v647
    %vm649 = vweird.f32 %v622
    %vm650 = vweird.f32 %v644
    %vm651 = vmor %vm649, %vm650
    %v652 = vsel %vm651, %v644, %v648
    %v653 = vand.u32 2147483647, %v622
    %vm654 = vcmp.eq.f32.partialorder %v653, 8.507059e+37
    %v655 = vand.u32 %v622, 2147483648
    %v656 = vor.u32 1.1754944e-38, %v655
    %v657 = vsel %vm654, %v656, %v652
    %v658 = vmul.f32 %v605, %v657
    %v659 = vrcp.pop %v625
    %v660 = vmul.f32 %v625, %v659
    %v661 = vsub.f32 1.0, %v660
    %v662 = vmul.f32 %v659, %v661
    %v663 = vadd.f32 %v659, %v662
    %vm664 = vweird.f32 %v625
    %vm665 = vweird.f32 %v659
    %vm666 = vmor %vm664, %vm665
    %v667 = vsel %vm666, %v659, %v663
    %v668 = vand.u32 2147483647, %v625
    %vm669 = vcmp.eq.f32.partialorder %v668, 8.507059e+37
    %v670 = vand.u32 %v625, 2147483648
    %v671 = vor.u32 1.1754944e-38, %v670
    %v672 = vsel %vm669, %v671, %v667
    %v673 = vmul.f32 %v607, %v672
    %v674 = vrcp.pop %v628
    %v675 = vmul.f32 %v628, %v674
    %v676 = vsub.f32 1.0, %v675
    %v677 = vmul.f32 %v674, %v676
    %v678 = vadd.f32 %v674, %v677
    %vm679 = vweird.f32 %v628
    %vm680 = vweird.f32 %v674
    %vm681 = vmor %vm679, %vm680
    %v682 = vsel %vm681, %v674, %v678
    %v683 = vand.u32 2147483647, %v628
    %vm684 = vcmp.eq.f32.partialorder %v683, 8.507059e+37
    %v685 = vand.u32 %v628, 2147483648
    %v686 = vor.u32 1.1754944e-38, %v685
    %v687 = vsel %vm684, %v686, %v682
    %v688 = vmul.f32 %v609, %v687
    %v689 = vrcp.pop %v631
    %v690 = vmul.f32 %v631, %v689
    %v691 = vsub.f32 1.0, %v690
    %v692 = vmul.f32 %v689, %v691
    %v693 = vadd.f32 %v689, %v692
    %vm694 = vweird.f32 %v631
    %vm695 = vweird.f32 %v689
    %vm696 = vmor %vm694, %vm695
    %v697 = vsel %vm696, %v689, %v693
    %v698 = vand.u32 2147483647, %v631
    %vm699 = vcmp.eq.f32.partialorder %v698, 8.507059e+37
    %v700 = vand.u32 %v631, 2147483648
    %v701 = vor.u32 1.1754944e-38, %v700
    %v702 = vsel %vm699, %v701, %v697
    %v703 = vmul.f32 %v611, %v702
    %v704 = vrcp.pop %v634
    %v705 = vmul.f32 %v634, %v704
    %v706 = vsub.f32 1.0, %v705
    %v707 = vmul.f32 %v704, %v706
    %v708 = vadd.f32 %v704, %v707
    %vm709 = vweird.f32 %v634
    %vm710 = vweird.f32 %v704
    %vm711 = vmor %vm709, %vm710
    %v712 = vsel %vm711, %v704, %v708
    %v713 = vand.u32 2147483647, %v634
    %vm714 = vcmp.eq.f32.partialorder %v713, 8.507059e+37
    %v715 = vand.u32 %v634, 2147483648
    %v716 = vor.u32 1.1754944e-38, %v715
    %v717 = vsel %vm714, %v716, %v712
    %v718 = vmul.f32 %v613, %v717
    %v719 = vrcp.pop %v637
    %v720 = vmul.f32 %v637, %v719
    %v721 = vsub.f32 1.0, %v720
    %v722 = vmul.f32 %v719, %v721
    %v723 = vadd.f32 %v719, %v722
    %vm724 = vweird.f32 %v637
    %vm725 = vweird.f32 %v719
    %vm726 = vmor %vm724, %vm725
    %v727 = vsel %vm726, %v719, %v723
    %v728 = vand.u32 2147483647, %v637
    %vm729 = vcmp.eq.f32.partialorder %v728, 8.507059e+37
    %v730 = vand.u32 %v637, 2147483648
    %v731 = vor.u32 1.1754944e-38, %v730
    %v732 = vsel %vm729, %v731, %v727
    %v733 = vmul.f32 %v615, %v732
    %v734 = vrcp.pop %v640
    %v735 = vmul.f32 %v640, %v734
    %v736 = vsub.f32 1.0, %v735
    %v737 = vmul.f32 %v734, %v736
    %v738 = vadd.f32 %v734, %v737
    %vm739 = vweird.f32 %v640
    %vm740 = vweird.f32 %v734
    %vm741 = vmor %vm739, %vm740
    %v742 = vsel %vm741, %v734, %v738
    %v743 = vand.u32 2147483647, %v640
    %vm744 = vcmp.eq.f32.partialorder %v743, 8.507059e+37
    %v745 = vand.u32 %v640, 2147483648
    %v746 = vor.u32 1.1754944e-38, %v745
    %v747 = vsel %vm744, %v746, %v742
    %v748 = vmul.f32 %v617, %v747
    %v749 = vrcp.pop %v643
    %v750 = vmul.f32 %v643, %v749
    %v751 = vsub.f32 1.0, %v750
    %v752 = vmul.f32 %v749, %v751
    %v753 = vadd.f32 %v749, %v752
    %vm754 = vweird.f32 %v643
    %vm755 = vweird.f32 %v749
    %vm756 = vmor %vm754, %vm755
    %v757 = vsel %vm756, %v749, %v753
    %v758 = vand.u32 2147483647, %v643
    %vm759 = vcmp.eq.f32.partialorder %v758, 8.507059e+37
    %v760 = vand.u32 %v643, 2147483648
    %v761 = vor.u32 1.1754944e-38, %v760
    %v762 = vsel %vm759, %v761, %v757
    %v763 = vmul.f32 %v619, %v762
    %v764 = vpack.c.bf16 %v658, %v658
    %v765 = vpack.c.bf16 %v673, %v673
    %v766 = vpack.c.bf16 %v688, %v688
    %v767 = vpack.c.bf16 %v703, %v703
    %v768 = vpack.c.bf16 %v718, %v718
    %v769 = vpack.c.bf16 %v733, %v733
    %v770 = vpack.c.bf16 %v748, %v748
    %v771 = vpack.c.bf16 %v763, %v763
    %v773 = vsel %vm419, %v764, 0
    %vm775 = vcmask 1043456
    %v777 = vsel %vm775, %v411, 0
    %779 = vmatpush.bf16.msra.mxu0 0
    %780 = vmatpush.bf16.msra.mxu0 0
    %781 = vmatpush.bf16.msra.mxu0 0
    %782 = vmatpush.bf16.msra.mxu0 0
    %783 = vmatpush.bf16.msra.mxu0 0
    %784 = vmatpush.bf16.msra.mxu0 0
    %785 = vmatpush.bf16.msra.mxu0 0
    %786 = vmatpush.bf16.msra.mxu0 %v777
    %787 = vmatmul.bf16.gmra.mxu0 %v773
    %v788 = vpop.f32.mrf.mxu0
    %v789 = vadd.f32 0.0, %v788
    %v790 = vpop.f32.mrf.mxu0
    %791 = vdwg.mxu0
    %v793 = vsel %vm419, %v765, 0
    %v796 = vsel %vm775, %v412, 0
    %798 = vmatpush.bf16.msra.mxu0 0
    %799 = vmatpush.bf16.msra.mxu0 0
    %800 = vmatpush.bf16.msra.mxu0 0
    %801 = vmatpush.bf16.msra.mxu0 0
    %802 = vmatpush.bf16.msra.mxu0 0
    %803 = vmatpush.bf16.msra.mxu0 0
    %804 = vmatpush.bf16.msra.mxu0 0
    %805 = vmatpush.bf16.msra.mxu0 %v796
    %806 = vmatmul.bf16.gmra.mxu0 %v793
    %v807 = vpop.f32.mrf.mxu0
    %v808 = vadd.f32 0.0, %v807
    %v809 = vpop.f32.mrf.mxu0
    %810 = vdwg.mxu0
    %v812 = vsel %vm419, %v766, 0
    %v815 = vsel %vm775, %v413, 0
    %817 = vmatpush.bf16.msra.mxu0 0
    %818 = vmatpush.bf16.msra.mxu0 0
    %819 = vmatpush.bf16.msra.mxu0 0
    %820 = vmatpush.bf16.msra.mxu0 0
    %821 = vmatpush.bf16.msra.mxu0 0
    %822 = vmatpush.bf16.msra.mxu0 0
    %823 = vmatpush.bf16.msra.mxu0 0
    %824 = vmatpush.bf16.msra.mxu0 %v815
    %825 = vmatmul.bf16.gmra.mxu0 %v812
    %v826 = vpop.f32.mrf.mxu0
    %v827 = vadd.f32 0.0, %v826
    %v828 = vpop.f32.mrf.mxu0
    %829 = vdwg.mxu0
    %v831 = vsel %vm419, %v767, 0
    %v834 = vsel %vm775, %v414, 0
    %836 = vmatpush.bf16.msra.mxu0 0
    %837 = vmatpush.bf16.msra.mxu0 0
    %838 = vmatpush.bf16.msra.mxu0 0
    %839 = vmatpush.bf16.msra.mxu0 0
    %840 = vmatpush.bf16.msra.mxu0 0
    %841 = vmatpush.bf16.msra.mxu0 0
    %842 = vmatpush.bf16.msra.mxu0 0
    %843 = vmatpush.bf16.msra.mxu0 %v834
    %844 = vmatmul.bf16.gmra.mxu0 %v831
    %v845 = vpop.f32.mrf.mxu0
    %v846 = vadd.f32 0.0, %v845
    %v847 = vpop.f32.mrf.mxu0
    %848 = vdwg.mxu0
    %v850 = vsel %vm419, %v768, 0
    %v853 = vsel %vm775, %v415, 0
    %855 = vmatpush.bf16.msra.mxu0 0
    %856 = vmatpush.bf16.msra.mxu0 0
    %857 = vmatpush.bf16.msra.mxu0 0
    %858 = vmatpush.bf16.msra.mxu0 0
    %859 = vmatpush.bf16.msra.mxu0 0
    %860 = vmatpush.bf16.msra.mxu0 0
    %861 = vmatpush.bf16.msra.mxu0 0
    %862 = vmatpush.bf16.msra.mxu0 %v853
    %863 = vmatmul.bf16.gmra.mxu0 %v850
    %v864 = vpop.f32.mrf.mxu0
    %v865 = vadd.f32 0.0, %v864
    %v866 = vpop.f32.mrf.mxu0
    %867 = vdwg.mxu0
    %v869 = vsel %vm419, %v769, 0
    %v872 = vsel %vm775, %v416, 0
    %874 = vmatpush.bf16.msra.mxu0 0
    %875 = vmatpush.bf16.msra.mxu0 0
    %876 = vmatpush.bf16.msra.mxu0 0
    %877 = vmatpush.bf16.msra.mxu0 0
    %878 = vmatpush.bf16.msra.mxu0 0
    %879 = vmatpush.bf16.msra.mxu0 0
    %880 = vmatpush.bf16.msra.mxu0 0
    %881 = vmatpush.bf16.msra.mxu0 %v872
    %882 = vmatmul.bf16.gmra.mxu0 %v869
    %v883 = vpop.f32.mrf.mxu0
    %v884 = vadd.f32 0.0, %v883
    %v885 = vpop.f32.mrf.mxu0
    %886 = vdwg.mxu0
    %v888 = vsel %vm419, %v770, 0
    %v891 = vsel %vm775, %v417, 0
    %893 = vmatpush.bf16.msra.mxu0 0
    %894 = vmatpush.bf16.msra.mxu0 0
    %895 = vmatpush.bf16.msra.mxu0 0
    %896 = vmatpush.bf16.msra.mxu0 0
    %897 = vmatpush.bf16.msra.mxu0 0
    %898 = vmatpush.bf16.msra.mxu0 0
    %899 = vmatpush.bf16.msra.mxu0 0
    %900 = vmatpush.bf16.msra.mxu0 %v891
    %901 = vmatmul.bf16.gmra.mxu0 %v888
    %v902 = vpop.f32.mrf.mxu0
    %v903 = vadd.f32 0.0, %v902
    %v904 = vpop.f32.mrf.mxu0
    %905 = vdwg.mxu0
    %v907 = vsel %vm419, %v771, 0
    %v910 = vsel %vm775, %v418, 0
    %912 = vmatpush.bf16.msra.mxu0 0
    %913 = vmatpush.bf16.msra.mxu0 0
    %914 = vmatpush.bf16.msra.mxu0 0
    %915 = vmatpush.bf16.msra.mxu0 0
    %916 = vmatpush.bf16.msra.mxu0 0
    %917 = vmatpush.bf16.msra.mxu0 0
    %918 = vmatpush.bf16.msra.mxu0 0
    %919 = vmatpush.bf16.msra.mxu0 %v910
    %920 = vmatmul.bf16.gmra.mxu0 %v907
    %v921 = vpop.f32.mrf.mxu0
    %v922 = vadd.f32 0.0, %v921
    %v923 = vpop.f32.mrf.mxu0
    %924 = vdwg.mxu0
    %927 = vrot.lane.b32.xlu0 %v827, 8
    %v928 = vpop.permute.xlu0 %927
    %929 = vrot.lane.b32.xlu0 %v846, 8
    %v930 = vpop.permute.xlu0 %929
    %935 = vrot.lane.b32.xlu0 %v865, 16
    %v936 = vpop.permute.xlu0 %935
    %937 = vrot.lane.b32.xlu0 %v884, 16
    %v938 = vpop.permute.xlu0 %937
    %943 = vrot.lane.b32.xlu0 %v903, 24
    %v944 = vpop.permute.xlu0 %943
    %945 = vrot.lane.b32.xlu0 %v922, 24
    %v946 = vpop.permute.xlu0 %945
    %v949 = vsel %vm419, %v789, %v928
    %v950 = vsel %vm419, %v808, %v930
    %vm951 = vcmask 130048
    %v952 = vsel %vm951, %v949, %v936
    %v953 = vsel %vm951, %v950, %v938
    %vm954 = vcmask 195584
    %v955 = vsel %vm954, %v952, %v944
    %v956 = vsel %vm954, %v953, %v946
    %v957 = vpack.c.bf16 %v956, %v955
    %v958 = vld [vmem:[%s8] sm:$0xf]
    %v959 = vld [vmem:[%s8 + $0x4] sm:$0xf]
    %v960 = vld [vmem:[%s8 + $0x8] sm:$0xf]
    %v961 = vld [vmem:[%s8 + $0xc] sm:$0xf]
    %v962 = vld [vmem:[#allocation9] sm:$0x1]
    %v964 = vperm.slane %v962, 0
    %v970 = vunpack.c.l.b16 %v958
    %v971 = vunpack.c.l.b16 %v959
    %v972 = vunpack.c.l.b16 %v960
    %v973 = vunpack.c.l.b16 %v961
    %v974 = vpack.c.b16 %v971, %v970
    %v975 = vpack.c.b16 %v973, %v972
    %v979 = vsel %vm248, %v957, 0
    %981 = vmatpush.bf16.msra.mxu0 0
    %982 = vmatpush.bf16.msra.mxu0 0
    %983 = vmatpush.bf16.msra.mxu0 0
    %984 = vmatpush.bf16.msra.mxu0 0
    %985 = vmatpush.bf16.msra.mxu0 0
    %986 = vmatpush.bf16.msra.mxu0 0
    %987 = vmatpush.bf16.msra.mxu0 %v975
    %988 = vmatpush.bf16.msra.mxu0 %v974
    %989 = vmatmul.bf16.gmra.mxu0 %v979
    %v990 = vpop.f32.mrf.mxu0
    %v991 = vadd.f32 %v964, %v990
    %v992 = vpop.f32.mrf.mxu0
    %v993 = vadd.f32 %v964, %v992
    %994 = vdwg.mxu0
    %v995 = vld [vmem:[#allocation10] sm:$0x1]
    %v996 = vld [vmem:[#allocation12] sm:$0x1]
    %v997 = vsel %vm248, %v991, 0.0
    %998 = vadd.xlane.f32.xlu0 %v997
    %v999 = vpop.xlane.xlu0 %998
    %v1000 = vsel %vm248, %v993, 0.0
    %1001 = vadd.xlane.f32.xlu0 %v1000
    %v1002 = vpop.xlane.xlu0 %1001
    %v1003 = vrcp.pop 32.0
    %v1004 = vmul.f32 32.0, %v1003
    %v1005 = vsub.f32 1.0, %v1004
    %v1006 = vmul.f32 %v1003, %v1005
    %v1007 = vadd.f32 %v1003, %v1006
    %vm1008 = vweird.f32 %v1003
    %v1009 = vsel %vm1008, %v1003, %v1007
    %v1010 = vmul.f32 %v999, %v1009
    %v1011 = vmul.f32 %v1002, %v1009
    %v1012 = vsub.f32 %v991, %v1010
    %v1013 = vsub.f32 %v993, %v1011
    %v1014 = vmul.f32 %v1012, %v1012
    %v1015 = vmul.f32 %v1013, %v1013
    %v1016 = vsel %vm248, %v1014, 0.0
    %1017 = vadd.xlane.f32.xlu0 %v1016
    %v1018 = vpop.xlane.xlu0 %1017
    %v1019 = vsel %vm248, %v1015, 0.0
    %1020 = vadd.xlane.f32.xlu0 %v1019
    %v1021 = vpop.xlane.xlu0 %1020
    %v1022 = vmul.f32 %v1018, %v1009
    %v1023 = vmul.f32 %v1021, %v1009
    %v1024 = vadd.f32 %v1022, 1e-05
    %v1025 = vadd.f32 %v1023, 1e-05
    %v1026 = vrsqrt.pop %v1024
    %v1027 = vmul.f32 %v1026, %v1024
    %v1028 = vmul.f32 %v1027, %v1026
    %v1029 = vmul.f32 0.5, %v1028
    %v1030 = vsub.f32 1.5, %v1029
    %v1031 = vmul.f32 %v1026, %v1030
    %vm1032 = vweird.f32 %v1024
    %vm1033 = vweird.f32 %v1026
    %vm1034 = vmor %vm1032, %vm1033
    %v1035 = vsel %vm1034, %v1026, %v1031
    %v1036 = vrsqrt.pop %v1025
    %v1037 = vmul.f32 %v1036, %v1025
    %v1038 = vmul.f32 %v1037, %v1036
    %v1039 = vmul.f32 0.5, %v1038
    %v1040 = vsub.f32 1.5, %v1039
    %v1041 = vmul.f32 %v1036, %v1040
    %vm1042 = vweird.f32 %v1025
    %vm1043 = vweird.f32 %v1036
    %vm1044 = vmor %vm1042, %vm1043
    %v1045 = vsel %vm1044, %v1036, %v1041
    %v1046 = vmul.f32 %v1012, %v1035
    %v1047 = vmul.f32 %v1013, %v1045
    %v1049 = vperm.slane %v995, 0
    %v1051 = vmul.f32 %v1046, %v1049
    %v1052 = vmul.f32 %v1047, %v1049
    %v1054 = vperm.slane %v996, 0
    %v1056 = vadd.f32 %v1051, %v1054
    %v1057 = vadd.f32 %v1052, %v1054
    %v1058 = vpack.c.bf16 %v1057, %v1056
    %v1059 = vld [vmem:[#allocation13] sm:$0xf]
    %v1060 = vld [vmem:[#allocation13 + $0x4] sm:$0xf]
    %v1061 = vld [vmem:[#allocation13 + $0x8] sm:$0xf]
    %v1062 = vld [vmem:[#allocation13 + $0xc] sm:$0xf]
    %v1063 = vld [vmem:[#allocation15] sm:$0x1]
    %v1065 = vperm.slane %v1063, 0
    %v1071 = vunpack.c.l.b16 %v1059
    %v1072 = vunpack.c.l.b16 %v1060
    %v1073 = vunpack.c.l.b16 %v1061
    %v1074 = vunpack.c.l.b16 %v1062
    %v1075 = vpack.c.b16 %v1072, %v1071
    %v1076 = vpack.c.b16 %v1074, %v1073
    %v1080 = vsel %vm248, %v1058, 0
    %1082 = vmatpush.bf16.msra.mxu0 0
    %1083 = vmatpush.bf16.msra.mxu0 0
    %1084 = vmatpush.bf16.msra.mxu0 0
    %1085 = vmatpush.bf16.msra.mxu0 0
    %1086 = vmatpush.bf16.msra.mxu0 0
    %1087 = vmatpush.bf16.msra.mxu0 0
    %1088 = vmatpush.bf16.msra.mxu0 %v1076
    %1089 = vmatpush.bf16.msra.mxu0 %v1075
    %1090 = vmatmul.bf16.gmra.mxu0 %v1080
    %v1091 = vpop.f32.mrf.mxu0
    %v1092 = vadd.f32 %v1065, %v1091
    %v1093 = vpop.f32.mrf.mxu0
    %v1094 = vadd.f32 %v1065, %v1093
    %1095 = vdwg.mxu0
    %v1096 = vmax.f32 %v1092, 0.0
    %v1097 = vmax.f32 %v1094, 0.0
    %v1098 = vpack.c.bf16 %v1097, %v1096
    %v1099 = vld [vmem:[%s14] sm:$0xf]
    %v1100 = vld [vmem:[%s14 + $0x4] sm:$0xf]
    %v1101 = vld [vmem:[%s14 + $0x8] sm:$0xf]
    %v1102 = vld [vmem:[%s14 + $0xc] sm:$0xf]
    %v1103 = vld [vmem:[%s14 + $0x10] sm:$0xf]
    %v1104 = vld [vmem:[%s14 + $0x14] sm:$0xf]
    %v1105 = vld [vmem:[%s14 + $0x18] sm:$0xf]
    %v1106 = vld [vmem:[%s14 + $0x1c] sm:$0xf]
    %v1107 = vld [vmem:[#allocation16] sm:$0x1]
    %v1109 = vperm.slane %v1107, 0
    %v1119 = vunpack.c.l.b16 %v1099
    %v1120 = vunpack.c.l.b16 %v1100
    %v1121 = vunpack.c.l.b16 %v1101
    %v1122 = vunpack.c.l.b16 %v1102
    %v1123 = vunpack.c.l.b16 %v1103
    %v1124 = vunpack.c.l.b16 %v1104
    %v1125 = vunpack.c.l.b16 %v1105
    %v1126 = vunpack.c.l.b16 %v1106
    %v1127 = vpack.c.b16 %v1120, %v1119
    %v1128 = vpack.c.b16 %v1122, %v1121
    %v1129 = vpack.c.b16 %v1124, %v1123
    %v1130 = vpack.c.b16 %v1126, %v1125
    %vm1135 = vcmask 523264
    %v1137 = vsel %vm1135, %v1098, 0
    %1139 = vmatpush.bf16.msra.mxu0 0
    %1140 = vmatpush.bf16.msra.mxu0 0
    %1141 = vmatpush.bf16.msra.mxu0 0
    %1142 = vmatpush.bf16.msra.mxu0 0
    %1143 = vmatpush.bf16.msra.mxu0 %v1130
    %1144 = vmatpush.bf16.msra.mxu0 %v1129
    %1145 = vmatpush.bf16.msra.mxu0 %v1128
    %1146 = vmatpush.bf16.msra.mxu0 %v1127
    %1147 = vmatmul.bf16.gmra.mxu0 %v1137
    %v1148 = vpop.f32.mrf.mxu0
    %v1149 = vadd.f32 %v1109, %v1148
    %v1150 = vpop.f32.mrf.mxu0
    %v1151 = vadd.f32 %v1109, %v1150
    %1152 = vdwg.mxu0
    %v1153 = vadd.f32 %v1056, %v1149
    %v1154 = vadd.f32 %v1057, %v1151
    %v1155 = vld [vmem:[#allocation18] sm:$0x1]
    %v1156 = vld [vmem:[#allocation19] sm:$0x1]
    %v1157 = vsel %vm248, %v1153, 0.0
    %1158 = vadd.xlane.f32.xlu0 %v1157
    %v1159 = vpop.xlane.xlu0 %1158
    %v1160 = vsel %vm248, %v1154, 0.0
    %1161 = vadd.xlane.f32.xlu0 %v1160
    %v1162 = vpop.xlane.xlu0 %1161
    %v1163 = vmul.f32 %v1159, %v1009
    %v1164 = vmul.f32 %v1162, %v1009
    %v1165 = vsub.f32 %v1153, %v1163
    %v1166 = vsub.f32 %v1154, %v1164
    %v1167 = vmul.f32 %v1165, %v1165
    %v1168 = vmul.f32 %v1166, %v1166
    %v1169 = vsel %vm248, %v1167, 0.0
    %1170 = vadd.xlane.f32.xlu0 %v1169
    %v1171 = vpop.xlane.xlu0 %1170
    %v1172 = vsel %vm248, %v1168, 0.0
    %1173 = vadd.xlane.f32.xlu0 %v1172
    %v1174 = vpop.xlane.xlu0 %1173
    %v1175 = vmul.f32 %v1171, %v1009
    %v1176 = vmul.f32 %v1174, %v1009
    %v1177 = vadd.f32 %v1175, 1e-05
    %v1178 = vadd.f32 %v1176, 1e-05
    %v1179 = vrsqrt.pop %v1177
    %v1180 = vmul.f32 %v1179, %v1177
    %v1181 = vmul.f32 %v1180, %v1179
    %v1182 = vmul.f32 0.5, %v1181
    %v1183 = vsub.f32 1.5, %v1182
    %v1184 = vmul.f32 %v1179, %v1183
    %vm1185 = vweird.f32 %v1177
    %vm1186 = vweird.f32 %v1179
    %vm1187 = vmor %vm1185, %vm1186
    %v1188 = vsel %vm1187, %v1179, %v1184
    %v1189 = vrsqrt.pop %v1178
    %v1190 = vmul.f32 %v1189, %v1178
    %v1191 = vmul.f32 %v1190, %v1189
    %v1192 = vmul.f32 0.5, %v1191
    %v1193 = vsub.f32 1.5, %v1192
    %v1194 = vmul.f32 %v1189, %v1193
    %vm1195 = vweird.f32 %v1178
    %vm1196 = vweird.f32 %v1189
    %vm1197 = vmor %vm1195, %vm1196
    %v1198 = vsel %vm1197, %v1189, %v1194
    %v1199 = vmul.f32 %v1165, %v1188
    %v1200 = vmul.f32 %v1166, %v1198
    %v1202 = vperm.slane %v1155, 0
    %v1204 = vmul.f32 %v1199, %v1202
    %v1205 = vmul.f32 %v1200, %v1202
    %v1207 = vperm.slane %v1156, 0
    %v1209 = vadd.f32 %v1204, %v1207
    %v1210 = vadd.f32 %v1205, %v1207
    %1211 = vst.msk [vmem:[%s18] sm:$0xff] %vm248, %v1209
    %1212 = vst.msk [vmem:[%s18 + $0x8] sm:$0xff] %vm248, %v1210
    // Predicated region
    $region122: #{segmental_transformer_encoder.2} parent=1 // pred_check
      _
    $region123: #{segmental_transformer_encoder.2} parent=1 // pred_check_branch
      %1214 = sbr.rel (0) target = $region125
    $region124: #{segmental_transformer_encoder.2} parent=1 // pred_region
      _
    $region125: #{segmental_transformer_encoder.2} parent=1 // pred_fallthru
      _
    // Predicated region
    $region126: #{segmental_transformer_encoder.2} parent=1 // pred_check
      _
    $region127: #{segmental_transformer_encoder.2} parent=1 // pred_check_branch
      %1216 = sbr.rel (0) target = $region129
    $region128: #{segmental_transformer_encoder.2} parent=1 // pred_region
      _
    $region129: #{segmental_transformer_encoder.2} parent=1 // pred_fallthru
      _
    %1217 = vsyncpa [#allocation3], 1
    %1218 = vsyncpa [#allocation5], 1
    %1219 = vsyncpa [#allocation8], 1
    %1220 = vsyncpa [#allocation11], 1
    %1221 = vsyncpa [#allocation14], 1
    %1222 = vsyncpa [#allocation17], 1
    %1223 = vsyncpa [#allocation20], 1

</llo_original>
